<compile_context>
chip_gen: v7x
topology: tpu7x:2x2x1
jax: 0.10.0
libtpu: 0.0.40
codegen_flags: <defaults>
</compile_context>

<pallas_src>
import functools

import jax
import jax.numpy as jnp
from jax import lax
from jax.experimental import pallas as pl
from jax.experimental.pallas import tpu as pltpu


def _divisors(n):
    return [d for d in range(1, n + 1) if n % d == 0]


def _choose_fold(P, Wi):
    """Fold factor k (k | P): k image rows are merged into one lane-row of the
    output view so stores are >=128-lane dense, capped so a single row value
    stays small (<= 2048 lanes)."""
    divs = _divisors(P)
    dense = [k for k in divs if (k * Wi) % 128 == 0]
    small_dense = [k for k in dense if k * Wi <= 2048]
    if small_dense:
        return max(small_dense)
    if dense:
        return min(dense)
    fitting = [k for k in divs if k * Wi <= 2048]
    return max(fitting) if fitting else 1


def _vmem_capacity_bytes():
    try:
        info = pltpu.get_tpu_info()
        cap = getattr(info, "vmem_capacity_bytes", None)
        if cap:
            return int(cap)
    except Exception:
        pass
    return 64 * 1024 * 1024  # conservative (v7x-sized) fallback


def _choose_row_group(H, W, C, P, kfold, itemsize, budget_bytes):
    """Largest divisor G of H whose double-buffered (in + out) blocks fit the
    budget while keeping both blocks' second-to-last dims sublane-tileable
    (multiple of 8, or equal to the full dim)."""
    Wi = W * P

    def tiling_ok(g):
        ok_in = ((g * W) % 8 == 0) or (g == H)
        ok_out = (((g * P) // kfold) % 8 == 0) or (g == H)
        return ok_in and ok_out and (g * P) % kfold == 0

    def block_bytes(g):
        d_pad = -(-(C * P * P) // 128) * 128
        in_rows = -(-(g * W) // 8) * 8
        in_b = in_rows * d_pad * itemsize
        w_pad = -(-(kfold * Wi) // 128) * 128
        out_rows = -(-((g * P) // kfold) // 8) * 8
        out_b = C * out_rows * w_pad * itemsize
        return in_b + out_b

    valid = [g for g in _divisors(H) if tiling_ok(g)]
    fit = [g for g in valid if 2 * block_bytes(g) <= budget_bytes]
    if fit:
        return max(fit)
    # Nothing fits the budget: take the smallest tiling-valid group so the
    # double-buffered blocks are as small as possible.
    return min(valid) if valid else H


def _patch_to_image_kernel(x_ref, o_ref, *, C, W, P, G, kfold):
    # x_ref block: (1, G*W, D)                        -- lane-dense input slab.
    # o_ref block: (1, C, G*P//kfold, kfold*W*P)      -- folded (lane-dense) output slab.
    rows_per_patchrow = P // kfold  # folded output rows per (channel, patch-row)

    def emit_patch_row(r):
        # r = patch-row index inside this block (python int or traced int32).
        for c in range(C):
            base = c * P * P
            for jj in range(rows_per_patchrow):
                p0 = jj * kfold
                pieces = []
                for t in range(kfold):           # image row inside the fold
                    lo = base + (p0 + t) * P     # static lane offset
                    for w in range(W):           # patch column
                        pieces.append(
                            x_ref[0, pl.ds(r * W + w, 1), pl.ds(lo, P)])
                # One lane-dense row of the folded output view.
                row = jnp.concatenate(pieces, axis=-1)      # (1, kfold*W*P)
                o_ref[0, c, pl.ds(r * rows_per_patchrow + jj, 1), :] = row

    if G * C * P * W <= 2048:
        # Small body: static unroll gives the scheduler full visibility.
        for r in range(G):
            emit_patch_row(r)
    else:
        # Large body: keep vreg live ranges bounded with a real loop.
        def body(r, carry):
            emit_patch_row(r)
            return carry

        lax.fori_loop(0, G, body, 0)


def patch_to_image(x, patch_size, image_height, image_width, channels):
    B, N, D = x.shape
    P = patch_size
    H = image_height // P
    W = image_width // P
    assert N == H * W and D == channels * P * P

    Wi = image_width
    itemsize = jnp.dtype(x.dtype).itemsize

    kfold = _choose_fold(P, Wi)
    vmem_cap = _vmem_capacity_bytes()
    budget = vmem_cap // 4          # double-buffered in+out blocks <= 1/2 VMEM
    G = _choose_row_group(H, W, channels, P, kfold, itemsize, budget)

    folded_h = image_height // kfold
    folded_w = kfold * Wi
    nbytes = B * N * D * itemsize

    kernel = functools.partial(
        _patch_to_image_kernel, C=channels, W=W, P=P, G=G, kfold=kfold)

    out_folded = pl.pallas_call(
        kernel,
        out_shape=jax.ShapeDtypeStruct(
            (B, channels, folded_h, folded_w), x.dtype),
        grid=(B, H // G),
        in_specs=[pl.BlockSpec(
            (1, G * W, D),
            lambda b, g: (b, g, 0),
        )],
        out_specs=pl.BlockSpec(
            (1, channels, (G * P) // kfold, folded_w),
            lambda b, g: (b, 0, g, 0),
        ),
        compiler_params=pltpu.CompilerParams(
            dimension_semantics=("parallel", "parallel"),
            vmem_limit_bytes=min(vmem_cap * 7 // 10, 100 * 1024 * 1024)),
        cost_estimate=pl.CostEstimate(
            flops=0, transcendentals=0, bytes_accessed=2 * nbytes),
    )(x)

    # Free (pure row-major) reshape of the folded view back to NCHW.
    return out_folded.reshape(B, channels, image_height, image_width)


def _reference(x, patch_size, image_height, image_width, channels):
    B, N, D = x.shape
    P = patch_size
    H, W = image_height // P, image_width // P
    y = x.reshape(B, H, W, channels, P, P)
    y = jnp.transpose(y, (0, 3, 1, 4, 2, 5))
    return y.reshape(B, channels, image_height, image_width)


if __name__ == "__main__":
    # Small, deterministic example consistent with the module.
    patch_size = 8
    image_height = 32
    image_width = 32
    channels = 4
    B = 2
    H, W = image_height // patch_size, image_width // patch_size
    N = H * W
    D = channels * patch_size * patch_size

    key = jax.random.PRNGKey(0)
    x = jax.random.normal(key, (B, N, D), dtype=jnp.float32)

    out = patch_to_image(x, patch_size, image_height, image_width, channels)
    out = jax.block_until_ready(out)

    expected = _reference(x, patch_size, image_height, image_width, channels)
    assert out.shape == (B, channels, image_height, image_width)
    assert out.dtype == x.dtype
    assert jnp.allclose(out, expected), "Pallas output mismatch vs reference"

    print("KERNEL_OK")
</pallas_src>

<mosaic_0001>
module attributes {stable_mosaic.version = 11 : i64} {
  func.func @_patch_to_image_kernel(%arg0: i32, %arg1: i32, %arg2: memref<1x16x256xf32, #tpu.memory_space<vmem>>, %arg3: memref<1x4x4x256xf32, #tpu.memory_space<vmem>>) attributes {dimension_semantics = [#tpu.dimension_semantics<parallel>, #tpu.dimension_semantics<parallel>], iteration_bounds = array<i64: 2, 1>, scalar_prefetch = 0 : i64, scratch_operands = 0 : i64, tpu.core_type = #tpu.core_type<tc>, window_params = [{transform_indices = @transform_0, window_bounds = array<i64: 1, 16, 256>}, {transform_indices = @transform_1, window_bounds = array<i64: 1, 4, 4, 256>}]} {
    %c0 = arith.constant 0 : index
    %c0_0 = arith.constant 0 : index
    %c0_1 = arith.constant 0 : index
    %0 = vector.load %arg2[%c0, %c0_0, %c0_1] : memref<1x16x256xf32, #tpu.memory_space<vmem>>, vector<1x1x8xf32>
    %1 = vector.shape_cast %0 : vector<1x1x8xf32> to vector<1x8xf32>
    %c0_2 = arith.constant 0 : index
    %c1 = arith.constant 1 : index
    %c0_3 = arith.constant 0 : index
    %2 = vector.load %arg2[%c0_2, %c1, %c0_3] : memref<1x16x256xf32, #tpu.memory_space<vmem>>, vector<1x1x8xf32>
    %3 = vector.shape_cast %2 : vector<1x1x8xf32> to vector<1x8xf32>
    %c0_4 = arith.constant 0 : index
    %c2 = arith.constant 2 : index
    %c0_5 = arith.constant 0 : index
    %4 = vector.load %arg2[%c0_4, %c2, %c0_5] : memref<1x16x256xf32, #tpu.memory_space<vmem>>, vector<1x1x8xf32>
    %5 = vector.shape_cast %4 : vector<1x1x8xf32> to vector<1x8xf32>
    %c0_6 = arith.constant 0 : index
    %c3 = arith.constant 3 : index
    %c0_7 = arith.constant 0 : index
    %6 = vector.load %arg2[%c0_6, %c3, %c0_7] : memref<1x16x256xf32, #tpu.memory_space<vmem>>, vector<1x1x8xf32>
    %7 = vector.shape_cast %6 : vector<1x1x8xf32> to vector<1x8xf32>
    %c0_8 = arith.constant 0 : index
    %c0_9 = arith.constant 0 : index
    %c8 = arith.constant 8 : index
    %8 = vector.load %arg2[%c0_8, %c0_9, %c8] : memref<1x16x256xf32, #tpu.memory_space<vmem>>, vector<1x1x8xf32>
    %9 = vector.shape_cast %8 : vector<1x1x8xf32> to vector<1x8xf32>
    %c0_10 = arith.constant 0 : index
    %c1_11 = arith.constant 1 : index
    %c8_12 = arith.constant 8 : index
    %10 = vector.load %arg2[%c0_10, %c1_11, %c8_12] : memref<1x16x256xf32, #tpu.memory_space<vmem>>, vector<1x1x8xf32>
    %11 = vector.shape_cast %10 : vector<1x1x8xf32> to vector<1x8xf32>
    %c0_13 = arith.constant 0 : index
    %c2_14 = arith.constant 2 : index
    %c8_15 = arith.constant 8 : index
    %12 = vector.load %arg2[%c0_13, %c2_14, %c8_15] : memref<1x16x256xf32, #tpu.memory_space<vmem>>, vector<1x1x8xf32>
    %13 = vector.shape_cast %12 : vector<1x1x8xf32> to vector<1x8xf32>
    %c0_16 = arith.constant 0 : index
    %c3_17 = arith.constant 3 : index
    %c8_18 = arith.constant 8 : index
    %14 = vector.load %arg2[%c0_16, %c3_17, %c8_18] : memref<1x16x256xf32, #tpu.memory_space<vmem>>, vector<1x1x8xf32>
    %15 = vector.shape_cast %14 : vector<1x1x8xf32> to vector<1x8xf32>
    %c0_19 = arith.constant 0 : index
    %c0_20 = arith.constant 0 : index
    %c16 = arith.constant 16 : index
    %16 = vector.load %arg2[%c0_19, %c0_20, %c16] : memref<1x16x256xf32, #tpu.memory_space<vmem>>, vector<1x1x8xf32>
    %17 = vector.shape_cast %16 : vector<1x1x8xf32> to vector<1x8xf32>
    %c0_21 = arith.constant 0 : index
    %c1_22 = arith.constant 1 : index
    %c16_23 = arith.constant 16 : index
    %18 = vector.load %arg2[%c0_21, %c1_22, %c16_23] : memref<1x16x256xf32, #tpu.memory_space<vmem>>, vector<1x1x8xf32>
    %19 = vector.shape_cast %18 : vector<1x1x8xf32> to vector<1x8xf32>
    %c0_24 = arith.constant 0 : index
    %c2_25 = arith.constant 2 : index
    %c16_26 = arith.constant 16 : index
    %20 = vector.load %arg2[%c0_24, %c2_25, %c16_26] : memref<1x16x256xf32, #tpu.memory_space<vmem>>, vector<1x1x8xf32>
    %21 = vector.shape_cast %20 : vector<1x1x8xf32> to vector<1x8xf32>
    %c0_27 = arith.constant 0 : index
    %c3_28 = arith.constant 3 : index
    %c16_29 = arith.constant 16 : index
    %22 = vector.load %arg2[%c0_27, %c3_28, %c16_29] : memref<1x16x256xf32, #tpu.memory_space<vmem>>, vector<1x1x8xf32>
    %23 = vector.shape_cast %22 : vector<1x1x8xf32> to vector<1x8xf32>
    %c0_30 = arith.constant 0 : index
    %c0_31 = arith.constant 0 : index
    %c24 = arith.constant 24 : index
    %24 = vector.load %arg2[%c0_30, %c0_31, %c24] : memref<1x16x256xf32, #tpu.memory_space<vmem>>, vector<1x1x8xf32>
    %25 = vector.shape_cast %24 : vector<1x1x8xf32> to vector<1x8xf32>
    %c0_32 = arith.constant 0 : index
    %c1_33 = arith.constant 1 : index
    %c24_34 = arith.constant 24 : index
    %26 = vector.load %arg2[%c0_32, %c1_33, %c24_34] : memref<1x16x256xf32, #tpu.memory_space<vmem>>, vector<1x1x8xf32>
    %27 = vector.shape_cast %26 : vector<1x1x8xf32> to vector<1x8xf32>
    %c0_35 = arith.constant 0 : index
    %c2_36 = arith.constant 2 : index
    %c24_37 = arith.constant 24 : index
    %28 = vector.load %arg2[%c0_35, %c2_36, %c24_37] : memref<1x16x256xf32, #tpu.memory_space<vmem>>, vector<1x1x8xf32>
    %29 = vector.shape_cast %28 : vector<1x1x8xf32> to vector<1x8xf32>
    %c0_38 = arith.constant 0 : index
    %c3_39 = arith.constant 3 : index
    %c24_40 = arith.constant 24 : index
    %30 = vector.load %arg2[%c0_38, %c3_39, %c24_40] : memref<1x16x256xf32, #tpu.memory_space<vmem>>, vector<1x1x8xf32>
    %31 = vector.shape_cast %30 : vector<1x1x8xf32> to vector<1x8xf32>
    %c0_41 = arith.constant 0 : index
    %c0_42 = arith.constant 0 : index
    %c32 = arith.constant 32 : index
    %32 = vector.load %arg2[%c0_41, %c0_42, %c32] : memref<1x16x256xf32, #tpu.memory_space<vmem>>, vector<1x1x8xf32>
    %33 = vector.shape_cast %32 : vector<1x1x8xf32> to vector<1x8xf32>
    %c0_43 = arith.constant 0 : index
    %c1_44 = arith.constant 1 : index
    %c32_45 = arith.constant 32 : index
    %34 = vector.load %arg2[%c0_43, %c1_44, %c32_45] : memref<1x16x256xf32, #tpu.memory_space<vmem>>, vector<1x1x8xf32>
    %35 = vector.shape_cast %34 : vector<1x1x8xf32> to vector<1x8xf32>
    %c0_46 = arith.constant 0 : index
    %c2_47 = arith.constant 2 : index
    %c32_48 = arith.constant 32 : index
    %36 = vector.load %arg2[%c0_46, %c2_47, %c32_48] : memref<1x16x256xf32, #tpu.memory_space<vmem>>, vector<1x1x8xf32>
    %37 = vector.shape_cast %36 : vector<1x1x8xf32> to vector<1x8xf32>
    %c0_49 = arith.constant 0 : index
    %c3_50 = arith.constant 3 : index
    %c32_51 = arith.constant 32 : index
    %38 = vector.load %arg2[%c0_49, %c3_50, %c32_51] : memref<1x16x256xf32, #tpu.memory_space<vmem>>, vector<1x1x8xf32>
    %39 = vector.shape_cast %38 : vector<1x1x8xf32> to vector<1x8xf32>
    %c0_52 = arith.constant 0 : index
    %c0_53 = arith.constant 0 : index
    %c40 = arith.constant 40 : index
    %40 = vector.load %arg2[%c0_52, %c0_53, %c40] : memref<1x16x256xf32, #tpu.memory_space<vmem>>, vector<1x1x8xf32>
    %41 = vector.shape_cast %40 : vector<1x1x8xf32> to vector<1x8xf32>
    %c0_54 = arith.constant 0 : index
    %c1_55 = arith.constant 1 : index
    %c40_56 = arith.constant 40 : index
    %42 = vector.load %arg2[%c0_54, %c1_55, %c40_56] : memref<1x16x256xf32, #tpu.memory_space<vmem>>, vector<1x1x8xf32>
    %43 = vector.shape_cast %42 : vector<1x1x8xf32> to vector<1x8xf32>
    %c0_57 = arith.constant 0 : index
    %c2_58 = arith.constant 2 : index
    %c40_59 = arith.constant 40 : index
    %44 = vector.load %arg2[%c0_57, %c2_58, %c40_59] : memref<1x16x256xf32, #tpu.memory_space<vmem>>, vector<1x1x8xf32>
    %45 = vector.shape_cast %44 : vector<1x1x8xf32> to vector<1x8xf32>
    %c0_60 = arith.constant 0 : index
    %c3_61 = arith.constant 3 : index
    %c40_62 = arith.constant 40 : index
    %46 = vector.load %arg2[%c0_60, %c3_61, %c40_62] : memref<1x16x256xf32, #tpu.memory_space<vmem>>, vector<1x1x8xf32>
    %47 = vector.shape_cast %46 : vector<1x1x8xf32> to vector<1x8xf32>
    %c0_63 = arith.constant 0 : index
    %c0_64 = arith.constant 0 : index
    %c48 = arith.constant 48 : index
    %48 = vector.load %arg2[%c0_63, %c0_64, %c48] : memref<1x16x256xf32, #tpu.memory_space<vmem>>, vector<1x1x8xf32>
    %49 = vector.shape_cast %48 : vector<1x1x8xf32> to vector<1x8xf32>
    %c0_65 = arith.constant 0 : index
    %c1_66 = arith.constant 1 : index
    %c48_67 = arith.constant 48 : index
    %50 = vector.load %arg2[%c0_65, %c1_66, %c48_67] : memref<1x16x256xf32, #tpu.memory_space<vmem>>, vector<1x1x8xf32>
    %51 = vector.shape_cast %50 : vector<1x1x8xf32> to vector<1x8xf32>
    %c0_68 = arith.constant 0 : index
    %c2_69 = arith.constant 2 : index
    %c48_70 = arith.constant 48 : index
    %52 = vector.load %arg2[%c0_68, %c2_69, %c48_70] : memref<1x16x256xf32, #tpu.memory_space<vmem>>, vector<1x1x8xf32>
    %53 = vector.shape_cast %52 : vector<1x1x8xf32> to vector<1x8xf32>
    %c0_71 = arith.constant 0 : index
    %c3_72 = arith.constant 3 : index
    %c48_73 = arith.constant 48 : index
    %54 = vector.load %arg2[%c0_71, %c3_72, %c48_73] : memref<1x16x256xf32, #tpu.memory_space<vmem>>, vector<1x1x8xf32>
    %55 = vector.shape_cast %54 : vector<1x1x8xf32> to vector<1x8xf32>
    %c0_74 = arith.constant 0 : index
    %c0_75 = arith.constant 0 : index
    %c56 = arith.constant 56 : index
    %56 = vector.load %arg2[%c0_74, %c0_75, %c56] : memref<1x16x256xf32, #tpu.memory_space<vmem>>, vector<1x1x8xf32>
    %57 = vector.shape_cast %56 : vector<1x1x8xf32> to vector<1x8xf32>
    %c0_76 = arith.constant 0 : index
    %c1_77 = arith.constant 1 : index
    %c56_78 = arith.constant 56 : index
    %58 = vector.load %arg2[%c0_76, %c1_77, %c56_78] : memref<1x16x256xf32, #tpu.memory_space<vmem>>, vector<1x1x8xf32>
    %59 = vector.shape_cast %58 : vector<1x1x8xf32> to vector<1x8xf32>
    %c0_79 = arith.constant 0 : index
    %c2_80 = arith.constant 2 : index
    %c56_81 = arith.constant 56 : index
    %60 = vector.load %arg2[%c0_79, %c2_80, %c56_81] : memref<1x16x256xf32, #tpu.memory_space<vmem>>, vector<1x1x8xf32>
    %61 = vector.shape_cast %60 : vector<1x1x8xf32> to vector<1x8xf32>
    %c0_82 = arith.constant 0 : index
    %c3_83 = arith.constant 3 : index
    %c56_84 = arith.constant 56 : index
    %62 = vector.load %arg2[%c0_82, %c3_83, %c56_84] : memref<1x16x256xf32, #tpu.memory_space<vmem>>, vector<1x1x8xf32>
    %63 = vector.shape_cast %62 : vector<1x1x8xf32> to vector<1x8xf32>
    %64 = tpu.concatenate %1, %3, %5, %7, %9, %11, %13, %15, %17, %19, %21, %23, %25, %27, %29, %31 in 1 : vector<1x8xf32>, vector<1x8xf32>, vector<1x8xf32>, vector<1x8xf32>, vector<1x8xf32>, vector<1x8xf32>, vector<1x8xf32>, vector<1x8xf32>, vector<1x8xf32>, vector<1x8xf32>, vector<1x8xf32>, vector<1x8xf32>, vector<1x8xf32>, vector<1x8xf32>, vector<1x8xf32>, vector<1x8xf32> -> vector<1x128xf32>
    %65 = tpu.concatenate %33, %35, %37, %39, %41, %43, %45, %47, %49, %51, %53, %55, %57, %59, %61, %63 in 1 : vector<1x8xf32>, vector<1x8xf32>, vector<1x8xf32>, vector<1x8xf32>, vector<1x8xf32>, vector<1x8xf32>, vector<1x8xf32>, vector<1x8xf32>, vector<1x8xf32>, vector<1x8xf32>, vector<1x8xf32>, vector<1x8xf32>, vector<1x8xf32>, vector<1x8xf32>, vector<1x8xf32>, vector<1x8xf32> -> vector<1x128xf32>
    %66 = tpu.concatenate %64, %65 in 1 : vector<1x128xf32>, vector<1x128xf32> -> vector<1x256xf32>
    %c0_85 = arith.constant 0 : index
    %c0_86 = arith.constant 0 : index
    %c0_87 = arith.constant 0 : index
    %c0_88 = arith.constant 0 : index
    %67 = vector.load %arg3[%c0_85, %c0_86, %c0_87, %c0_88] : memref<1x4x4x256xf32, #tpu.memory_space<vmem>>, vector<1x1x1x256xf32>
    %68 = vector.shape_cast %67 : vector<1x1x1x256xf32> to vector<1x256xf32>
    %69 = vector.shape_cast %66 : vector<1x256xf32> to vector<1x1x1x256xf32>
    tpu.vector_store %arg3[%c0_85, %c0_86, %c0_87, %c0_88], %69 {strides = array<i32>} : memref<1x4x4x256xf32, #tpu.memory_space<vmem>>, vector<1x1x1x256xf32>,
    %c0_89 = arith.constant 0 : index
    %c0_90 = arith.constant 0 : index
    %c64 = arith.constant 64 : index
    %70 = vector.load %arg2[%c0_89, %c0_90, %c64] : memref<1x16x256xf32, #tpu.memory_space<vmem>>, vector<1x1x8xf32>
    %71 = vector.shape_cast %70 : vector<1x1x8xf32> to vector<1x8xf32>
    %c0_91 = arith.constant 0 : index
    %c1_92 = arith.constant 1 : index
    %c64_93 = arith.constant 64 : index
    %72 = vector.load %arg2[%c0_91, %c1_92, %c64_93] : memref<1x16x256xf32, #tpu.memory_space<vmem>>, vector<1x1x8xf32>
    %73 = vector.shape_cast %72 : vector<1x1x8xf32> to vector<1x8xf32>
    %c0_94 = arith.constant 0 : index
    %c2_95 = arith.constant 2 : index
    %c64_96 = arith.constant 64 : index
    %74 = vector.load %arg2[%c0_94, %c2_95, %c64_96] : memref<1x16x256xf32, #tpu.memory_space<vmem>>, vector<1x1x8xf32>
    %75 = vector.shape_cast %74 : vector<1x1x8xf32> to vector<1x8xf32>
    %c0_97 = arith.constant 0 : index
    %c3_98 = arith.constant 3 : index
    %c64_99 = arith.constant 64 : index
    %76 = vector.load %arg2[%c0_97, %c3_98, %c64_99] : memref<1x16x256xf32, #tpu.memory_space<vmem>>, vector<1x1x8xf32>
    %77 = vector.shape_cast %76 : vector<1x1x8xf32> to vector<1x8xf32>
    %c0_100 = arith.constant 0 : index
    %c0_101 = arith.constant 0 : index
    %c72 = arith.constant 72 : index
    %78 = vector.load %arg2[%c0_100, %c0_101, %c72] : memref<1x16x256xf32, #tpu.memory_space<vmem>>, vector<1x1x8xf32>
    %79 = vector.shape_cast %78 : vector<1x1x8xf32> to vector<1x8xf32>
    %c0_102 = arith.constant 0 : index
    %c1_103 = arith.constant 1 : index
    %c72_104 = arith.constant 72 : index
    %80 = vector.load %arg2[%c0_102, %c1_103, %c72_104] : memref<1x16x256xf32, #tpu.memory_space<vmem>>, vector<1x1x8xf32>
    %81 = vector.shape_cast %80 : vector<1x1x8xf32> to vector<1x8xf32>
    %c0_105 = arith.constant 0 : index
    %c2_106 = arith.constant 2 : index
    %c72_107 = arith.constant 72 : index
    %82 = vector.load %arg2[%c0_105, %c2_106, %c72_107] : memref<1x16x256xf32, #tpu.memory_space<vmem>>, vector<1x1x8xf32>
    %83 = vector.shape_cast %82 : vector<1x1x8xf32> to vector<1x8xf32>
    %c0_108 = arith.constant 0 : index
    %c3_109 = arith.constant 3 : index
    %c72_110 = arith.constant 72 : index
    %84 = vector.load %arg2[%c0_108, %c3_109, %c72_110] : memref<1x16x256xf32, #tpu.memory_space<vmem>>, vector<1x1x8xf32>
    %85 = vector.shape_cast %84 : vector<1x1x8xf32> to vector<1x8xf32>
    %c0_111 = arith.constant 0 : index
    %c0_112 = arith.constant 0 : index
    %c80 = arith.constant 80 : index
    %86 = vector.load %arg2[%c0_111, %c0_112, %c80] : memref<1x16x256xf32, #tpu.memory_space<vmem>>, vector<1x1x8xf32>
    %87 = vector.shape_cast %86 : vector<1x1x8xf32> to vector<1x8xf32>
    %c0_113 = arith.constant 0 : index
    %c1_114 = arith.constant 1 : index
    %c80_115 = arith.constant 80 : index
    %88 = vector.load %arg2[%c0_113, %c1_114, %c80_115] : memref<1x16x256xf32, #tpu.memory_space<vmem>>, vector<1x1x8xf32>
    %89 = vector.shape_cast %88 : vector<1x1x8xf32> to vector<1x8xf32>
    %c0_116 = arith.constant 0 : index
    %c2_117 = arith.constant 2 : index
    %c80_118 = arith.constant 80 : index
    %90 = vector.load %arg2[%c0_116, %c2_117, %c80_118] : memref<1x16x256xf32, #tpu.memory_space<vmem>>, vector<1x1x8xf32>
    %91 = vector.shape_cast %90 : vector<1x1x8xf32> to vector<1x8xf32>
    %c0_119 = arith.constant 0 : index
    %c3_120 = arith.constant 3 : index
    %c80_121 = arith.constant 80 : index
    %92 = vector.load %arg2[%c0_119, %c3_120, %c80_121] : memref<1x16x256xf32, #tpu.memory_space<vmem>>, vector<1x1x8xf32>
    %93 = vector.shape_cast %92 : vector<1x1x8xf32> to vector<1x8xf32>
    %c0_122 = arith.constant 0 : index
    %c0_123 = arith.constant 0 : index
    %c88 = arith.constant 88 : index
    %94 = vector.load %arg2[%c0_122, %c0_123, %c88] : memref<1x16x256xf32, #tpu.memory_space<vmem>>, vector<1x1x8xf32>
    %95 = vector.shape_cast %94 : vector<1x1x8xf32> to vector<1x8xf32>
    %c0_124 = arith.constant 0 : index
    %c1_125 = arith.constant 1 : index
    %c88_126 = arith.constant 88 : index
    %96 = vector.load %arg2[%c0_124, %c1_125, %c88_126] : memref<1x16x256xf32, #tpu.memory_space<vmem>>, vector<1x1x8xf32>
    %97 = vector.shape_cast %96 : vector<1x1x8xf32> to vector<1x8xf32>
    %c0_127 = arith.constant 0 : index
    %c2_128 = arith.constant 2 : index
    %c88_129 = arith.constant 88 : index
    %98 = vector.load %arg2[%c0_127, %c2_128, %c88_129] : memref<1x16x256xf32, #tpu.memory_space<vmem>>, vector<1x1x8xf32>
    %99 = vector.shape_cast %98 : vector<1x1x8xf32> to vector<1x8xf32>
    %c0_130 = arith.constant 0 : index
    %c3_131 = arith.constant 3 : index
    %c88_132 = arith.constant 88 : index
    %100 = vector.load %arg2[%c0_130, %c3_131, %c88_132] : memref<1x16x256xf32, #tpu.memory_space<vmem>>, vector<1x1x8xf32>
    %101 = vector.shape_cast %100 : vector<1x1x8xf32> to vector<1x8xf32>
    %c0_133 = arith.constant 0 : index
    %c0_134 = arith.constant 0 : index
    %c96 = arith.constant 96 : index
    %102 = vector.load %arg2[%c0_133, %c0_134, %c96] : memref<1x16x256xf32, #tpu.memory_space<vmem>>, vector<1x1x8xf32>
    %103 = vector.shape_cast %102 : vector<1x1x8xf32> to vector<1x8xf32>
    %c0_135 = arith.constant 0 : index
    %c1_136 = arith.constant 1 : index
    %c96_137 = arith.constant 96 : index
    %104 = vector.load %arg2[%c0_135, %c1_136, %c96_137] : memref<1x16x256xf32, #tpu.memory_space<vmem>>, vector<1x1x8xf32>
    %105 = vector.shape_cast %104 : vector<1x1x8xf32> to vector<1x8xf32>
    %c0_138 = arith.constant 0 : index
    %c2_139 = arith.constant 2 : index
    %c96_140 = arith.constant 96 : index
    %106 = vector.load %arg2[%c0_138, %c2_139, %c96_140] : memref<1x16x256xf32, #tpu.memory_space<vmem>>, vector<1x1x8xf32>
    %107 = vector.shape_cast %106 : vector<1x1x8xf32> to vector<1x8xf32>
    %c0_141 = arith.constant 0 : index
    %c3_142 = arith.constant 3 : index
    %c96_143 = arith.constant 96 : index
    %108 = vector.load %arg2[%c0_141, %c3_142, %c96_143] : memref<1x16x256xf32, #tpu.memory_space<vmem>>, vector<1x1x8xf32>
    %109 = vector.shape_cast %108 : vector<1x1x8xf32> to vector<1x8xf32>
    %c0_144 = arith.constant 0 : index
    %c0_145 = arith.constant 0 : index
    %c104 = arith.constant 104 : index
    %110 = vector.load %arg2[%c0_144, %c0_145, %c104] : memref<1x16x256xf32, #tpu.memory_space<vmem>>, vector<1x1x8xf32>
    %111 = vector.shape_cast %110 : vector<1x1x8xf32> to vector<1x8xf32>
    %c0_146 = arith.constant 0 : index
    %c1_147 = arith.constant 1 : index
    %c104_148 = arith.constant 104 : index
    %112 = vector.load %arg2[%c0_146, %c1_147, %c104_148] : memref<1x16x256xf32, #tpu.memory_space<vmem>>, vector<1x1x8xf32>
    %113 = vector.shape_cast %112 : vector<1x1x8xf32> to vector<1x8xf32>
    %c0_149 = arith.constant 0 : index
    %c2_150 = arith.constant 2 : index
    %c104_151 = arith.constant 104 : index
    %114 = vector.load %arg2[%c0_149, %c2_150, %c104_151] : memref<1x16x256xf32, #tpu.memory_space<vmem>>, vector<1x1x8xf32>
    %115 = vector.shape_cast %114 : vector<1x1x8xf32> to vector<1x8xf32>
    %c0_152 = arith.constant 0 : index
    %c3_153 = arith.constant 3 : index
    %c104_154 = arith.constant 104 : index
    %116 = vector.load %arg2[%c0_152, %c3_153, %c104_154] : memref<1x16x256xf32, #tpu.memory_space<vmem>>, vector<1x1x8xf32>
    %117 = vector.shape_cast %116 : vector<1x1x8xf32> to vector<1x8xf32>
    %c0_155 = arith.constant 0 : index
    %c0_156 = arith.constant 0 : index
    %c112 = arith.constant 112 : index
    %118 = vector.load %arg2[%c0_155, %c0_156, %c112] : memref<1x16x256xf32, #tpu.memory_space<vmem>>, vector<1x1x8xf32>
    %119 = vector.shape_cast %118 : vector<1x1x8xf32> to vector<1x8xf32>
    %c0_157 = arith.constant 0 : index
    %c1_158 = arith.constant 1 : index
    %c112_159 = arith.constant 112 : index
    %120 = vector.load %arg2[%c0_157, %c1_158, %c112_159] : memref<1x16x256xf32, #tpu.memory_space<vmem>>, vector<1x1x8xf32>
    %121 = vector.shape_cast %120 : vector<1x1x8xf32> to vector<1x8xf32>
    %c0_160 = arith.constant 0 : index
    %c2_161 = arith.constant 2 : index
    %c112_162 = arith.constant 112 : index
    %122 = vector.load %arg2[%c0_160, %c2_161, %c112_162] : memref<1x16x256xf32, #tpu.memory_space<vmem>>, vector<1x1x8xf32>
    %123 = vector.shape_cast %122 : vector<1x1x8xf32> to vector<1x8xf32>
    %c0_163 = arith.constant 0 : index
    %c3_164 = arith.constant 3 : index
    %c112_165 = arith.constant 112 : index
    %124 = vector.load %arg2[%c0_163, %c3_164, %c112_165] : memref<1x16x256xf32, #tpu.memory_space<vmem>>, vector<1x1x8xf32>
    %125 = vector.shape_cast %124 : vector<1x1x8xf32> to vector<1x8xf32>
    %c0_166 = arith.constant 0 : index
    %c0_167 = arith.constant 0 : index
    %c120 = arith.constant 120 : index
    %126 = vector.load %arg2[%c0_166, %c0_167, %c120] : memref<1x16x256xf32, #tpu.memory_space<vmem>>, vector<1x1x8xf32>
    %127 = vector.shape_cast %126 : vector<1x1x8xf32> to vector<1x8xf32>
    %c0_168 = arith.constant 0 : index
    %c1_169 = arith.constant 1 : index
    %c120_170 = arith.constant 120 : index
    %128 = vector.load %arg2[%c0_168, %c1_169, %c120_170] : memref<1x16x256xf32, #tpu.memory_space<vmem>>, vector<1x1x8xf32>
    %129 = vector.shape_cast %128 : vector<1x1x8xf32> to vector<1x8xf32>
    %c0_171 = arith.constant 0 : index
    %c2_172 = arith.constant 2 : index
    %c120_173 = arith.constant 120 : index
    %130 = vector.load %arg2[%c0_171, %c2_172, %c120_173] : memref<1x16x256xf32, #tpu.memory_space<vmem>>, vector<1x1x8xf32>
    %131 = vector.shape_cast %130 : vector<1x1x8xf32> to vector<1x8xf32>
    %c0_174 = arith.constant 0 : index
    %c3_175 = arith.constant 3 : index
    %c120_176 = arith.constant 120 : index
    %132 = vector.load %arg2[%c0_174, %c3_175, %c120_176] : memref<1x16x256xf32, #tpu.memory_space<vmem>>, vector<1x1x8xf32>
    %133 = vector.shape_cast %132 : vector<1x1x8xf32> to vector<1x8xf32>
    %134 = tpu.concatenate %71, %73, %75, %77, %79, %81, %83, %85, %87, %89, %91, %93, %95, %97, %99, %101 in 1 : vector<1x8xf32>, vector<1x8xf32>, vector<1x8xf32>, vector<1x8xf32>, vector<1x8xf32>, vector<1x8xf32>, vector<1x8xf32>, vector<1x8xf32>, vector<1x8xf32>, vector<1x8xf32>, vector<1x8xf32>, vector<1x8xf32>, vector<1x8xf32>, vector<1x8xf32>, vector<1x8xf32>, vector<1x8xf32> -> vector<1x128xf32>
    %135 = tpu.concatenate %103, %105, %107, %109, %111, %113, %115, %117, %119, %121, %123, %125, %127, %129, %131, %133 in 1 : vector<1x8xf32>, vector<1x8xf32>, vector<1x8xf32>, vector<1x8xf32>, vector<1x8xf32>, vector<1x8xf32>, vector<1x8xf32>, vector<1x8xf32>, vector<1x8xf32>, vector<1x8xf32>, vector<1x8xf32>, vector<1x8xf32>, vector<1x8xf32>, vector<1x8xf32>, vector<1x8xf32>, vector<1x8xf32> -> vector<1x128xf32>
    %136 = tpu.concatenate %134, %135 in 1 : vector<1x128xf32>, vector<1x128xf32> -> vector<1x256xf32>
    %c0_177 = arith.constant 0 : index
    %c1_178 = arith.constant 1 : index
    %c0_179 = arith.constant 0 : index
    %c0_180 = arith.constant 0 : index
    %137 = vector.load %arg3[%c0_177, %c1_178, %c0_179, %c0_180] : memref<1x4x4x256xf32, #tpu.memory_space<vmem>>, vector<1x1x1x256xf32>
    %138 = vector.shape_cast %137 : vector<1x1x1x256xf32> to vector<1x256xf32>
    %139 = vector.shape_cast %136 : vector<1x256xf32> to vector<1x1x1x256xf32>
    tpu.vector_store %arg3[%c0_177, %c1_178, %c0_179, %c0_180], %139 {strides = array<i32>} : memref<1x4x4x256xf32, #tpu.memory_space<vmem>>, vector<1x1x1x256xf32>,
    %c0_181 = arith.constant 0 : index
    %c0_182 = arith.constant 0 : index
    %c128 = arith.constant 128 : index
    %140 = vector.load %arg2[%c0_181, %c0_182, %c128] : memref<1x16x256xf32, #tpu.memory_space<vmem>>, vector<1x1x8xf32>
    %141 = vector.shape_cast %140 : vector<1x1x8xf32> to vector<1x8xf32>
    %c0_183 = arith.constant 0 : index
    %c1_184 = arith.constant 1 : index
    %c128_185 = arith.constant 128 : index
    %142 = vector.load %arg2[%c0_183, %c1_184, %c128_185] : memref<1x16x256xf32, #tpu.memory_space<vmem>>, vector<1x1x8xf32>
    %143 = vector.shape_cast %142 : vector<1x1x8xf32> to vector<1x8xf32>
    %c0_186 = arith.constant 0 : index
    %c2_187 = arith.constant 2 : index
    %c128_188 = arith.constant 128 : index
    %144 = vector.load %arg2[%c0_186, %c2_187, %c128_188] : memref<1x16x256xf32, #tpu.memory_space<vmem>>, vector<1x1x8xf32>
    %145 = vector.shape_cast %144 : vector<1x1x8xf32> to vector<1x8xf32>
    %c0_189 = arith.constant 0 : index
    %c3_190 = arith.constant 3 : index
    %c128_191 = arith.constant 128 : index
    %146 = vector.load %arg2[%c0_189, %c3_190, %c128_191] : memref<1x16x256xf32, #tpu.memory_space<vmem>>, vector<1x1x8xf32>
    %147 = vector.shape_cast %146 : vector<1x1x8xf32> to vector<1x8xf32>
    %c0_192 = arith.constant 0 : index
    %c0_193 = arith.constant 0 : index
    %c136 = arith.constant 136 : index
    %148 = vector.load %arg2[%c0_192, %c0_193, %c136] : memref<1x16x256xf32, #tpu.memory_space<vmem>>, vector<1x1x8xf32>
    %149 = vector.shape_cast %148 : vector<1x1x8xf32> to vector<1x8xf32>
    %c0_194 = arith.constant 0 : index
    %c1_195 = arith.constant 1 : index
    %c136_196 = arith.constant 136 : index
    %150 = vector.load %arg2[%c0_194, %c1_195, %c136_196] : memref<1x16x256xf32, #tpu.memory_space<vmem>>, vector<1x1x8xf32>
    %151 = vector.shape_cast %150 : vector<1x1x8xf32> to vector<1x8xf32>
    %c0_197 = arith.constant 0 : index
    %c2_198 = arith.constant 2 : index
    %c136_199 = arith.constant 136 : index
    %152 = vector.load %arg2[%c0_197, %c2_198, %c136_199] : memref<1x16x256xf32, #tpu.memory_space<vmem>>, vector<1x1x8xf32>
    %153 = vector.shape_cast %152 : vector<1x1x8xf32> to vector<1x8xf32>
    %c0_200 = arith.constant 0 : index
    %c3_201 = arith.constant 3 : index
    %c136_202 = arith.constant 136 : index
    %154 = vector.load %arg2[%c0_200, %c3_201, %c136_202] : memref<1x16x256xf32, #tpu.memory_space<vmem>>, vector<1x1x8xf32>
    %155 = vector.shape_cast %154 : vector<1x1x8xf32> to vector<1x8xf32>
    %c0_203 = arith.constant 0 : index
    %c0_204 = arith.constant 0 : index
    %c144 = arith.constant 144 : index
    %156 = vector.load %arg2[%c0_203, %c0_204, %c144] : memref<1x16x256xf32, #tpu.memory_space<vmem>>, vector<1x1x8xf32>
    %157 = vector.shape_cast %156 : vector<1x1x8xf32> to vector<1x8xf32>
    %c0_205 = arith.constant 0 : index
    %c1_206 = arith.constant 1 : index
    %c144_207 = arith.constant 144 : index
    %158 = vector.load %arg2[%c0_205, %c1_206, %c144_207] : memref<1x16x256xf32, #tpu.memory_space<vmem>>, vector<1x1x8xf32>
    %159 = vector.shape_cast %158 : vector<1x1x8xf32> to vector<1x8xf32>
    %c0_208 = arith.constant 0 : index
    %c2_209 = arith.constant 2 : index
    %c144_210 = arith.constant 144 : index
    %160 = vector.load %arg2[%c0_208, %c2_209, %c144_210] : memref<1x16x256xf32, #tpu.memory_space<vmem>>, vector<1x1x8xf32>
    %161 = vector.shape_cast %160 : vector<1x1x8xf32> to vector<1x8xf32>
    %c0_211 = arith.constant 0 : index
    %c3_212 = arith.constant 3 : index
    %c144_213 = arith.constant 144 : index
    %162 = vector.load %arg2[%c0_211, %c3_212, %c144_213] : memref<1x16x256xf32, #tpu.memory_space<vmem>>, vector<1x1x8xf32>
    %163 = vector.shape_cast %162 : vector<1x1x8xf32> to vector<1x8xf32>
    %c0_214 = arith.constant 0 : index
    %c0_215 = arith.constant 0 : index
    %c152 = arith.constant 152 : index
    %164 = vector.load %arg2[%c0_214, %c0_215, %c152] : memref<1x16x256xf32, #tpu.memory_space<vmem>>, vector<1x1x8xf32>
    %165 = vector.shape_cast %164 : vector<1x1x8xf32> to vector<1x8xf32>
    %c0_216 = arith.constant 0 : index
    %c1_217 = arith.constant 1 : index
    %c152_218 = arith.constant 152 : index
    %166 = vector.load %arg2[%c0_216, %c1_217, %c152_218] : memref<1x16x256xf32, #tpu.memory_space<vmem>>, vector<1x1x8xf32>
    %167 = vector.shape_cast %166 : vector<1x1x8xf32> to vector<1x8xf32>
    %c0_219 = arith.constant 0 : index
    %c2_220 = arith.constant 2 : index
    %c152_221 = arith.constant 152 : index
    %168 = vector.load %arg2[%c0_219, %c2_220, %c152_221] : memref<1x16x256xf32, #tpu.memory_space<vmem>>, vector<1x1x8xf32>
    %169 = vector.shape_cast %168 : vector<1x1x8xf32> to vector<1x8xf32>
    %c0_222 = arith.constant 0 : index
    %c3_223 = arith.constant 3 : index
    %c152_224 = arith.constant 152 : index
    %170 = vector.load %arg2[%c0_222, %c3_223, %c152_224] : memref<1x16x256xf32, #tpu.memory_space<vmem>>, vector<1x1x8xf32>
    %171 = vector.shape_cast %170 : vector<1x1x8xf32> to vector<1x8xf32>
    %c0_225 = arith.constant 0 : index
    %c0_226 = arith.constant 0 : index
    %c160 = arith.constant 160 : index
    %172 = vector.load %arg2[%c0_225, %c0_226, %c160] : memref<1x16x256xf32, #tpu.memory_space<vmem>>, vector<1x1x8xf32>
    %173 = vector.shape_cast %172 : vector<1x1x8xf32> to vector<1x8xf32>
    %c0_227 = arith.constant 0 : index
    %c1_228 = arith.constant 1 : index
    %c160_229 = arith.constant 160 : index
    %174 = vector.load %arg2[%c0_227, %c1_228, %c160_229] : memref<1x16x256xf32, #tpu.memory_space<vmem>>, vector<1x1x8xf32>
    %175 = vector.shape_cast %174 : vector<1x1x8xf32> to vector<1x8xf32>
    %c0_230 = arith.constant 0 : index
    %c2_231 = arith.constant 2 : index
    %c160_232 = arith.constant 160 : index
    %176 = vector.load %arg2[%c0_230, %c2_231, %c160_232] : memref<1x16x256xf32, #tpu.memory_space<vmem>>, vector<1x1x8xf32>
    %177 = vector.shape_cast %176 : vector<1x1x8xf32> to vector<1x8xf32>
    %c0_233 = arith.constant 0 : index
    %c3_234 = arith.constant 3 : index
    %c160_235 = arith.constant 160 : index
    %178 = vector.load %arg2[%c0_233, %c3_234, %c160_235] : memref<1x16x256xf32, #tpu.memory_space<vmem>>, vector<1x1x8xf32>
    %179 = vector.shape_cast %178 : vector<1x1x8xf32> to vector<1x8xf32>
    %c0_236 = arith.constant 0 : index
    %c0_237 = arith.constant 0 : index
    %c168 = arith.constant 168 : index
    %180 = vector.load %arg2[%c0_236, %c0_237, %c168] : memref<1x16x256xf32, #tpu.memory_space<vmem>>, vector<1x1x8xf32>
    %181 = vector.shape_cast %180 : vector<1x1x8xf32> to vector<1x8xf32>
    %c0_238 = arith.constant 0 : index
    %c1_239 = arith.constant 1 : index
    %c168_240 = arith.constant 168 : index
    %182 = vector.load %arg2[%c0_238, %c1_239, %c168_240] : memref<1x16x256xf32, #tpu.memory_space<vmem>>, vector<1x1x8xf32>
    %183 = vector.shape_cast %182 : vector<1x1x8xf32> to vector<1x8xf32>
    %c0_241 = arith.constant 0 : index
    %c2_242 = arith.constant 2 : index
    %c168_243 = arith.constant 168 : index
    %184 = vector.load %arg2[%c0_241, %c2_242, %c168_243] : memref<1x16x256xf32, #tpu.memory_space<vmem>>, vector<1x1x8xf32>
    %185 = vector.shape_cast %184 : vector<1x1x8xf32> to vector<1x8xf32>
    %c0_244 = arith.constant 0 : index
    %c3_245 = arith.constant 3 : index
    %c168_246 = arith.constant 168 : index
    %186 = vector.load %arg2[%c0_244, %c3_245, %c168_246] : memref<1x16x256xf32, #tpu.memory_space<vmem>>, vector<1x1x8xf32>
    %187 = vector.shape_cast %186 : vector<1x1x8xf32> to vector<1x8xf32>
    %c0_247 = arith.constant 0 : index
    %c0_248 = arith.constant 0 : index
    %c176 = arith.constant 176 : index
    %188 = vector.load %arg2[%c0_247, %c0_248, %c176] : memref<1x16x256xf32, #tpu.memory_space<vmem>>, vector<1x1x8xf32>
    %189 = vector.shape_cast %188 : vector<1x1x8xf32> to vector<1x8xf32>
    %c0_249 = arith.constant 0 : index
    %c1_250 = arith.constant 1 : index
    %c176_251 = arith.constant 176 : index
    %190 = vector.load %arg2[%c0_249, %c1_250, %c176_251] : memref<1x16x256xf32, #tpu.memory_space<vmem>>, vector<1x1x8xf32>
    %191 = vector.shape_cast %190 : vector<1x1x8xf32> to vector<1x8xf32>
    %c0_252 = arith.constant 0 : index
    %c2_253 = arith.constant 2 : index
    %c176_254 = arith.constant 176 : index
    %192 = vector.load %arg2[%c0_252, %c2_253, %c176_254] : memref<1x16x256xf32, #tpu.memory_space<vmem>>, vector<1x1x8xf32>
    %193 = vector.shape_cast %192 : vector<1x1x8xf32> to vector<1x8xf32>
    %c0_255 = arith.constant 0 : index
    %c3_256 = arith.constant 3 : index
    %c176_257 = arith.constant 176 : index
    %194 = vector.load %arg2[%c0_255, %c3_256, %c176_257] : memref<1x16x256xf32, #tpu.memory_space<vmem>>, vector<1x1x8xf32>
    %195 = vector.shape_cast %194 : vector<1x1x8xf32> to vector<1x8xf32>
    %c0_258 = arith.constant 0 : index
    %c0_259 = arith.constant 0 : index
    %c184 = arith.constant 184 : index
    %196 = vector.load %arg2[%c0_258, %c0_259, %c184] : memref<1x16x256xf32, #tpu.memory_space<vmem>>, vector<1x1x8xf32>
    %197 = vector.shape_cast %196 : vector<1x1x8xf32> to vector<1x8xf32>
    %c0_260 = arith.constant 0 : index
    %c1_261 = arith.constant 1 : index
    %c184_262 = arith.constant 184 : index
    %198 = vector.load %arg2[%c0_260, %c1_261, %c184_262] : memref<1x16x256xf32, #tpu.memory_space<vmem>>, vector<1x1x8xf32>
    %199 = vector.shape_cast %198 : vector<1x1x8xf32> to vector<1x8xf32>
    %c0_263 = arith.constant 0 : index
    %c2_264 = arith.constant 2 : index
    %c184_265 = arith.constant 184 : index
    %200 = vector.load %arg2[%c0_263, %c2_264, %c184_265] : memref<1x16x256xf32, #tpu.memory_space<vmem>>, vector<1x1x8xf32>
    %201 = vector.shape_cast %200 : vector<1x1x8xf32> to vector<1x8xf32>
    %c0_266 = arith.constant 0 : index
    %c3_267 = arith.constant 3 : index
    %c184_268 = arith.constant 184 : index
    %202 = vector.load %arg2[%c0_266, %c3_267, %c184_268] : memref<1x16x256xf32, #tpu.memory_space<vmem>>, vector<1x1x8xf32>
    %203 = vector.shape_cast %202 : vector<1x1x8xf32> to vector<1x8xf32>
    %204 = tpu.concatenate %141, %143, %145, %147, %149, %151, %153, %155, %157, %159, %161, %163, %165, %167, %169, %171 in 1 : vector<1x8xf32>, vector<1x8xf32>, vector<1x8xf32>, vector<1x8xf32>, vector<1x8xf32>, vector<1x8xf32>, vector<1x8xf32>, vector<1x8xf32>, vector<1x8xf32>, vector<1x8xf32>, vector<1x8xf32>, vector<1x8xf32>, vector<1x8xf32>, vector<1x8xf32>, vector<1x8xf32>, vector<1x8xf32> -> vector<1x128xf32>
    %205 = tpu.concatenate %173, %175, %177, %179, %181, %183, %185, %187, %189, %191, %193, %195, %197, %199, %201, %203 in 1 : vector<1x8xf32>, vector<1x8xf32>, vector<1x8xf32>, vector<1x8xf32>, vector<1x8xf32>, vector<1x8xf32>, vector<1x8xf32>, vector<1x8xf32>, vector<1x8xf32>, vector<1x8xf32>, vector<1x8xf32>, vector<1x8xf32>, vector<1x8xf32>, vector<1x8xf32>, vector<1x8xf32>, vector<1x8xf32> -> vector<1x128xf32>
    %206 = tpu.concatenate %204, %205 in 1 : vector<1x128xf32>, vector<1x128xf32> -> vector<1x256xf32>
    %c0_269 = arith.constant 0 : index
    %c2_270 = arith.constant 2 : index
    %c0_271 = arith.constant 0 : index
    %c0_272 = arith.constant 0 : index
    %207 = vector.load %arg3[%c0_269, %c2_270, %c0_271, %c0_272] : memref<1x4x4x256xf32, #tpu.memory_space<vmem>>, vector<1x1x1x256xf32>
    %208 = vector.shape_cast %207 : vector<1x1x1x256xf32> to vector<1x256xf32>
    %209 = vector.shape_cast %206 : vector<1x256xf32> to vector<1x1x1x256xf32>
    tpu.vector_store %arg3[%c0_269, %c2_270, %c0_271, %c0_272], %209 {strides = array<i32>} : memref<1x4x4x256xf32, #tpu.memory_space<vmem>>, vector<1x1x1x256xf32>,
    %c0_273 = arith.constant 0 : index
    %c0_274 = arith.constant 0 : index
    %c192 = arith.constant 192 : index
    %210 = vector.load %arg2[%c0_273, %c0_274, %c192] : memref<1x16x256xf32, #tpu.memory_space<vmem>>, vector<1x1x8xf32>
    %211 = vector.shape_cast %210 : vector<1x1x8xf32> to vector<1x8xf32>
    %c0_275 = arith.constant 0 : index
    %c1_276 = arith.constant 1 : index
    %c192_277 = arith.constant 192 : index
    %212 = vector.load %arg2[%c0_275, %c1_276, %c192_277] : memref<1x16x256xf32, #tpu.memory_space<vmem>>, vector<1x1x8xf32>
    %213 = vector.shape_cast %212 : vector<1x1x8xf32> to vector<1x8xf32>
    %c0_278 = arith.constant 0 : index
    %c2_279 = arith.constant 2 : index
    %c192_280 = arith.constant 192 : index
    %214 = vector.load %arg2[%c0_278, %c2_279, %c192_280] : memref<1x16x256xf32, #tpu.memory_space<vmem>>, vector<1x1x8xf32>
    %215 = vector.shape_cast %214 : vector<1x1x8xf32> to vector<1x8xf32>
    %c0_281 = arith.constant 0 : index
    %c3_282 = arith.constant 3 : index
    %c192_283 = arith.constant 192 : index
    %216 = vector.load %arg2[%c0_281, %c3_282, %c192_283] : memref<1x16x256xf32, #tpu.memory_space<vmem>>, vector<1x1x8xf32>
    %217 = vector.shape_cast %216 : vector<1x1x8xf32> to vector<1x8xf32>
    %c0_284 = arith.constant 0 : index
    %c0_285 = arith.constant 0 : index
    %c200 = arith.constant 200 : index
    %218 = vector.load %arg2[%c0_284, %c0_285, %c200] : memref<1x16x256xf32, #tpu.memory_space<vmem>>, vector<1x1x8xf32>
    %219 = vector.shape_cast %218 : vector<1x1x8xf32> to vector<1x8xf32>
    %c0_286 = arith.constant 0 : index
    %c1_287 = arith.constant 1 : index
    %c200_288 = arith.constant 200 : index
    %220 = vector.load %arg2[%c0_286, %c1_287, %c200_288] : memref<1x16x256xf32, #tpu.memory_space<vmem>>, vector<1x1x8xf32>
    %221 = vector.shape_cast %220 : vector<1x1x8xf32> to vector<1x8xf32>
    %c0_289 = arith.constant 0 : index
    %c2_290 = arith.constant 2 : index
    %c200_291 = arith.constant 200 : index
    %222 = vector.load %arg2[%c0_289, %c2_290, %c200_291] : memref<1x16x256xf32, #tpu.memory_space<vmem>>, vector<1x1x8xf32>
    %223 = vector.shape_cast %222 : vector<1x1x8xf32> to vector<1x8xf32>
    %c0_292 = arith.constant 0 : index
    %c3_293 = arith.constant 3 : index
    %c200_294 = arith.constant 200 : index
    %224 = vector.load %arg2[%c0_292, %c3_293, %c200_294] : memref<1x16x256xf32, #tpu.memory_space<vmem>>, vector<1x1x8xf32>
    %225 = vector.shape_cast %224 : vector<1x1x8xf32> to vector<1x8xf32>
    %c0_295 = arith.constant 0 : index
    %c0_296 = arith.constant 0 : index
    %c208 = arith.constant 208 : index
    %226 = vector.load %arg2[%c0_295, %c0_296, %c208] : memref<1x16x256xf32, #tpu.memory_space<vmem>>, vector<1x1x8xf32>
    %227 = vector.shape_cast %226 : vector<1x1x8xf32> to vector<1x8xf32>
    %c0_297 = arith.constant 0 : index
    %c1_298 = arith.constant 1 : index
    %c208_299 = arith.constant 208 : index
    %228 = vector.load %arg2[%c0_297, %c1_298, %c208_299] : memref<1x16x256xf32, #tpu.memory_space<vmem>>, vector<1x1x8xf32>
    %229 = vector.shape_cast %228 : vector<1x1x8xf32> to vector<1x8xf32>
    %c0_300 = arith.constant 0 : index
    %c2_301 = arith.constant 2 : index
    %c208_302 = arith.constant 208 : index
    %230 = vector.load %arg2[%c0_300, %c2_301, %c208_302] : memref<1x16x256xf32, #tpu.memory_space<vmem>>, vector<1x1x8xf32>
    %231 = vector.shape_cast %230 : vector<1x1x8xf32> to vector<1x8xf32>
    %c0_303 = arith.constant 0 : index
    %c3_304 = arith.constant 3 : index
    %c208_305 = arith.constant 208 : index
    %232 = vector.load %arg2[%c0_303, %c3_304, %c208_305] : memref<1x16x256xf32, #tpu.memory_space<vmem>>, vector<1x1x8xf32>
    %233 = vector.shape_cast %232 : vector<1x1x8xf32> to vector<1x8xf32>
    %c0_306 = arith.constant 0 : index
    %c0_307 = arith.constant 0 : index
    %c216 = arith.constant 216 : index
    %234 = vector.load %arg2[%c0_306, %c0_307, %c216] : memref<1x16x256xf32, #tpu.memory_space<vmem>>, vector<1x1x8xf32>
    %235 = vector.shape_cast %234 : vector<1x1x8xf32> to vector<1x8xf32>
    %c0_308 = arith.constant 0 : index
    %c1_309 = arith.constant 1 : index
    %c216_310 = arith.constant 216 : index
    %236 = vector.load %arg2[%c0_308, %c1_309, %c216_310] : memref<1x16x256xf32, #tpu.memory_space<vmem>>, vector<1x1x8xf32>
    %237 = vector.shape_cast %236 : vector<1x1x8xf32> to vector<1x8xf32>
    %c0_311 = arith.constant 0 : index
    %c2_312 = arith.constant 2 : index
    %c216_313 = arith.constant 216 : index
    %238 = vector.load %arg2[%c0_311, %c2_312, %c216_313] : memref<1x16x256xf32, #tpu.memory_space<vmem>>, vector<1x1x8xf32>
    %239 = vector.shape_cast %238 : vector<1x1x8xf32> to vector<1x8xf32>
    %c0_314 = arith.constant 0 : index
    %c3_315 = arith.constant 3 : index
    %c216_316 = arith.constant 216 : index
    %240 = vector.load %arg2[%c0_314, %c3_315, %c216_316] : memref<1x16x256xf32, #tpu.memory_space<vmem>>, vector<1x1x8xf32>
    %241 = vector.shape_cast %240 : vector<1x1x8xf32> to vector<1x8xf32>
    %c0_317 = arith.constant 0 : index
    %c0_318 = arith.constant 0 : index
    %c224 = arith.constant 224 : index
    %242 = vector.load %arg2[%c0_317, %c0_318, %c224] : memref<1x16x256xf32, #tpu.memory_space<vmem>>, vector<1x1x8xf32>
    %243 = vector.shape_cast %242 : vector<1x1x8xf32> to vector<1x8xf32>
    %c0_319 = arith.constant 0 : index
    %c1_320 = arith.constant 1 : index
    %c224_321 = arith.constant 224 : index
    %244 = vector.load %arg2[%c0_319, %c1_320, %c224_321] : memref<1x16x256xf32, #tpu.memory_space<vmem>>, vector<1x1x8xf32>
    %245 = vector.shape_cast %244 : vector<1x1x8xf32> to vector<1x8xf32>
    %c0_322 = arith.constant 0 : index
    %c2_323 = arith.constant 2 : index
    %c224_324 = arith.constant 224 : index
    %246 = vector.load %arg2[%c0_322, %c2_323, %c224_324] : memref<1x16x256xf32, #tpu.memory_space<vmem>>, vector<1x1x8xf32>
    %247 = vector.shape_cast %246 : vector<1x1x8xf32> to vector<1x8xf32>
    %c0_325 = arith.constant 0 : index
    %c3_326 = arith.constant 3 : index
    %c224_327 = arith.constant 224 : index
    %248 = vector.load %arg2[%c0_325, %c3_326, %c224_327] : memref<1x16x256xf32, #tpu.memory_space<vmem>>, vector<1x1x8xf32>
    %249 = vector.shape_cast %248 : vector<1x1x8xf32> to vector<1x8xf32>
    %c0_328 = arith.constant 0 : index
    %c0_329 = arith.constant 0 : index
    %c232 = arith.constant 232 : index
    %250 = vector.load %arg2[%c0_328, %c0_329, %c232] : memref<1x16x256xf32, #tpu.memory_space<vmem>>, vector<1x1x8xf32>
    %251 = vector.shape_cast %250 : vector<1x1x8xf32> to vector<1x8xf32>
    %c0_330 = arith.constant 0 : index
    %c1_331 = arith.constant 1 : index
    %c232_332 = arith.constant 232 : index
    %252 = vector.load %arg2[%c0_330, %c1_331, %c232_332] : memref<1x16x256xf32, #tpu.memory_space<vmem>>, vector<1x1x8xf32>
    %253 = vector.shape_cast %252 : vector<1x1x8xf32> to vector<1x8xf32>
    %c0_333 = arith.constant 0 : index
    %c2_334 = arith.constant 2 : index
    %c232_335 = arith.constant 232 : index
    %254 = vector.load %arg2[%c0_333, %c2_334, %c232_335] : memref<1x16x256xf32, #tpu.memory_space<vmem>>, vector<1x1x8xf32>
    %255 = vector.shape_cast %254 : vector<1x1x8xf32> to vector<1x8xf32>
    %c0_336 = arith.constant 0 : index
    %c3_337 = arith.constant 3 : index
    %c232_338 = arith.constant 232 : index
    %256 = vector.load %arg2[%c0_336, %c3_337, %c232_338] : memref<1x16x256xf32, #tpu.memory_space<vmem>>, vector<1x1x8xf32>
    %257 = vector.shape_cast %256 : vector<1x1x8xf32> to vector<1x8xf32>
    %c0_339 = arith.constant 0 : index
    %c0_340 = arith.constant 0 : index
    %c240 = arith.constant 240 : index
    %258 = vector.load %arg2[%c0_339, %c0_340, %c240] : memref<1x16x256xf32, #tpu.memory_space<vmem>>, vector<1x1x8xf32>
    %259 = vector.shape_cast %258 : vector<1x1x8xf32> to vector<1x8xf32>
    %c0_341 = arith.constant 0 : index
    %c1_342 = arith.constant 1 : index
    %c240_343 = arith.constant 240 : index
    %260 = vector.load %arg2[%c0_341, %c1_342, %c240_343] : memref<1x16x256xf32, #tpu.memory_space<vmem>>, vector<1x1x8xf32>
    %261 = vector.shape_cast %260 : vector<1x1x8xf32> to vector<1x8xf32>
    %c0_344 = arith.constant 0 : index
    %c2_345 = arith.constant 2 : index
    %c240_346 = arith.constant 240 : index
    %262 = vector.load %arg2[%c0_344, %c2_345, %c240_346] : memref<1x16x256xf32, #tpu.memory_space<vmem>>, vector<1x1x8xf32>
    %263 = vector.shape_cast %262 : vector<1x1x8xf32> to vector<1x8xf32>
    %c0_347 = arith.constant 0 : index
    %c3_348 = arith.constant 3 : index
    %c240_349 = arith.constant 240 : index
    %264 = vector.load %arg2[%c0_347, %c3_348, %c240_349] : memref<1x16x256xf32, #tpu.memory_space<vmem>>, vector<1x1x8xf32>
    %265 = vector.shape_cast %264 : vector<1x1x8xf32> to vector<1x8xf32>
    %c0_350 = arith.constant 0 : index
    %c0_351 = arith.constant 0 : index
    %c248 = arith.constant 248 : index
    %266 = vector.load %arg2[%c0_350, %c0_351, %c248] : memref<1x16x256xf32, #tpu.memory_space<vmem>>, vector<1x1x8xf32>
    %267 = vector.shape_cast %266 : vector<1x1x8xf32> to vector<1x8xf32>
    %c0_352 = arith.constant 0 : index
    %c1_353 = arith.constant 1 : index
    %c248_354 = arith.constant 248 : index
    %268 = vector.load %arg2[%c0_352, %c1_353, %c248_354] : memref<1x16x256xf32, #tpu.memory_space<vmem>>, vector<1x1x8xf32>
    %269 = vector.shape_cast %268 : vector<1x1x8xf32> to vector<1x8xf32>
    %c0_355 = arith.constant 0 : index
    %c2_356 = arith.constant 2 : index
    %c248_357 = arith.constant 248 : index
    %270 = vector.load %arg2[%c0_355, %c2_356, %c248_357] : memref<1x16x256xf32, #tpu.memory_space<vmem>>, vector<1x1x8xf32>
    %271 = vector.shape_cast %270 : vector<1x1x8xf32> to vector<1x8xf32>
    %c0_358 = arith.constant 0 : index
    %c3_359 = arith.constant 3 : index
    %c248_360 = arith.constant 248 : index
    %272 = vector.load %arg2[%c0_358, %c3_359, %c248_360] : memref<1x16x256xf32, #tpu.memory_space<vmem>>, vector<1x1x8xf32>
    %273 = vector.shape_cast %272 : vector<1x1x8xf32> to vector<1x8xf32>
    %274 = tpu.concatenate %211, %213, %215, %217, %219, %221, %223, %225, %227, %229, %231, %233, %235, %237, %239, %241 in 1 : vector<1x8xf32>, vector<1x8xf32>, vector<1x8xf32>, vector<1x8xf32>, vector<1x8xf32>, vector<1x8xf32>, vector<1x8xf32>, vector<1x8xf32>, vector<1x8xf32>, vector<1x8xf32>, vector<1x8xf32>, vector<1x8xf32>, vector<1x8xf32>, vector<1x8xf32>, vector<1x8xf32>, vector<1x8xf32> -> vector<1x128xf32>
    %275 = tpu.concatenate %243, %245, %247, %249, %251, %253, %255, %257, %259, %261, %263, %265, %267, %269, %271, %273 in 1 : vector<1x8xf32>, vector<1x8xf32>, vector<1x8xf32>, vector<1x8xf32>, vector<1x8xf32>, vector<1x8xf32>, vector<1x8xf32>, vector<1x8xf32>, vector<1x8xf32>, vector<1x8xf32>, vector<1x8xf32>, vector<1x8xf32>, vector<1x8xf32>, vector<1x8xf32>, vector<1x8xf32>, vector<1x8xf32> -> vector<1x128xf32>
    %276 = tpu.concatenate %274, %275 in 1 : vector<1x128xf32>, vector<1x128xf32> -> vector<1x256xf32>
    %c0_361 = arith.constant 0 : index
    %c3_362 = arith.constant 3 : index
    %c0_363 = arith.constant 0 : index
    %c0_364 = arith.constant 0 : index
    %277 = vector.load %arg3[%c0_361, %c3_362, %c0_363, %c0_364] : memref<1x4x4x256xf32, #tpu.memory_space<vmem>>, vector<1x1x1x256xf32>
    %278 = vector.shape_cast %277 : vector<1x1x1x256xf32> to vector<1x256xf32>
    %279 = vector.shape_cast %276 : vector<1x256xf32> to vector<1x1x1x256xf32>
    tpu.vector_store %arg3[%c0_361, %c3_362, %c0_363, %c0_364], %279 {strides = array<i32>} : memref<1x4x4x256xf32, #tpu.memory_space<vmem>>, vector<1x1x1x256xf32>,
    %c0_365 = arith.constant 0 : index
    %c4 = arith.constant 4 : index
    %c0_366 = arith.constant 0 : index
    %280 = vector.load %arg2[%c0_365, %c4, %c0_366] : memref<1x16x256xf32, #tpu.memory_space<vmem>>, vector<1x1x8xf32>
    %281 = vector.shape_cast %280 : vector<1x1x8xf32> to vector<1x8xf32>
    %c0_367 = arith.constant 0 : index
    %c5 = arith.constant 5 : index
    %c0_368 = arith.constant 0 : index
    %282 = vector.load %arg2[%c0_367, %c5, %c0_368] : memref<1x16x256xf32, #tpu.memory_space<vmem>>, vector<1x1x8xf32>
    %283 = vector.shape_cast %282 : vector<1x1x8xf32> to vector<1x8xf32>
    %c0_369 = arith.constant 0 : index
    %c6 = arith.constant 6 : index
    %c0_370 = arith.constant 0 : index
    %284 = vector.load %arg2[%c0_369, %c6, %c0_370] : memref<1x16x256xf32, #tpu.memory_space<vmem>>, vector<1x1x8xf32>
    %285 = vector.shape_cast %284 : vector<1x1x8xf32> to vector<1x8xf32>
    %c0_371 = arith.constant 0 : index
    %c7 = arith.constant 7 : index
    %c0_372 = arith.constant 0 : index
    %286 = vector.load %arg2[%c0_371, %c7, %c0_372] : memref<1x16x256xf32, #tpu.memory_space<vmem>>, vector<1x1x8xf32>
    %287 = vector.shape_cast %286 : vector<1x1x8xf32> to vector<1x8xf32>
    %c0_373 = arith.constant 0 : index
    %c4_374 = arith.constant 4 : index
    %c8_375 = arith.constant 8 : index
    %288 = vector.load %arg2[%c0_373, %c4_374, %c8_375] : memref<1x16x256xf32, #tpu.memory_space<vmem>>, vector<1x1x8xf32>
    %289 = vector.shape_cast %288 : vector<1x1x8xf32> to vector<1x8xf32>
    %c0_376 = arith.constant 0 : index
    %c5_377 = arith.constant 5 : index
    %c8_378 = arith.constant 8 : index
    %290 = vector.load %arg2[%c0_376, %c5_377, %c8_378] : memref<1x16x256xf32, #tpu.memory_space<vmem>>, vector<1x1x8xf32>
    %291 = vector.shape_cast %290 : vector<1x1x8xf32> to vector<1x8xf32>
    %c0_379 = arith.constant 0 : index
    %c6_380 = arith.constant 6 : index
    %c8_381 = arith.constant 8 : index
    %292 = vector.load %arg2[%c0_379, %c6_380, %c8_381] : memref<1x16x256xf32, #tpu.memory_space<vmem>>, vector<1x1x8xf32>
    %293 = vector.shape_cast %292 : vector<1x1x8xf32> to vector<1x8xf32>
    %c0_382 = arith.constant 0 : index
    %c7_383 = arith.constant 7 : index
    %c8_384 = arith.constant 8 : index
    %294 = vector.load %arg2[%c0_382, %c7_383, %c8_384] : memref<1x16x256xf32, #tpu.memory_space<vmem>>, vector<1x1x8xf32>
    %295 = vector.shape_cast %294 : vector<1x1x8xf32> to vector<1x8xf32>
    %c0_385 = arith.constant 0 : index
    %c4_386 = arith.constant 4 : index
    %c16_387 = arith.constant 16 : index
    %296 = vector.load %arg2[%c0_385, %c4_386, %c16_387] : memref<1x16x256xf32, #tpu.memory_space<vmem>>, vector<1x1x8xf32>
    %297 = vector.shape_cast %296 : vector<1x1x8xf32> to vector<1x8xf32>
    %c0_388 = arith.constant 0 : index
    %c5_389 = arith.constant 5 : index
    %c16_390 = arith.constant 16 : index
    %298 = vector.load %arg2[%c0_388, %c5_389, %c16_390] : memref<1x16x256xf32, #tpu.memory_space<vmem>>, vector<1x1x8xf32>
    %299 = vector.shape_cast %298 : vector<1x1x8xf32> to vector<1x8xf32>
    %c0_391 = arith.constant 0 : index
    %c6_392 = arith.constant 6 : index
    %c16_393 = arith.constant 16 : index
    %300 = vector.load %arg2[%c0_391, %c6_392, %c16_393] : memref<1x16x256xf32, #tpu.memory_space<vmem>>, vector<1x1x8xf32>
    %301 = vector.shape_cast %300 : vector<1x1x8xf32> to vector<1x8xf32>
    %c0_394 = arith.constant 0 : index
    %c7_395 = arith.constant 7 : index
    %c16_396 = arith.constant 16 : index
    %302 = vector.load %arg2[%c0_394, %c7_395, %c16_396] : memref<1x16x256xf32, #tpu.memory_space<vmem>>, vector<1x1x8xf32>
    %303 = vector.shape_cast %302 : vector<1x1x8xf32> to vector<1x8xf32>
    %c0_397 = arith.constant 0 : index
    %c4_398 = arith.constant 4 : index
    %c24_399 = arith.constant 24 : index
    %304 = vector.load %arg2[%c0_397, %c4_398, %c24_399] : memref<1x16x256xf32, #tpu.memory_space<vmem>>, vector<1x1x8xf32>
    %305 = vector.shape_cast %304 : vector<1x1x8xf32> to vector<1x8xf32>
    %c0_400 = arith.constant 0 : index
    %c5_401 = arith.constant 5 : index
    %c24_402 = arith.constant 24 : index
    %306 = vector.load %arg2[%c0_400, %c5_401, %c24_402] : memref<1x16x256xf32, #tpu.memory_space<vmem>>, vector<1x1x8xf32>
    %307 = vector.shape_cast %306 : vector<1x1x8xf32> to vector<1x8xf32>
    %c0_403 = arith.constant 0 : index
    %c6_404 = arith.constant 6 : index
    %c24_405 = arith.constant 24 : index
    %308 = vector.load %arg2[%c0_403, %c6_404, %c24_405] : memref<1x16x256xf32, #tpu.memory_space<vmem>>, vector<1x1x8xf32>
    %309 = vector.shape_cast %308 : vector<1x1x8xf32> to vector<1x8xf32>
    %c0_406 = arith.constant 0 : index
    %c7_407 = arith.constant 7 : index
    %c24_408 = arith.constant 24 : index
    %310 = vector.load %arg2[%c0_406, %c7_407, %c24_408] : memref<1x16x256xf32, #tpu.memory_space<vmem>>, vector<1x1x8xf32>
    %311 = vector.shape_cast %310 : vector<1x1x8xf32> to vector<1x8xf32>
    %c0_409 = arith.constant 0 : index
    %c4_410 = arith.constant 4 : index
    %c32_411 = arith.constant 32 : index
    %312 = vector.load %arg2[%c0_409, %c4_410, %c32_411] : memref<1x16x256xf32, #tpu.memory_space<vmem>>, vector<1x1x8xf32>
    %313 = vector.shape_cast %312 : vector<1x1x8xf32> to vector<1x8xf32>
    %c0_412 = arith.constant 0 : index
    %c5_413 = arith.constant 5 : index
    %c32_414 = arith.constant 32 : index
    %314 = vector.load %arg2[%c0_412, %c5_413, %c32_414] : memref<1x16x256xf32, #tpu.memory_space<vmem>>, vector<1x1x8xf32>
    %315 = vector.shape_cast %314 : vector<1x1x8xf32> to vector<1x8xf32>
    %c0_415 = arith.constant 0 : index
    %c6_416 = arith.constant 6 : index
    %c32_417 = arith.constant 32 : index
    %316 = vector.load %arg2[%c0_415, %c6_416, %c32_417] : memref<1x16x256xf32, #tpu.memory_space<vmem>>, vector<1x1x8xf32>
    %317 = vector.shape_cast %316 : vector<1x1x8xf32> to vector<1x8xf32>
    %c0_418 = arith.constant 0 : index
    %c7_419 = arith.constant 7 : index
    %c32_420 = arith.constant 32 : index
    %318 = vector.load %arg2[%c0_418, %c7_419, %c32_420] : memref<1x16x256xf32, #tpu.memory_space<vmem>>, vector<1x1x8xf32>
    %319 = vector.shape_cast %318 : vector<1x1x8xf32> to vector<1x8xf32>
    %c0_421 = arith.constant 0 : index
    %c4_422 = arith.constant 4 : index
    %c40_423 = arith.constant 40 : index
    %320 = vector.load %arg2[%c0_421, %c4_422, %c40_423] : memref<1x16x256xf32, #tpu.memory_space<vmem>>, vector<1x1x8xf32>
    %321 = vector.shape_cast %320 : vector<1x1x8xf32> to vector<1x8xf32>
    %c0_424 = arith.constant 0 : index
    %c5_425 = arith.constant 5 : index
    %c40_426 = arith.constant 40 : index
    %322 = vector.load %arg2[%c0_424, %c5_425, %c40_426] : memref<1x16x256xf32, #tpu.memory_space<vmem>>, vector<1x1x8xf32>
    %323 = vector.shape_cast %322 : vector<1x1x8xf32> to vector<1x8xf32>
    %c0_427 = arith.constant 0 : index
    %c6_428 = arith.constant 6 : index
    %c40_429 = arith.constant 40 : index
    %324 = vector.load %arg2[%c0_427, %c6_428, %c40_429] : memref<1x16x256xf32, #tpu.memory_space<vmem>>, vector<1x1x8xf32>
    %325 = vector.shape_cast %324 : vector<1x1x8xf32> to vector<1x8xf32>
    %c0_430 = arith.constant 0 : index
    %c7_431 = arith.constant 7 : index
    %c40_432 = arith.constant 40 : index
    %326 = vector.load %arg2[%c0_430, %c7_431, %c40_432] : memref<1x16x256xf32, #tpu.memory_space<vmem>>, vector<1x1x8xf32>
    %327 = vector.shape_cast %326 : vector<1x1x8xf32> to vector<1x8xf32>
    %c0_433 = arith.constant 0 : index
    %c4_434 = arith.constant 4 : index
    %c48_435 = arith.constant 48 : index
    %328 = vector.load %arg2[%c0_433, %c4_434, %c48_435] : memref<1x16x256xf32, #tpu.memory_space<vmem>>, vector<1x1x8xf32>
    %329 = vector.shape_cast %328 : vector<1x1x8xf32> to vector<1x8xf32>
    %c0_436 = arith.constant 0 : index
    %c5_437 = arith.constant 5 : index
    %c48_438 = arith.constant 48 : index
    %330 = vector.load %arg2[%c0_436, %c5_437, %c48_438] : memref<1x16x256xf32, #tpu.memory_space<vmem>>, vector<1x1x8xf32>
    %331 = vector.shape_cast %330 : vector<1x1x8xf32> to vector<1x8xf32>
    %c0_439 = arith.constant 0 : index
    %c6_440 = arith.constant 6 : index
    %c48_441 = arith.constant 48 : index
    %332 = vector.load %arg2[%c0_439, %c6_440, %c48_441] : memref<1x16x256xf32, #tpu.memory_space<vmem>>, vector<1x1x8xf32>
    %333 = vector.shape_cast %332 : vector<1x1x8xf32> to vector<1x8xf32>
    %c0_442 = arith.constant 0 : index
    %c7_443 = arith.constant 7 : index
    %c48_444 = arith.constant 48 : index
    %334 = vector.load %arg2[%c0_442, %c7_443, %c48_444] : memref<1x16x256xf32, #tpu.memory_space<vmem>>, vector<1x1x8xf32>
    %335 = vector.shape_cast %334 : vector<1x1x8xf32> to vector<1x8xf32>
    %c0_445 = arith.constant 0 : index
    %c4_446 = arith.constant 4 : index
    %c56_447 = arith.constant 56 : index
    %336 = vector.load %arg2[%c0_445, %c4_446, %c56_447] : memref<1x16x256xf32, #tpu.memory_space<vmem>>, vector<1x1x8xf32>
    %337 = vector.shape_cast %336 : vector<1x1x8xf32> to vector<1x8xf32>
    %c0_448 = arith.constant 0 : index
    %c5_449 = arith.constant 5 : index
    %c56_450 = arith.constant 56 : index
    %338 = vector.load %arg2[%c0_448, %c5_449, %c56_450] : memref<1x16x256xf32, #tpu.memory_space<vmem>>, vector<1x1x8xf32>
    %339 = vector.shape_cast %338 : vector<1x1x8xf32> to vector<1x8xf32>
    %c0_451 = arith.constant 0 : index
    %c6_452 = arith.constant 6 : index
    %c56_453 = arith.constant 56 : index
    %340 = vector.load %arg2[%c0_451, %c6_452, %c56_453] : memref<1x16x256xf32, #tpu.memory_space<vmem>>, vector<1x1x8xf32>
    %341 = vector.shape_cast %340 : vector<1x1x8xf32> to vector<1x8xf32>
    %c0_454 = arith.constant 0 : index
    %c7_455 = arith.constant 7 : index
    %c56_456 = arith.constant 56 : index
    %342 = vector.load %arg2[%c0_454, %c7_455, %c56_456] : memref<1x16x256xf32, #tpu.memory_space<vmem>>, vector<1x1x8xf32>
    %343 = vector.shape_cast %342 : vector<1x1x8xf32> to vector<1x8xf32>
    %344 = tpu.concatenate %281, %283, %285, %287, %289, %291, %293, %295, %297, %299, %301, %303, %305, %307, %309, %311 in 1 : vector<1x8xf32>, vector<1x8xf32>, vector<1x8xf32>, vector<1x8xf32>, vector<1x8xf32>, vector<1x8xf32>, vector<1x8xf32>, vector<1x8xf32>, vector<1x8xf32>, vector<1x8xf32>, vector<1x8xf32>, vector<1x8xf32>, vector<1x8xf32>, vector<1x8xf32>, vector<1x8xf32>, vector<1x8xf32> -> vector<1x128xf32>
    %345 = tpu.concatenate %313, %315, %317, %319, %321, %323, %325, %327, %329, %331, %333, %335, %337, %339, %341, %343 in 1 : vector<1x8xf32>, vector<1x8xf32>, vector<1x8xf32>, vector<1x8xf32>, vector<1x8xf32>, vector<1x8xf32>, vector<1x8xf32>, vector<1x8xf32>, vector<1x8xf32>, vector<1x8xf32>, vector<1x8xf32>, vector<1x8xf32>, vector<1x8xf32>, vector<1x8xf32>, vector<1x8xf32>, vector<1x8xf32> -> vector<1x128xf32>
    %346 = tpu.concatenate %344, %345 in 1 : vector<1x128xf32>, vector<1x128xf32> -> vector<1x256xf32>
    %c0_457 = arith.constant 0 : index
    %c0_458 = arith.constant 0 : index
    %c1_459 = arith.constant 1 : index
    %c0_460 = arith.constant 0 : index
    %347 = vector.load %arg3[%c0_457, %c0_458, %c1_459, %c0_460] : memref<1x4x4x256xf32, #tpu.memory_space<vmem>>, vector<1x1x1x256xf32>
    %348 = vector.shape_cast %347 : vector<1x1x1x256xf32> to vector<1x256xf32>
    %349 = vector.shape_cast %346 : vector<1x256xf32> to vector<1x1x1x256xf32>
    tpu.vector_store %arg3[%c0_457, %c0_458, %c1_459, %c0_460], %349 {strides = array<i32>} : memref<1x4x4x256xf32, #tpu.memory_space<vmem>>, vector<1x1x1x256xf32>,
    %c0_461 = arith.constant 0 : index
    %c4_462 = arith.constant 4 : index
    %c64_463 = arith.constant 64 : index
    %350 = vector.load %arg2[%c0_461, %c4_462, %c64_463] : memref<1x16x256xf32, #tpu.memory_space<vmem>>, vector<1x1x8xf32>
    %351 = vector.shape_cast %350 : vector<1x1x8xf32> to vector<1x8xf32>
    %c0_464 = arith.constant 0 : index
    %c5_465 = arith.constant 5 : index
    %c64_466 = arith.constant 64 : index
    %352 = vector.load %arg2[%c0_464, %c5_465, %c64_466] : memref<1x16x256xf32, #tpu.memory_space<vmem>>, vector<1x1x8xf32>
    %353 = vector.shape_cast %352 : vector<1x1x8xf32> to vector<1x8xf32>
    %c0_467 = arith.constant 0 : index
    %c6_468 = arith.constant 6 : index
    %c64_469 = arith.constant 64 : index
    %354 = vector.load %arg2[%c0_467, %c6_468, %c64_469] : memref<1x16x256xf32, #tpu.memory_space<vmem>>, vector<1x1x8xf32>
    %355 = vector.shape_cast %354 : vector<1x1x8xf32> to vector<1x8xf32>
    %c0_470 = arith.constant 0 : index
    %c7_471 = arith.constant 7 : index
    %c64_472 = arith.constant 64 : index
    %356 = vector.load %arg2[%c0_470, %c7_471, %c64_472] : memref<1x16x256xf32, #tpu.memory_space<vmem>>, vector<1x1x8xf32>
    %357 = vector.shape_cast %356 : vector<1x1x8xf32> to vector<1x8xf32>
    %c0_473 = arith.constant 0 : index
    %c4_474 = arith.constant 4 : index
    %c72_475 = arith.constant 72 : index
    %358 = vector.load %arg2[%c0_473, %c4_474, %c72_475] : memref<1x16x256xf32, #tpu.memory_space<vmem>>, vector<1x1x8xf32>
    %359 = vector.shape_cast %358 : vector<1x1x8xf32> to vector<1x8xf32>
    %c0_476 = arith.constant 0 : index
    %c5_477 = arith.constant 5 : index
    %c72_478 = arith.constant 72 : index
    %360 = vector.load %arg2[%c0_476, %c5_477, %c72_478] : memref<1x16x256xf32, #tpu.memory_space<vmem>>, vector<1x1x8xf32>
    %361 = vector.shape_cast %360 : vector<1x1x8xf32> to vector<1x8xf32>
    %c0_479 = arith.constant 0 : index
    %c6_480 = arith.constant 6 : index
    %c72_481 = arith.constant 72 : index
    %362 = vector.load %arg2[%c0_479, %c6_480, %c72_481] : memref<1x16x256xf32, #tpu.memory_space<vmem>>, vector<1x1x8xf32>
    %363 = vector.shape_cast %362 : vector<1x1x8xf32> to vector<1x8xf32>
    %c0_482 = arith.constant 0 : index
    %c7_483 = arith.constant 7 : index
    %c72_484 = arith.constant 72 : index
    %364 = vector.load %arg2[%c0_482, %c7_483, %c72_484] : memref<1x16x256xf32, #tpu.memory_space<vmem>>, vector<1x1x8xf32>
    %365 = vector.shape_cast %364 : vector<1x1x8xf32> to vector<1x8xf32>
    %c0_485 = arith.constant 0 : index
    %c4_486 = arith.constant 4 : index
    %c80_487 = arith.constant 80 : index
    %366 = vector.load %arg2[%c0_485, %c4_486, %c80_487] : memref<1x16x256xf32, #tpu.memory_space<vmem>>, vector<1x1x8xf32>
    %367 = vector.shape_cast %366 : vector<1x1x8xf32> to vector<1x8xf32>
    %c0_488 = arith.constant 0 : index
    %c5_489 = arith.constant 5 : index
    %c80_490 = arith.constant 80 : index
    %368 = vector.load %arg2[%c0_488, %c5_489, %c80_490] : memref<1x16x256xf32, #tpu.memory_space<vmem>>, vector<1x1x8xf32>
    %369 = vector.shape_cast %368 : vector<1x1x8xf32> to vector<1x8xf32>
    %c0_491 = arith.constant 0 : index
    %c6_492 = arith.constant 6 : index
    %c80_493 = arith.constant 80 : index
    %370 = vector.load %arg2[%c0_491, %c6_492, %c80_493] : memref<1x16x256xf32, #tpu.memory_space<vmem>>, vector<1x1x8xf32>
    %371 = vector.shape_cast %370 : vector<1x1x8xf32> to vector<1x8xf32>
    %c0_494 = arith.constant 0 : index
    %c7_495 = arith.constant 7 : index
    %c80_496 = arith.constant 80 : index
    %372 = vector.load %arg2[%c0_494, %c7_495, %c80_496] : memref<1x16x256xf32, #tpu.memory_space<vmem>>, vector<1x1x8xf32>
    %373 = vector.shape_cast %372 : vector<1x1x8xf32> to vector<1x8xf32>
    %c0_497 = arith.constant 0 : index
    %c4_498 = arith.constant 4 : index
    %c88_499 = arith.constant 88 : index
    %374 = vector.load %arg2[%c0_497, %c4_498, %c88_499] : memref<1x16x256xf32, #tpu.memory_space<vmem>>, vector<1x1x8xf32>
    %375 = vector.shape_cast %374 : vector<1x1x8xf32> to vector<1x8xf32>
    %c0_500 = arith.constant 0 : index
    %c5_501 = arith.constant 5 : index
    %c88_502 = arith.constant 88 : index
    %376 = vector.load %arg2[%c0_500, %c5_501, %c88_502] : memref<1x16x256xf32, #tpu.memory_space<vmem>>, vector<1x1x8xf32>
    %377 = vector.shape_cast %376 : vector<1x1x8xf32> to vector<1x8xf32>
    %c0_503 = arith.constant 0 : index
    %c6_504 = arith.constant 6 : index
    %c88_505 = arith.constant 88 : index
    %378 = vector.load %arg2[%c0_503, %c6_504, %c88_505] : memref<1x16x256xf32, #tpu.memory_space<vmem>>, vector<1x1x8xf32>
    %379 = vector.shape_cast %378 : vector<1x1x8xf32> to vector<1x8xf32>
    %c0_506 = arith.constant 0 : index
    %c7_507 = arith.constant 7 : index
    %c88_508 = arith.constant 88 : index
    %380 = vector.load %arg2[%c0_506, %c7_507, %c88_508] : memref<1x16x256xf32, #tpu.memory_space<vmem>>, vector<1x1x8xf32>
    %381 = vector.shape_cast %380 : vector<1x1x8xf32> to vector<1x8xf32>
    %c0_509 = arith.constant 0 : index
    %c4_510 = arith.constant 4 : index
    %c96_511 = arith.constant 96 : index
    %382 = vector.load %arg2[%c0_509, %c4_510, %c96_511] : memref<1x16x256xf32, #tpu.memory_space<vmem>>, vector<1x1x8xf32>
    %383 = vector.shape_cast %382 : vector<1x1x8xf32> to vector<1x8xf32>
    %c0_512 = arith.constant 0 : index
    %c5_513 = arith.constant 5 : index
    %c96_514 = arith.constant 96 : index
    %384 = vector.load %arg2[%c0_512, %c5_513, %c96_514] : memref<1x16x256xf32, #tpu.memory_space<vmem>>, vector<1x1x8xf32>
    %385 = vector.shape_cast %384 : vector<1x1x8xf32> to vector<1x8xf32>
    %c0_515 = arith.constant 0 : index
    %c6_516 = arith.constant 6 : index
    %c96_517 = arith.constant 96 : index
    %386 = vector.load %arg2[%c0_515, %c6_516, %c96_517] : memref<1x16x256xf32, #tpu.memory_space<vmem>>, vector<1x1x8xf32>
    %387 = vector.shape_cast %386 : vector<1x1x8xf32> to vector<1x8xf32>
    %c0_518 = arith.constant 0 : index
    %c7_519 = arith.constant 7 : index
    %c96_520 = arith.constant 96 : index
    %388 = vector.load %arg2[%c0_518, %c7_519, %c96_520] : memref<1x16x256xf32, #tpu.memory_space<vmem>>, vector<1x1x8xf32>
    %389 = vector.shape_cast %388 : vector<1x1x8xf32> to vector<1x8xf32>
    %c0_521 = arith.constant 0 : index
    %c4_522 = arith.constant 4 : index
    %c104_523 = arith.constant 104 : index
    %390 = vector.load %arg2[%c0_521, %c4_522, %c104_523] : memref<1x16x256xf32, #tpu.memory_space<vmem>>, vector<1x1x8xf32>
    %391 = vector.shape_cast %390 : vector<1x1x8xf32> to vector<1x8xf32>
    %c0_524 = arith.constant 0 : index
    %c5_525 = arith.constant 5 : index
    %c104_526 = arith.constant 104 : index
    %392 = vector.load %arg2[%c0_524, %c5_525, %c104_526] : memref<1x16x256xf32, #tpu.memory_space<vmem>>, vector<1x1x8xf32>
    %393 = vector.shape_cast %392 : vector<1x1x8xf32> to vector<1x8xf32>
    %c0_527 = arith.constant 0 : index
    %c6_528 = arith.constant 6 : index
    %c104_529 = arith.constant 104 : index
    %394 = vector.load %arg2[%c0_527, %c6_528, %c104_529] : memref<1x16x256xf32, #tpu.memory_space<vmem>>, vector<1x1x8xf32>
    %395 = vector.shape_cast %394 : vector<1x1x8xf32> to vector<1x8xf32>
    %c0_530 = arith.constant 0 : index
    %c7_531 = arith.constant 7 : index
    %c104_532 = arith.constant 104 : index
    %396 = vector.load %arg2[%c0_530, %c7_531, %c104_532] : memref<1x16x256xf32, #tpu.memory_space<vmem>>, vector<1x1x8xf32>
    %397 = vector.shape_cast %396 : vector<1x1x8xf32> to vector<1x8xf32>
    %c0_533 = arith.constant 0 : index
    %c4_534 = arith.constant 4 : index
    %c112_535 = arith.constant 112 : index
    %398 = vector.load %arg2[%c0_533, %c4_534, %c112_535] : memref<1x16x256xf32, #tpu.memory_space<vmem>>, vector<1x1x8xf32>
    %399 = vector.shape_cast %398 : vector<1x1x8xf32> to vector<1x8xf32>
    %c0_536 = arith.constant 0 : index
    %c5_537 = arith.constant 5 : index
    %c112_538 = arith.constant 112 : index
    %400 = vector.load %arg2[%c0_536, %c5_537, %c112_538] : memref<1x16x256xf32, #tpu.memory_space<vmem>>, vector<1x1x8xf32>
    %401 = vector.shape_cast %400 : vector<1x1x8xf32> to vector<1x8xf32>
    %c0_539 = arith.constant 0 : index
    %c6_540 = arith.constant 6 : index
    %c112_541 = arith.constant 112 : index
    %402 = vector.load %arg2[%c0_539, %c6_540, %c112_541] : memref<1x16x256xf32, #tpu.memory_space<vmem>>, vector<1x1x8xf32>
    %403 = vector.shape_cast %402 : vector<1x1x8xf32> to vector<1x8xf32>
    %c0_542 = arith.constant 0 : index
    %c7_543 = arith.constant 7 : index
    %c112_544 = arith.constant 112 : index
    %404 = vector.load %arg2[%c0_542, %c7_543, %c112_544] : memref<1x16x256xf32, #tpu.memory_space<vmem>>, vector<1x1x8xf32>
    %405 = vector.shape_cast %404 : vector<1x1x8xf32> to vector<1x8xf32>
    %c0_545 = arith.constant 0 : index
    %c4_546 = arith.constant 4 : index
    %c120_547 = arith.constant 120 : index
    %406 = vector.load %arg2[%c0_545, %c4_546, %c120_547] : memref<1x16x256xf32, #tpu.memory_space<vmem>>, vector<1x1x8xf32>
    %407 = vector.shape_cast %406 : vector<1x1x8xf32> to vector<1x8xf32>
    %c0_548 = arith.constant 0 : index
    %c5_549 = arith.constant 5 : index
    %c120_550 = arith.constant 120 : index
    %408 = vector.load %arg2[%c0_548, %c5_549, %c120_550] : memref<1x16x256xf32, #tpu.memory_space<vmem>>, vector<1x1x8xf32>
    %409 = vector.shape_cast %408 : vector<1x1x8xf32> to vector<1x8xf32>
    %c0_551 = arith.constant 0 : index
    %c6_552 = arith.constant 6 : index
    %c120_553 = arith.constant 120 : index
    %410 = vector.load %arg2[%c0_551, %c6_552, %c120_553] : memref<1x16x256xf32, #tpu.memory_space<vmem>>, vector<1x1x8xf32>
    %411 = vector.shape_cast %410 : vector<1x1x8xf32> to vector<1x8xf32>
    %c0_554 = arith.constant 0 : index
    %c7_555 = arith.constant 7 : index
    %c120_556 = arith.constant 120 : index
    %412 = vector.load %arg2[%c0_554, %c7_555, %c120_556] : memref<1x16x256xf32, #tpu.memory_space<vmem>>, vector<1x1x8xf32>
    %413 = vector.shape_cast %412 : vector<1x1x8xf32> to vector<1x8xf32>
    %414 = tpu.concatenate %351, %353, %355, %357, %359, %361, %363, %365, %367, %369, %371, %373, %375, %377, %379, %381 in 1 : vector<1x8xf32>, vector<1x8xf32>, vector<1x8xf32>, vector<1x8xf32>, vector<1x8xf32>, vector<1x8xf32>, vector<1x8xf32>, vector<1x8xf32>, vector<1x8xf32>, vector<1x8xf32>, vector<1x8xf32>, vector<1x8xf32>, vector<1x8xf32>, vector<1x8xf32>, vector<1x8xf32>, vector<1x8xf32> -> vector<1x128xf32>
    %415 = tpu.concatenate %383, %385, %387, %389, %391, %393, %395, %397, %399, %401, %403, %405, %407, %409, %411, %413 in 1 : vector<1x8xf32>, vector<1x8xf32>, vector<1x8xf32>, vector<1x8xf32>, vector<1x8xf32>, vector<1x8xf32>, vector<1x8xf32>, vector<1x8xf32>, vector<1x8xf32>, vector<1x8xf32>, vector<1x8xf32>, vector<1x8xf32>, vector<1x8xf32>, vector<1x8xf32>, vector<1x8xf32>, vector<1x8xf32> -> vector<1x128xf32>
    %416 = tpu.concatenate %414, %415 in 1 : vector<1x128xf32>, vector<1x128xf32> -> vector<1x256xf32>
    %c0_557 = arith.constant 0 : index
    %c1_558 = arith.constant 1 : index
    %c1_559 = arith.constant 1 : index
    %c0_560 = arith.constant 0 : index
    %417 = vector.load %arg3[%c0_557, %c1_558, %c1_559, %c0_560] : memref<1x4x4x256xf32, #tpu.memory_space<vmem>>, vector<1x1x1x256xf32>
    %418 = vector.shape_cast %417 : vector<1x1x1x256xf32> to vector<1x256xf32>
    %419 = vector.shape_cast %416 : vector<1x256xf32> to vector<1x1x1x256xf32>
    tpu.vector_store %arg3[%c0_557, %c1_558, %c1_559, %c0_560], %419 {strides = array<i32>} : memref<1x4x4x256xf32, #tpu.memory_space<vmem>>, vector<1x1x1x256xf32>,
    %c0_561 = arith.constant 0 : index
    %c4_562 = arith.constant 4 : index
    %c128_563 = arith.constant 128 : index
    %420 = vector.load %arg2[%c0_561, %c4_562, %c128_563] : memref<1x16x256xf32, #tpu.memory_space<vmem>>, vector<1x1x8xf32>
    %421 = vector.shape_cast %420 : vector<1x1x8xf32> to vector<1x8xf32>
    %c0_564 = arith.constant 0 : index
    %c5_565 = arith.constant 5 : index
    %c128_566 = arith.constant 128 : index
    %422 = vector.load %arg2[%c0_564, %c5_565, %c128_566] : memref<1x16x256xf32, #tpu.memory_space<vmem>>, vector<1x1x8xf32>
    %423 = vector.shape_cast %422 : vector<1x1x8xf32> to vector<1x8xf32>
    %c0_567 = arith.constant 0 : index
    %c6_568 = arith.constant 6 : index
    %c128_569 = arith.constant 128 : index
    %424 = vector.load %arg2[%c0_567, %c6_568, %c128_569] : memref<1x16x256xf32, #tpu.memory_space<vmem>>, vector<1x1x8xf32>
    %425 = vector.shape_cast %424 : vector<1x1x8xf32> to vector<1x8xf32>
    %c0_570 = arith.constant 0 : index
    %c7_571 = arith.constant 7 : index
    %c128_572 = arith.constant 128 : index
    %426 = vector.load %arg2[%c0_570, %c7_571, %c128_572] : memref<1x16x256xf32, #tpu.memory_space<vmem>>, vector<1x1x8xf32>
    %427 = vector.shape_cast %426 : vector<1x1x8xf32> to vector<1x8xf32>
    %c0_573 = arith.constant 0 : index
    %c4_574 = arith.constant 4 : index
    %c136_575 = arith.constant 136 : index
    %428 = vector.load %arg2[%c0_573, %c4_574, %c136_575] : memref<1x16x256xf32, #tpu.memory_space<vmem>>, vector<1x1x8xf32>
    %429 = vector.shape_cast %428 : vector<1x1x8xf32> to vector<1x8xf32>
    %c0_576 = arith.constant 0 : index
    %c5_577 = arith.constant 5 : index
    %c136_578 = arith.constant 136 : index
    %430 = vector.load %arg2[%c0_576, %c5_577, %c136_578] : memref<1x16x256xf32, #tpu.memory_space<vmem>>, vector<1x1x8xf32>
    %431 = vector.shape_cast %430 : vector<1x1x8xf32> to vector<1x8xf32>
    %c0_579 = arith.constant 0 : index
    %c6_580 = arith.constant 6 : index
    %c136_581 = arith.constant 136 : index
    %432 = vector.load %arg2[%c0_579, %c6_580, %c136_581] : memref<1x16x256xf32, #tpu.memory_space<vmem>>, vector<1x1x8xf32>
    %433 = vector.shape_cast %432 : vector<1x1x8xf32> to vector<1x8xf32>
    %c0_582 = arith.constant 0 : index
    %c7_583 = arith.constant 7 : index
    %c136_584 = arith.constant 136 : index
    %434 = vector.load %arg2[%c0_582, %c7_583, %c136_584] : memref<1x16x256xf32, #tpu.memory_space<vmem>>, vector<1x1x8xf32>
    %435 = vector.shape_cast %434 : vector<1x1x8xf32> to vector<1x8xf32>
    %c0_585 = arith.constant 0 : index
    %c4_586 = arith.constant 4 : index
    %c144_587 = arith.constant 144 : index
    %436 = vector.load %arg2[%c0_585, %c4_586, %c144_587] : memref<1x16x256xf32, #tpu.memory_space<vmem>>, vector<1x1x8xf32>
    %437 = vector.shape_cast %436 : vector<1x1x8xf32> to vector<1x8xf32>
    %c0_588 = arith.constant 0 : index
    %c5_589 = arith.constant 5 : index
    %c144_590 = arith.constant 144 : index
    %438 = vector.load %arg2[%c0_588, %c5_589, %c144_590] : memref<1x16x256xf32, #tpu.memory_space<vmem>>, vector<1x1x8xf32>
    %439 = vector.shape_cast %438 : vector<1x1x8xf32> to vector<1x8xf32>
    %c0_591 = arith.constant 0 : index
    %c6_592 = arith.constant 6 : index
    %c144_593 = arith.constant 144 : index
    %440 = vector.load %arg2[%c0_591, %c6_592, %c144_593] : memref<1x16x256xf32, #tpu.memory_space<vmem>>, vector<1x1x8xf32>
    %441 = vector.shape_cast %440 : vector<1x1x8xf32> to vector<1x8xf32>
    %c0_594 = arith.constant 0 : index
    %c7_595 = arith.constant 7 : index
    %c144_596 = arith.constant 144 : index
    %442 = vector.load %arg2[%c0_594, %c7_595, %c144_596] : memref<1x16x256xf32, #tpu.memory_space<vmem>>, vector<1x1x8xf32>
    %443 = vector.shape_cast %442 : vector<1x1x8xf32> to vector<1x8xf32>
    %c0_597 = arith.constant 0 : index
    %c4_598 = arith.constant 4 : index
    %c152_599 = arith.constant 152 : index
    %444 = vector.load %arg2[%c0_597, %c4_598, %c152_599] : memref<1x16x256xf32, #tpu.memory_space<vmem>>, vector<1x1x8xf32>
    %445 = vector.shape_cast %444 : vector<1x1x8xf32> to vector<1x8xf32>
    %c0_600 = arith.constant 0 : index
    %c5_601 = arith.constant 5 : index
    %c152_602 = arith.constant 152 : index
    %446 = vector.load %arg2[%c0_600, %c5_601, %c152_602] : memref<1x16x256xf32, #tpu.memory_space<vmem>>, vector<1x1x8xf32>
    %447 = vector.shape_cast %446 : vector<1x1x8xf32> to vector<1x8xf32>
    %c0_603 = arith.constant 0 : index
    %c6_604 = arith.constant 6 : index
    %c152_605 = arith.constant 152 : index
    %448 = vector.load %arg2[%c0_603, %c6_604, %c152_605] : memref<1x16x256xf32, #tpu.memory_space<vmem>>, vector<1x1x8xf32>
    %449 = vector.shape_cast %448 : vector<1x1x8xf32> to vector<1x8xf32>
    %c0_606 = arith.constant 0 : index
    %c7_607 = arith.constant 7 : index
    %c152_608 = arith.constant 152 : index
    %450 = vector.load %arg2[%c0_606, %c7_607, %c152_608] : memref<1x16x256xf32, #tpu.memory_space<vmem>>, vector<1x1x8xf32>
    %451 = vector.shape_cast %450 : vector<1x1x8xf32> to vector<1x8xf32>
    %c0_609 = arith.constant 0 : index
    %c4_610 = arith.constant 4 : index
    %c160_611 = arith.constant 160 : index
    %452 = vector.load %arg2[%c0_609, %c4_610, %c160_611] : memref<1x16x256xf32, #tpu.memory_space<vmem>>, vector<1x1x8xf32>
    %453 = vector.shape_cast %452 : vector<1x1x8xf32> to vector<1x8xf32>
    %c0_612 = arith.constant 0 : index
    %c5_613 = arith.constant 5 : index
    %c160_614 = arith.constant 160 : index
    %454 = vector.load %arg2[%c0_612, %c5_613, %c160_614] : memref<1x16x256xf32, #tpu.memory_space<vmem>>, vector<1x1x8xf32>
    %455 = vector.shape_cast %454 : vector<1x1x8xf32> to vector<1x8xf32>
    %c0_615 = arith.constant 0 : index
    %c6_616 = arith.constant 6 : index
    %c160_617 = arith.constant 160 : index
    %456 = vector.load %arg2[%c0_615, %c6_616, %c160_617] : memref<1x16x256xf32, #tpu.memory_space<vmem>>, vector<1x1x8xf32>
    %457 = vector.shape_cast %456 : vector<1x1x8xf32> to vector<1x8xf32>
    %c0_618 = arith.constant 0 : index
    %c7_619 = arith.constant 7 : index
    %c160_620 = arith.constant 160 : index
    %458 = vector.load %arg2[%c0_618, %c7_619, %c160_620] : memref<1x16x256xf32, #tpu.memory_space<vmem>>, vector<1x1x8xf32>
    %459 = vector.shape_cast %458 : vector<1x1x8xf32> to vector<1x8xf32>
    %c0_621 = arith.constant 0 : index
    %c4_622 = arith.constant 4 : index
    %c168_623 = arith.constant 168 : index
    %460 = vector.load %arg2[%c0_621, %c4_622, %c168_623] : memref<1x16x256xf32, #tpu.memory_space<vmem>>, vector<1x1x8xf32>
    %461 = vector.shape_cast %460 : vector<1x1x8xf32> to vector<1x8xf32>
    %c0_624 = arith.constant 0 : index
    %c5_625 = arith.constant 5 : index
    %c168_626 = arith.constant 168 : index
    %462 = vector.load %arg2[%c0_624, %c5_625, %c168_626] : memref<1x16x256xf32, #tpu.memory_space<vmem>>, vector<1x1x8xf32>
    %463 = vector.shape_cast %462 : vector<1x1x8xf32> to vector<1x8xf32>
    %c0_627 = arith.constant 0 : index
    %c6_628 = arith.constant 6 : index
    %c168_629 = arith.constant 168 : index
    %464 = vector.load %arg2[%c0_627, %c6_628, %c168_629] : memref<1x16x256xf32, #tpu.memory_space<vmem>>, vector<1x1x8xf32>
    %465 = vector.shape_cast %464 : vector<1x1x8xf32> to vector<1x8xf32>
    %c0_630 = arith.constant 0 : index
    %c7_631 = arith.constant 7 : index
    %c168_632 = arith.constant 168 : index
    %466 = vector.load %arg2[%c0_630, %c7_631, %c168_632] : memref<1x16x256xf32, #tpu.memory_space<vmem>>, vector<1x1x8xf32>
    %467 = vector.shape_cast %466 : vector<1x1x8xf32> to vector<1x8xf32>
    %c0_633 = arith.constant 0 : index
    %c4_634 = arith.constant 4 : index
    %c176_635 = arith.constant 176 : index
    %468 = vector.load %arg2[%c0_633, %c4_634, %c176_635] : memref<1x16x256xf32, #tpu.memory_space<vmem>>, vector<1x1x8xf32>
    %469 = vector.shape_cast %468 : vector<1x1x8xf32> to vector<1x8xf32>
    %c0_636 = arith.constant 0 : index
    %c5_637 = arith.constant 5 : index
    %c176_638 = arith.constant 176 : index
    %470 = vector.load %arg2[%c0_636, %c5_637, %c176_638] : memref<1x16x256xf32, #tpu.memory_space<vmem>>, vector<1x1x8xf32>
    %471 = vector.shape_cast %470 : vector<1x1x8xf32> to vector<1x8xf32>
    %c0_639 = arith.constant 0 : index
    %c6_640 = arith.constant 6 : index
    %c176_641 = arith.constant 176 : index
    %472 = vector.load %arg2[%c0_639, %c6_640, %c176_641] : memref<1x16x256xf32, #tpu.memory_space<vmem>>, vector<1x1x8xf32>
    %473 = vector.shape_cast %472 : vector<1x1x8xf32> to vector<1x8xf32>
    %c0_642 = arith.constant 0 : index
    %c7_643 = arith.constant 7 : index
    %c176_644 = arith.constant 176 : index
    %474 = vector.load %arg2[%c0_642, %c7_643, %c176_644] : memref<1x16x256xf32, #tpu.memory_space<vmem>>, vector<1x1x8xf32>
    %475 = vector.shape_cast %474 : vector<1x1x8xf32> to vector<1x8xf32>
    %c0_645 = arith.constant 0 : index
    %c4_646 = arith.constant 4 : index
    %c184_647 = arith.constant 184 : index
    %476 = vector.load %arg2[%c0_645, %c4_646, %c184_647] : memref<1x16x256xf32, #tpu.memory_space<vmem>>, vector<1x1x8xf32>
    %477 = vector.shape_cast %476 : vector<1x1x8xf32> to vector<1x8xf32>
    %c0_648 = arith.constant 0 : index
    %c5_649 = arith.constant 5 : index
    %c184_650 = arith.constant 184 : index
    %478 = vector.load %arg2[%c0_648, %c5_649, %c184_650] : memref<1x16x256xf32, #tpu.memory_space<vmem>>, vector<1x1x8xf32>
    %479 = vector.shape_cast %478 : vector<1x1x8xf32> to vector<1x8xf32>
    %c0_651 = arith.constant 0 : index
    %c6_652 = arith.constant 6 : index
    %c184_653 = arith.constant 184 : index
    %480 = vector.load %arg2[%c0_651, %c6_652, %c184_653] : memref<1x16x256xf32, #tpu.memory_space<vmem>>, vector<1x1x8xf32>
    %481 = vector.shape_cast %480 : vector<1x1x8xf32> to vector<1x8xf32>
    %c0_654 = arith.constant 0 : index
    %c7_655 = arith.constant 7 : index
    %c184_656 = arith.constant 184 : index
    %482 = vector.load %arg2[%c0_654, %c7_655, %c184_656] : memref<1x16x256xf32, #tpu.memory_space<vmem>>, vector<1x1x8xf32>
    %483 = vector.shape_cast %482 : vector<1x1x8xf32> to vector<1x8xf32>
    %484 = tpu.concatenate %421, %423, %425, %427, %429, %431, %433, %435, %437, %439, %441, %443, %445, %447, %449, %451 in 1 : vector<1x8xf32>, vector<1x8xf32>, vector<1x8xf32>, vector<1x8xf32>, vector<1x8xf32>, vector<1x8xf32>, vector<1x8xf32>, vector<1x8xf32>, vector<1x8xf32>, vector<1x8xf32>, vector<1x8xf32>, vector<1x8xf32>, vector<1x8xf32>, vector<1x8xf32>, vector<1x8xf32>, vector<1x8xf32> -> vector<1x128xf32>
    %485 = tpu.concatenate %453, %455, %457, %459, %461, %463, %465, %467, %469, %471, %473, %475, %477, %479, %481, %483 in 1 : vector<1x8xf32>, vector<1x8xf32>, vector<1x8xf32>, vector<1x8xf32>, vector<1x8xf32>, vector<1x8xf32>, vector<1x8xf32>, vector<1x8xf32>, vector<1x8xf32>, vector<1x8xf32>, vector<1x8xf32>, vector<1x8xf32>, vector<1x8xf32>, vector<1x8xf32>, vector<1x8xf32>, vector<1x8xf32> -> vector<1x128xf32>
    %486 = tpu.concatenate %484, %485 in 1 : vector<1x128xf32>, vector<1x128xf32> -> vector<1x256xf32>
    %c0_657 = arith.constant 0 : index
    %c2_658 = arith.constant 2 : index
    %c1_659 = arith.constant 1 : index
    %c0_660 = arith.constant 0 : index
    %487 = vector.load %arg3[%c0_657, %c2_658, %c1_659, %c0_660] : memref<1x4x4x256xf32, #tpu.memory_space<vmem>>, vector<1x1x1x256xf32>
    %488 = vector.shape_cast %487 : vector<1x1x1x256xf32> to vector<1x256xf32>
    %489 = vector.shape_cast %486 : vector<1x256xf32> to vector<1x1x1x256xf32>
    tpu.vector_store %arg3[%c0_657, %c2_658, %c1_659, %c0_660], %489 {strides = array<i32>} : memref<1x4x4x256xf32, #tpu.memory_space<vmem>>, vector<1x1x1x256xf32>,
    %c0_661 = arith.constant 0 : index
    %c4_662 = arith.constant 4 : index
    %c192_663 = arith.constant 192 : index
    %490 = vector.load %arg2[%c0_661, %c4_662, %c192_663] : memref<1x16x256xf32, #tpu.memory_space<vmem>>, vector<1x1x8xf32>
    %491 = vector.shape_cast %490 : vector<1x1x8xf32> to vector<1x8xf32>
    %c0_664 = arith.constant 0 : index
    %c5_665 = arith.constant 5 : index
    %c192_666 = arith.constant 192 : index
    %492 = vector.load %arg2[%c0_664, %c5_665, %c192_666] : memref<1x16x256xf32, #tpu.memory_space<vmem>>, vector<1x1x8xf32>
    %493 = vector.shape_cast %492 : vector<1x1x8xf32> to vector<1x8xf32>
    %c0_667 = arith.constant 0 : index
    %c6_668 = arith.constant 6 : index
    %c192_669 = arith.constant 192 : index
    %494 = vector.load %arg2[%c0_667, %c6_668, %c192_669] : memref<1x16x256xf32, #tpu.memory_space<vmem>>, vector<1x1x8xf32>
    %495 = vector.shape_cast %494 : vector<1x1x8xf32> to vector<1x8xf32>
    %c0_670 = arith.constant 0 : index
    %c7_671 = arith.constant 7 : index
    %c192_672 = arith.constant 192 : index
    %496 = vector.load %arg2[%c0_670, %c7_671, %c192_672] : memref<1x16x256xf32, #tpu.memory_space<vmem>>, vector<1x1x8xf32>
    %497 = vector.shape_cast %496 : vector<1x1x8xf32> to vector<1x8xf32>
    %c0_673 = arith.constant 0 : index
    %c4_674 = arith.constant 4 : index
    %c200_675 = arith.constant 200 : index
    %498 = vector.load %arg2[%c0_673, %c4_674, %c200_675] : memref<1x16x256xf32, #tpu.memory_space<vmem>>, vector<1x1x8xf32>
    %499 = vector.shape_cast %498 : vector<1x1x8xf32> to vector<1x8xf32>
    %c0_676 = arith.constant 0 : index
    %c5_677 = arith.constant 5 : index
    %c200_678 = arith.constant 200 : index
    %500 = vector.load %arg2[%c0_676, %c5_677, %c200_678] : memref<1x16x256xf32, #tpu.memory_space<vmem>>, vector<1x1x8xf32>
    %501 = vector.shape_cast %500 : vector<1x1x8xf32> to vector<1x8xf32>
    %c0_679 = arith.constant 0 : index
    %c6_680 = arith.constant 6 : index
    %c200_681 = arith.constant 200 : index
    %502 = vector.load %arg2[%c0_679, %c6_680, %c200_681] : memref<1x16x256xf32, #tpu.memory_space<vmem>>, vector<1x1x8xf32>
    %503 = vector.shape_cast %502 : vector<1x1x8xf32> to vector<1x8xf32>
    %c0_682 = arith.constant 0 : index
    %c7_683 = arith.constant 7 : index
    %c200_684 = arith.constant 200 : index
    %504 = vector.load %arg2[%c0_682, %c7_683, %c200_684] : memref<1x16x256xf32, #tpu.memory_space<vmem>>, vector<1x1x8xf32>
    %505 = vector.shape_cast %504 : vector<1x1x8xf32> to vector<1x8xf32>
    %c0_685 = arith.constant 0 : index
    %c4_686 = arith.constant 4 : index
    %c208_687 = arith.constant 208 : index
    %506 = vector.load %arg2[%c0_685, %c4_686, %c208_687] : memref<1x16x256xf32, #tpu.memory_space<vmem>>, vector<1x1x8xf32>
    %507 = vector.shape_cast %506 : vector<1x1x8xf32> to vector<1x8xf32>
    %c0_688 = arith.constant 0 : index
    %c5_689 = arith.constant 5 : index
    %c208_690 = arith.constant 208 : index
    %508 = vector.load %arg2[%c0_688, %c5_689, %c208_690] : memref<1x16x256xf32, #tpu.memory_space<vmem>>, vector<1x1x8xf32>
    %509 = vector.shape_cast %508 : vector<1x1x8xf32> to vector<1x8xf32>
    %c0_691 = arith.constant 0 : index
    %c6_692 = arith.constant 6 : index
    %c208_693 = arith.constant 208 : index
    %510 = vector.load %arg2[%c0_691, %c6_692, %c208_693] : memref<1x16x256xf32, #tpu.memory_space<vmem>>, vector<1x1x8xf32>
    %511 = vector.shape_cast %510 : vector<1x1x8xf32> to vector<1x8xf32>
    %c0_694 = arith.constant 0 : index
    %c7_695 = arith.constant 7 : index
    %c208_696 = arith.constant 208 : index
    %512 = vector.load %arg2[%c0_694, %c7_695, %c208_696] : memref<1x16x256xf32, #tpu.memory_space<vmem>>, vector<1x1x8xf32>
    %513 = vector.shape_cast %512 : vector<1x1x8xf32> to vector<1x8xf32>
    %c0_697 = arith.constant 0 : index
    %c4_698 = arith.constant 4 : index
    %c216_699 = arith.constant 216 : index
    %514 = vector.load %arg2[%c0_697, %c4_698, %c216_699] : memref<1x16x256xf32, #tpu.memory_space<vmem>>, vector<1x1x8xf32>
    %515 = vector.shape_cast %514 : vector<1x1x8xf32> to vector<1x8xf32>
    %c0_700 = arith.constant 0 : index
    %c5_701 = arith.constant 5 : index
    %c216_702 = arith.constant 216 : index
    %516 = vector.load %arg2[%c0_700, %c5_701, %c216_702] : memref<1x16x256xf32, #tpu.memory_space<vmem>>, vector<1x1x8xf32>
    %517 = vector.shape_cast %516 : vector<1x1x8xf32> to vector<1x8xf32>
    %c0_703 = arith.constant 0 : index
    %c6_704 = arith.constant 6 : index
    %c216_705 = arith.constant 216 : index
    %518 = vector.load %arg2[%c0_703, %c6_704, %c216_705] : memref<1x16x256xf32, #tpu.memory_space<vmem>>, vector<1x1x8xf32>
    %519 = vector.shape_cast %518 : vector<1x1x8xf32> to vector<1x8xf32>
    %c0_706 = arith.constant 0 : index
    %c7_707 = arith.constant 7 : index
    %c216_708 = arith.constant 216 : index
    %520 = vector.load %arg2[%c0_706, %c7_707, %c216_708] : memref<1x16x256xf32, #tpu.memory_space<vmem>>, vector<1x1x8xf32>
    %521 = vector.shape_cast %520 : vector<1x1x8xf32> to vector<1x8xf32>
    %c0_709 = arith.constant 0 : index
    %c4_710 = arith.constant 4 : index
    %c224_711 = arith.constant 224 : index
    %522 = vector.load %arg2[%c0_709, %c4_710, %c224_711] : memref<1x16x256xf32, #tpu.memory_space<vmem>>, vector<1x1x8xf32>
    %523 = vector.shape_cast %522 : vector<1x1x8xf32> to vector<1x8xf32>
    %c0_712 = arith.constant 0 : index
    %c5_713 = arith.constant 5 : index
    %c224_714 = arith.constant 224 : index
    %524 = vector.load %arg2[%c0_712, %c5_713, %c224_714] : memref<1x16x256xf32, #tpu.memory_space<vmem>>, vector<1x1x8xf32>
    %525 = vector.shape_cast %524 : vector<1x1x8xf32> to vector<1x8xf32>
    %c0_715 = arith.constant 0 : index
    %c6_716 = arith.constant 6 : index
    %c224_717 = arith.constant 224 : index
    %526 = vector.load %arg2[%c0_715, %c6_716, %c224_717] : memref<1x16x256xf32, #tpu.memory_space<vmem>>, vector<1x1x8xf32>
    %527 = vector.shape_cast %526 : vector<1x1x8xf32> to vector<1x8xf32>
    %c0_718 = arith.constant 0 : index
    %c7_719 = arith.constant 7 : index
    %c224_720 = arith.constant 224 : index
    %528 = vector.load %arg2[%c0_718, %c7_719, %c224_720] : memref<1x16x256xf32, #tpu.memory_space<vmem>>, vector<1x1x8xf32>
    %529 = vector.shape_cast %528 : vector<1x1x8xf32> to vector<1x8xf32>
    %c0_721 = arith.constant 0 : index
    %c4_722 = arith.constant 4 : index
    %c232_723 = arith.constant 232 : index
    %530 = vector.load %arg2[%c0_721, %c4_722, %c232_723] : memref<1x16x256xf32, #tpu.memory_space<vmem>>, vector<1x1x8xf32>
    %531 = vector.shape_cast %530 : vector<1x1x8xf32> to vector<1x8xf32>
    %c0_724 = arith.constant 0 : index
    %c5_725 = arith.constant 5 : index
    %c232_726 = arith.constant 232 : index
    %532 = vector.load %arg2[%c0_724, %c5_725, %c232_726] : memref<1x16x256xf32, #tpu.memory_space<vmem>>, vector<1x1x8xf32>
    %533 = vector.shape_cast %532 : vector<1x1x8xf32> to vector<1x8xf32>
    %c0_727 = arith.constant 0 : index
    %c6_728 = arith.constant 6 : index
    %c232_729 = arith.constant 232 : index
    %534 = vector.load %arg2[%c0_727, %c6_728, %c232_729] : memref<1x16x256xf32, #tpu.memory_space<vmem>>, vector<1x1x8xf32>
    %535 = vector.shape_cast %534 : vector<1x1x8xf32> to vector<1x8xf32>
    %c0_730 = arith.constant 0 : index
    %c7_731 = arith.constant 7 : index
    %c232_732 = arith.constant 232 : index
    %536 = vector.load %arg2[%c0_730, %c7_731, %c232_732] : memref<1x16x256xf32, #tpu.memory_space<vmem>>, vector<1x1x8xf32>
    %537 = vector.shape_cast %536 : vector<1x1x8xf32> to vector<1x8xf32>
    %c0_733 = arith.constant 0 : index
    %c4_734 = arith.constant 4 : index
    %c240_735 = arith.constant 240 : index
    %538 = vector.load %arg2[%c0_733, %c4_734, %c240_735] : memref<1x16x256xf32, #tpu.memory_space<vmem>>, vector<1x1x8xf32>
    %539 = vector.shape_cast %538 : vector<1x1x8xf32> to vector<1x8xf32>
    %c0_736 = arith.constant 0 : index
    %c5_737 = arith.constant 5 : index
    %c240_738 = arith.constant 240 : index
    %540 = vector.load %arg2[%c0_736, %c5_737, %c240_738] : memref<1x16x256xf32, #tpu.memory_space<vmem>>, vector<1x1x8xf32>
    %541 = vector.shape_cast %540 : vector<1x1x8xf32> to vector<1x8xf32>
    %c0_739 = arith.constant 0 : index
    %c6_740 = arith.constant 6 : index
    %c240_741 = arith.constant 240 : index
    %542 = vector.load %arg2[%c0_739, %c6_740, %c240_741] : memref<1x16x256xf32, #tpu.memory_space<vmem>>, vector<1x1x8xf32>
    %543 = vector.shape_cast %542 : vector<1x1x8xf32> to vector<1x8xf32>
    %c0_742 = arith.constant 0 : index
    %c7_743 = arith.constant 7 : index
    %c240_744 = arith.constant 240 : index
    %544 = vector.load %arg2[%c0_742, %c7_743, %c240_744] : memref<1x16x256xf32, #tpu.memory_space<vmem>>, vector<1x1x8xf32>
    %545 = vector.shape_cast %544 : vector<1x1x8xf32> to vector<1x8xf32>
    %c0_745 = arith.constant 0 : index
    %c4_746 = arith.constant 4 : index
    %c248_747 = arith.constant 248 : index
    %546 = vector.load %arg2[%c0_745, %c4_746, %c248_747] : memref<1x16x256xf32, #tpu.memory_space<vmem>>, vector<1x1x8xf32>
    %547 = vector.shape_cast %546 : vector<1x1x8xf32> to vector<1x8xf32>
    %c0_748 = arith.constant 0 : index
    %c5_749 = arith.constant 5 : index
    %c248_750 = arith.constant 248 : index
    %548 = vector.load %arg2[%c0_748, %c5_749, %c248_750] : memref<1x16x256xf32, #tpu.memory_space<vmem>>, vector<1x1x8xf32>
    %549 = vector.shape_cast %548 : vector<1x1x8xf32> to vector<1x8xf32>
    %c0_751 = arith.constant 0 : index
    %c6_752 = arith.constant 6 : index
    %c248_753 = arith.constant 248 : index
    %550 = vector.load %arg2[%c0_751, %c6_752, %c248_753] : memref<1x16x256xf32, #tpu.memory_space<vmem>>, vector<1x1x8xf32>
    %551 = vector.shape_cast %550 : vector<1x1x8xf32> to vector<1x8xf32>
    %c0_754 = arith.constant 0 : index
    %c7_755 = arith.constant 7 : index
    %c248_756 = arith.constant 248 : index
    %552 = vector.load %arg2[%c0_754, %c7_755, %c248_756] : memref<1x16x256xf32, #tpu.memory_space<vmem>>, vector<1x1x8xf32>
    %553 = vector.shape_cast %552 : vector<1x1x8xf32> to vector<1x8xf32>
    %554 = tpu.concatenate %491, %493, %495, %497, %499, %501, %503, %505, %507, %509, %511, %513, %515, %517, %519, %521 in 1 : vector<1x8xf32>, vector<1x8xf32>, vector<1x8xf32>, vector<1x8xf32>, vector<1x8xf32>, vector<1x8xf32>, vector<1x8xf32>, vector<1x8xf32>, vector<1x8xf32>, vector<1x8xf32>, vector<1x8xf32>, vector<1x8xf32>, vector<1x8xf32>, vector<1x8xf32>, vector<1x8xf32>, vector<1x8xf32> -> vector<1x128xf32>
    %555 = tpu.concatenate %523, %525, %527, %529, %531, %533, %535, %537, %539, %541, %543, %545, %547, %549, %551, %553 in 1 : vector<1x8xf32>, vector<1x8xf32>, vector<1x8xf32>, vector<1x8xf32>, vector<1x8xf32>, vector<1x8xf32>, vector<1x8xf32>, vector<1x8xf32>, vector<1x8xf32>, vector<1x8xf32>, vector<1x8xf32>, vector<1x8xf32>, vector<1x8xf32>, vector<1x8xf32>, vector<1x8xf32>, vector<1x8xf32> -> vector<1x128xf32>
    %556 = tpu.concatenate %554, %555 in 1 : vector<1x128xf32>, vector<1x128xf32> -> vector<1x256xf32>
    %c0_757 = arith.constant 0 : index
    %c3_758 = arith.constant 3 : index
    %c1_759 = arith.constant 1 : index
    %c0_760 = arith.constant 0 : index
    %557 = vector.load %arg3[%c0_757, %c3_758, %c1_759, %c0_760] : memref<1x4x4x256xf32, #tpu.memory_space<vmem>>, vector<1x1x1x256xf32>
    %558 = vector.shape_cast %557 : vector<1x1x1x256xf32> to vector<1x256xf32>
    %559 = vector.shape_cast %556 : vector<1x256xf32> to vector<1x1x1x256xf32>
    tpu.vector_store %arg3[%c0_757, %c3_758, %c1_759, %c0_760], %559 {strides = array<i32>} : memref<1x4x4x256xf32, #tpu.memory_space<vmem>>, vector<1x1x1x256xf32>,
    %c0_761 = arith.constant 0 : index
    %c8_762 = arith.constant 8 : index
    %c0_763 = arith.constant 0 : index
    %560 = vector.load %arg2[%c0_761, %c8_762, %c0_763] : memref<1x16x256xf32, #tpu.memory_space<vmem>>, vector<1x1x8xf32>
    %561 = vector.shape_cast %560 : vector<1x1x8xf32> to vector<1x8xf32>
    %c0_764 = arith.constant 0 : index
    %c9 = arith.constant 9 : index
    %c0_765 = arith.constant 0 : index
    %562 = vector.load %arg2[%c0_764, %c9, %c0_765] : memref<1x16x256xf32, #tpu.memory_space<vmem>>, vector<1x1x8xf32>
    %563 = vector.shape_cast %562 : vector<1x1x8xf32> to vector<1x8xf32>
    %c0_766 = arith.constant 0 : index
    %c10 = arith.constant 10 : index
    %c0_767 = arith.constant 0 : index
    %564 = vector.load %arg2[%c0_766, %c10, %c0_767] : memref<1x16x256xf32, #tpu.memory_space<vmem>>, vector<1x1x8xf32>
    %565 = vector.shape_cast %564 : vector<1x1x8xf32> to vector<1x8xf32>
    %c0_768 = arith.constant 0 : index
    %c11 = arith.constant 11 : index
    %c0_769 = arith.constant 0 : index
    %566 = vector.load %arg2[%c0_768, %c11, %c0_769] : memref<1x16x256xf32, #tpu.memory_space<vmem>>, vector<1x1x8xf32>
    %567 = vector.shape_cast %566 : vector<1x1x8xf32> to vector<1x8xf32>
    %c0_770 = arith.constant 0 : index
    %c8_771 = arith.constant 8 : index
    %c8_772 = arith.constant 8 : index
    %568 = vector.load %arg2[%c0_770, %c8_771, %c8_772] : memref<1x16x256xf32, #tpu.memory_space<vmem>>, vector<1x1x8xf32>
    %569 = vector.shape_cast %568 : vector<1x1x8xf32> to vector<1x8xf32>
    %c0_773 = arith.constant 0 : index
    %c9_774 = arith.constant 9 : index
    %c8_775 = arith.constant 8 : index
    %570 = vector.load %arg2[%c0_773, %c9_774, %c8_775] : memref<1x16x256xf32, #tpu.memory_space<vmem>>, vector<1x1x8xf32>
    %571 = vector.shape_cast %570 : vector<1x1x8xf32> to vector<1x8xf32>
    %c0_776 = arith.constant 0 : index
    %c10_777 = arith.constant 10 : index
    %c8_778 = arith.constant 8 : index
    %572 = vector.load %arg2[%c0_776, %c10_777, %c8_778] : memref<1x16x256xf32, #tpu.memory_space<vmem>>, vector<1x1x8xf32>
    %573 = vector.shape_cast %572 : vector<1x1x8xf32> to vector<1x8xf32>
    %c0_779 = arith.constant 0 : index
    %c11_780 = arith.constant 11 : index
    %c8_781 = arith.constant 8 : index
    %574 = vector.load %arg2[%c0_779, %c11_780, %c8_781] : memref<1x16x256xf32, #tpu.memory_space<vmem>>, vector<1x1x8xf32>
    %575 = vector.shape_cast %574 : vector<1x1x8xf32> to vector<1x8xf32>
    %c0_782 = arith.constant 0 : index
    %c8_783 = arith.constant 8 : index
    %c16_784 = arith.constant 16 : index
    %576 = vector.load %arg2[%c0_782, %c8_783, %c16_784] : memref<1x16x256xf32, #tpu.memory_space<vmem>>, vector<1x1x8xf32>
    %577 = vector.shape_cast %576 : vector<1x1x8xf32> to vector<1x8xf32>
    %c0_785 = arith.constant 0 : index
    %c9_786 = arith.constant 9 : index
    %c16_787 = arith.constant 16 : index
    %578 = vector.load %arg2[%c0_785, %c9_786, %c16_787] : memref<1x16x256xf32, #tpu.memory_space<vmem>>, vector<1x1x8xf32>
    %579 = vector.shape_cast %578 : vector<1x1x8xf32> to vector<1x8xf32>
    %c0_788 = arith.constant 0 : index
    %c10_789 = arith.constant 10 : index
    %c16_790 = arith.constant 16 : index
    %580 = vector.load %arg2[%c0_788, %c10_789, %c16_790] : memref<1x16x256xf32, #tpu.memory_space<vmem>>, vector<1x1x8xf32>
    %581 = vector.shape_cast %580 : vector<1x1x8xf32> to vector<1x8xf32>
    %c0_791 = arith.constant 0 : index
    %c11_792 = arith.constant 11 : index
    %c16_793 = arith.constant 16 : index
    %582 = vector.load %arg2[%c0_791, %c11_792, %c16_793] : memref<1x16x256xf32, #tpu.memory_space<vmem>>, vector<1x1x8xf32>
    %583 = vector.shape_cast %582 : vector<1x1x8xf32> to vector<1x8xf32>
    %c0_794 = arith.constant 0 : index
    %c8_795 = arith.constant 8 : index
    %c24_796 = arith.constant 24 : index
    %584 = vector.load %arg2[%c0_794, %c8_795, %c24_796] : memref<1x16x256xf32, #tpu.memory_space<vmem>>, vector<1x1x8xf32>
    %585 = vector.shape_cast %584 : vector<1x1x8xf32> to vector<1x8xf32>
    %c0_797 = arith.constant 0 : index
    %c9_798 = arith.constant 9 : index
    %c24_799 = arith.constant 24 : index
    %586 = vector.load %arg2[%c0_797, %c9_798, %c24_799] : memref<1x16x256xf32, #tpu.memory_space<vmem>>, vector<1x1x8xf32>
    %587 = vector.shape_cast %586 : vector<1x1x8xf32> to vector<1x8xf32>
    %c0_800 = arith.constant 0 : index
    %c10_801 = arith.constant 10 : index
    %c24_802 = arith.constant 24 : index
    %588 = vector.load %arg2[%c0_800, %c10_801, %c24_802] : memref<1x16x256xf32, #tpu.memory_space<vmem>>, vector<1x1x8xf32>
    %589 = vector.shape_cast %588 : vector<1x1x8xf32> to vector<1x8xf32>
    %c0_803 = arith.constant 0 : index
    %c11_804 = arith.constant 11 : index
    %c24_805 = arith.constant 24 : index
    %590 = vector.load %arg2[%c0_803, %c11_804, %c24_805] : memref<1x16x256xf32, #tpu.memory_space<vmem>>, vector<1x1x8xf32>
    %591 = vector.shape_cast %590 : vector<1x1x8xf32> to vector<1x8xf32>
    %c0_806 = arith.constant 0 : index
    %c8_807 = arith.constant 8 : index
    %c32_808 = arith.constant 32 : index
    %592 = vector.load %arg2[%c0_806, %c8_807, %c32_808] : memref<1x16x256xf32, #tpu.memory_space<vmem>>, vector<1x1x8xf32>
    %593 = vector.shape_cast %592 : vector<1x1x8xf32> to vector<1x8xf32>
    %c0_809 = arith.constant 0 : index
    %c9_810 = arith.constant 9 : index
    %c32_811 = arith.constant 32 : index
    %594 = vector.load %arg2[%c0_809, %c9_810, %c32_811] : memref<1x16x256xf32, #tpu.memory_space<vmem>>, vector<1x1x8xf32>
    %595 = vector.shape_cast %594 : vector<1x1x8xf32> to vector<1x8xf32>
    %c0_812 = arith.constant 0 : index
    %c10_813 = arith.constant 10 : index
    %c32_814 = arith.constant 32 : index
    %596 = vector.load %arg2[%c0_812, %c10_813, %c32_814] : memref<1x16x256xf32, #tpu.memory_space<vmem>>, vector<1x1x8xf32>
    %597 = vector.shape_cast %596 : vector<1x1x8xf32> to vector<1x8xf32>
    %c0_815 = arith.constant 0 : index
    %c11_816 = arith.constant 11 : index
    %c32_817 = arith.constant 32 : index
    %598 = vector.load %arg2[%c0_815, %c11_816, %c32_817] : memref<1x16x256xf32, #tpu.memory_space<vmem>>, vector<1x1x8xf32>
    %599 = vector.shape_cast %598 : vector<1x1x8xf32> to vector<1x8xf32>
    %c0_818 = arith.constant 0 : index
    %c8_819 = arith.constant 8 : index
    %c40_820 = arith.constant 40 : index
    %600 = vector.load %arg2[%c0_818, %c8_819, %c40_820] : memref<1x16x256xf32, #tpu.memory_space<vmem>>, vector<1x1x8xf32>
    %601 = vector.shape_cast %600 : vector<1x1x8xf32> to vector<1x8xf32>
    %c0_821 = arith.constant 0 : index
    %c9_822 = arith.constant 9 : index
    %c40_823 = arith.constant 40 : index
    %602 = vector.load %arg2[%c0_821, %c9_822, %c40_823] : memref<1x16x256xf32, #tpu.memory_space<vmem>>, vector<1x1x8xf32>
    %603 = vector.shape_cast %602 : vector<1x1x8xf32> to vector<1x8xf32>
    %c0_824 = arith.constant 0 : index
    %c10_825 = arith.constant 10 : index
    %c40_826 = arith.constant 40 : index
    %604 = vector.load %arg2[%c0_824, %c10_825, %c40_826] : memref<1x16x256xf32, #tpu.memory_space<vmem>>, vector<1x1x8xf32>
    %605 = vector.shape_cast %604 : vector<1x1x8xf32> to vector<1x8xf32>
    %c0_827 = arith.constant 0 : index
    %c11_828 = arith.constant 11 : index
    %c40_829 = arith.constant 40 : index
    %606 = vector.load %arg2[%c0_827, %c11_828, %c40_829] : memref<1x16x256xf32, #tpu.memory_space<vmem>>, vector<1x1x8xf32>
    %607 = vector.shape_cast %606 : vector<1x1x8xf32> to vector<1x8xf32>
    %c0_830 = arith.constant 0 : index
    %c8_831 = arith.constant 8 : index
    %c48_832 = arith.constant 48 : index
    %608 = vector.load %arg2[%c0_830, %c8_831, %c48_832] : memref<1x16x256xf32, #tpu.memory_space<vmem>>, vector<1x1x8xf32>
    %609 = vector.shape_cast %608 : vector<1x1x8xf32> to vector<1x8xf32>
    %c0_833 = arith.constant 0 : index
    %c9_834 = arith.constant 9 : index
    %c48_835 = arith.constant 48 : index
    %610 = vector.load %arg2[%c0_833, %c9_834, %c48_835] : memref<1x16x256xf32, #tpu.memory_space<vmem>>, vector<1x1x8xf32>
    %611 = vector.shape_cast %610 : vector<1x1x8xf32> to vector<1x8xf32>
    %c0_836 = arith.constant 0 : index
    %c10_837 = arith.constant 10 : index
    %c48_838 = arith.constant 48 : index
    %612 = vector.load %arg2[%c0_836, %c10_837, %c48_838] : memref<1x16x256xf32, #tpu.memory_space<vmem>>, vector<1x1x8xf32>
    %613 = vector.shape_cast %612 : vector<1x1x8xf32> to vector<1x8xf32>
    %c0_839 = arith.constant 0 : index
    %c11_840 = arith.constant 11 : index
    %c48_841 = arith.constant 48 : index
    %614 = vector.load %arg2[%c0_839, %c11_840, %c48_841] : memref<1x16x256xf32, #tpu.memory_space<vmem>>, vector<1x1x8xf32>
    %615 = vector.shape_cast %614 : vector<1x1x8xf32> to vector<1x8xf32>
    %c0_842 = arith.constant 0 : index
    %c8_843 = arith.constant 8 : index
    %c56_844 = arith.constant 56 : index
    %616 = vector.load %arg2[%c0_842, %c8_843, %c56_844] : memref<1x16x256xf32, #tpu.memory_space<vmem>>, vector<1x1x8xf32>
    %617 = vector.shape_cast %616 : vector<1x1x8xf32> to vector<1x8xf32>
    %c0_845 = arith.constant 0 : index
    %c9_846 = arith.constant 9 : index
    %c56_847 = arith.constant 56 : index
    %618 = vector.load %arg2[%c0_845, %c9_846, %c56_847] : memref<1x16x256xf32, #tpu.memory_space<vmem>>, vector<1x1x8xf32>
    %619 = vector.shape_cast %618 : vector<1x1x8xf32> to vector<1x8xf32>
    %c0_848 = arith.constant 0 : index
    %c10_849 = arith.constant 10 : index
    %c56_850 = arith.constant 56 : index
    %620 = vector.load %arg2[%c0_848, %c10_849, %c56_850] : memref<1x16x256xf32, #tpu.memory_space<vmem>>, vector<1x1x8xf32>
    %621 = vector.shape_cast %620 : vector<1x1x8xf32> to vector<1x8xf32>
    %c0_851 = arith.constant 0 : index
    %c11_852 = arith.constant 11 : index
    %c56_853 = arith.constant 56 : index
    %622 = vector.load %arg2[%c0_851, %c11_852, %c56_853] : memref<1x16x256xf32, #tpu.memory_space<vmem>>, vector<1x1x8xf32>
    %623 = vector.shape_cast %622 : vector<1x1x8xf32> to vector<1x8xf32>
    %624 = tpu.concatenate %561, %563, %565, %567, %569, %571, %573, %575, %577, %579, %581, %583, %585, %587, %589, %591 in 1 : vector<1x8xf32>, vector<1x8xf32>, vector<1x8xf32>, vector<1x8xf32>, vector<1x8xf32>, vector<1x8xf32>, vector<1x8xf32>, vector<1x8xf32>, vector<1x8xf32>, vector<1x8xf32>, vector<1x8xf32>, vector<1x8xf32>, vector<1x8xf32>, vector<1x8xf32>, vector<1x8xf32>, vector<1x8xf32> -> vector<1x128xf32>
    %625 = tpu.concatenate %593, %595, %597, %599, %601, %603, %605, %607, %609, %611, %613, %615, %617, %619, %621, %623 in 1 : vector<1x8xf32>, vector<1x8xf32>, vector<1x8xf32>, vector<1x8xf32>, vector<1x8xf32>, vector<1x8xf32>, vector<1x8xf32>, vector<1x8xf32>, vector<1x8xf32>, vector<1x8xf32>, vector<1x8xf32>, vector<1x8xf32>, vector<1x8xf32>, vector<1x8xf32>, vector<1x8xf32>, vector<1x8xf32> -> vector<1x128xf32>
    %626 = tpu.concatenate %624, %625 in 1 : vector<1x128xf32>, vector<1x128xf32> -> vector<1x256xf32>
    %c0_854 = arith.constant 0 : index
    %c0_855 = arith.constant 0 : index
    %c2_856 = arith.constant 2 : index
    %c0_857 = arith.constant 0 : index
    %627 = vector.load %arg3[%c0_854, %c0_855, %c2_856, %c0_857] : memref<1x4x4x256xf32, #tpu.memory_space<vmem>>, vector<1x1x1x256xf32>
    %628 = vector.shape_cast %627 : vector<1x1x1x256xf32> to vector<1x256xf32>
    %629 = vector.shape_cast %626 : vector<1x256xf32> to vector<1x1x1x256xf32>
    tpu.vector_store %arg3[%c0_854, %c0_855, %c2_856, %c0_857], %629 {strides = array<i32>} : memref<1x4x4x256xf32, #tpu.memory_space<vmem>>, vector<1x1x1x256xf32>,
    %c0_858 = arith.constant 0 : index
    %c8_859 = arith.constant 8 : index
    %c64_860 = arith.constant 64 : index
    %630 = vector.load %arg2[%c0_858, %c8_859, %c64_860] : memref<1x16x256xf32, #tpu.memory_space<vmem>>, vector<1x1x8xf32>
    %631 = vector.shape_cast %630 : vector<1x1x8xf32> to vector<1x8xf32>
    %c0_861 = arith.constant 0 : index
    %c9_862 = arith.constant 9 : index
    %c64_863 = arith.constant 64 : index
    %632 = vector.load %arg2[%c0_861, %c9_862, %c64_863] : memref<1x16x256xf32, #tpu.memory_space<vmem>>, vector<1x1x8xf32>
    %633 = vector.shape_cast %632 : vector<1x1x8xf32> to vector<1x8xf32>
    %c0_864 = arith.constant 0 : index
    %c10_865 = arith.constant 10 : index
    %c64_866 = arith.constant 64 : index
    %634 = vector.load %arg2[%c0_864, %c10_865, %c64_866] : memref<1x16x256xf32, #tpu.memory_space<vmem>>, vector<1x1x8xf32>
    %635 = vector.shape_cast %634 : vector<1x1x8xf32> to vector<1x8xf32>
    %c0_867 = arith.constant 0 : index
    %c11_868 = arith.constant 11 : index
    %c64_869 = arith.constant 64 : index
    %636 = vector.load %arg2[%c0_867, %c11_868, %c64_869] : memref<1x16x256xf32, #tpu.memory_space<vmem>>, vector<1x1x8xf32>
    %637 = vector.shape_cast %636 : vector<1x1x8xf32> to vector<1x8xf32>
    %c0_870 = arith.constant 0 : index
    %c8_871 = arith.constant 8 : index
    %c72_872 = arith.constant 72 : index
    %638 = vector.load %arg2[%c0_870, %c8_871, %c72_872] : memref<1x16x256xf32, #tpu.memory_space<vmem>>, vector<1x1x8xf32>
    %639 = vector.shape_cast %638 : vector<1x1x8xf32> to vector<1x8xf32>
    %c0_873 = arith.constant 0 : index
    %c9_874 = arith.constant 9 : index
    %c72_875 = arith.constant 72 : index
    %640 = vector.load %arg2[%c0_873, %c9_874, %c72_875] : memref<1x16x256xf32, #tpu.memory_space<vmem>>, vector<1x1x8xf32>
    %641 = vector.shape_cast %640 : vector<1x1x8xf32> to vector<1x8xf32>
    %c0_876 = arith.constant 0 : index
    %c10_877 = arith.constant 10 : index
    %c72_878 = arith.constant 72 : index
    %642 = vector.load %arg2[%c0_876, %c10_877, %c72_878] : memref<1x16x256xf32, #tpu.memory_space<vmem>>, vector<1x1x8xf32>
    %643 = vector.shape_cast %642 : vector<1x1x8xf32> to vector<1x8xf32>
    %c0_879 = arith.constant 0 : index
    %c11_880 = arith.constant 11 : index
    %c72_881 = arith.constant 72 : index
    %644 = vector.load %arg2[%c0_879, %c11_880, %c72_881] : memref<1x16x256xf32, #tpu.memory_space<vmem>>, vector<1x1x8xf32>
    %645 = vector.shape_cast %644 : vector<1x1x8xf32> to vector<1x8xf32>
    %c0_882 = arith.constant 0 : index
    %c8_883 = arith.constant 8 : index
    %c80_884 = arith.constant 80 : index
    %646 = vector.load %arg2[%c0_882, %c8_883, %c80_884] : memref<1x16x256xf32, #tpu.memory_space<vmem>>, vector<1x1x8xf32>
    %647 = vector.shape_cast %646 : vector<1x1x8xf32> to vector<1x8xf32>
    %c0_885 = arith.constant 0 : index
    %c9_886 = arith.constant 9 : index
    %c80_887 = arith.constant 80 : index
    %648 = vector.load %arg2[%c0_885, %c9_886, %c80_887] : memref<1x16x256xf32, #tpu.memory_space<vmem>>, vector<1x1x8xf32>
    %649 = vector.shape_cast %648 : vector<1x1x8xf32> to vector<1x8xf32>
    %c0_888 = arith.constant 0 : index
    %c10_889 = arith.constant 10 : index
    %c80_890 = arith.constant 80 : index
    %650 = vector.load %arg2[%c0_888, %c10_889, %c80_890] : memref<1x16x256xf32, #tpu.memory_space<vmem>>, vector<1x1x8xf32>
    %651 = vector.shape_cast %650 : vector<1x1x8xf32> to vector<1x8xf32>
    %c0_891 = arith.constant 0 : index
    %c11_892 = arith.constant 11 : index
    %c80_893 = arith.constant 80 : index
    %652 = vector.load %arg2[%c0_891, %c11_892, %c80_893] : memref<1x16x256xf32, #tpu.memory_space<vmem>>, vector<1x1x8xf32>
    %653 = vector.shape_cast %652 : vector<1x1x8xf32> to vector<1x8xf32>
    %c0_894 = arith.constant 0 : index
    %c8_895 = arith.constant 8 : index
    %c88_896 = arith.constant 88 : index
    %654 = vector.load %arg2[%c0_894, %c8_895, %c88_896] : memref<1x16x256xf32, #tpu.memory_space<vmem>>, vector<1x1x8xf32>
    %655 = vector.shape_cast %654 : vector<1x1x8xf32> to vector<1x8xf32>
    %c0_897 = arith.constant 0 : index
    %c9_898 = arith.constant 9 : index
    %c88_899 = arith.constant 88 : index
    %656 = vector.load %arg2[%c0_897, %c9_898, %c88_899] : memref<1x16x256xf32, #tpu.memory_space<vmem>>, vector<1x1x8xf32>
    %657 = vector.shape_cast %656 : vector<1x1x8xf32> to vector<1x8xf32>
    %c0_900 = arith.constant 0 : index
    %c10_901 = arith.constant 10 : index
    %c88_902 = arith.constant 88 : index
    %658 = vector.load %arg2[%c0_900, %c10_901, %c88_902] : memref<1x16x256xf32, #tpu.memory_space<vmem>>, vector<1x1x8xf32>
    %659 = vector.shape_cast %658 : vector<1x1x8xf32> to vector<1x8xf32>
    %c0_903 = arith.constant 0 : index
    %c11_904 = arith.constant 11 : index
    %c88_905 = arith.constant 88 : index
    %660 = vector.load %arg2[%c0_903, %c11_904, %c88_905] : memref<1x16x256xf32, #tpu.memory_space<vmem>>, vector<1x1x8xf32>
    %661 = vector.shape_cast %660 : vector<1x1x8xf32> to vector<1x8xf32>
    %c0_906 = arith.constant 0 : index
    %c8_907 = arith.constant 8 : index
    %c96_908 = arith.constant 96 : index
    %662 = vector.load %arg2[%c0_906, %c8_907, %c96_908] : memref<1x16x256xf32, #tpu.memory_space<vmem>>, vector<1x1x8xf32>
    %663 = vector.shape_cast %662 : vector<1x1x8xf32> to vector<1x8xf32>
    %c0_909 = arith.constant 0 : index
    %c9_910 = arith.constant 9 : index
    %c96_911 = arith.constant 96 : index
    %664 = vector.load %arg2[%c0_909, %c9_910, %c96_911] : memref<1x16x256xf32, #tpu.memory_space<vmem>>, vector<1x1x8xf32>
    %665 = vector.shape_cast %664 : vector<1x1x8xf32> to vector<1x8xf32>
    %c0_912 = arith.constant 0 : index
    %c10_913 = arith.constant 10 : index
    %c96_914 = arith.constant 96 : index
    %666 = vector.load %arg2[%c0_912, %c10_913, %c96_914] : memref<1x16x256xf32, #tpu.memory_space<vmem>>, vector<1x1x8xf32>
    %667 = vector.shape_cast %666 : vector<1x1x8xf32> to vector<1x8xf32>
    %c0_915 = arith.constant 0 : index
    %c11_916 = arith.constant 11 : index
    %c96_917 = arith.constant 96 : index
    %668 = vector.load %arg2[%c0_915, %c11_916, %c96_917] : memref<1x16x256xf32, #tpu.memory_space<vmem>>, vector<1x1x8xf32>
    %669 = vector.shape_cast %668 : vector<1x1x8xf32> to vector<1x8xf32>
    %c0_918 = arith.constant 0 : index
    %c8_919 = arith.constant 8 : index
    %c104_920 = arith.constant 104 : index
    %670 = vector.load %arg2[%c0_918, %c8_919, %c104_920] : memref<1x16x256xf32, #tpu.memory_space<vmem>>, vector<1x1x8xf32>
    %671 = vector.shape_cast %670 : vector<1x1x8xf32> to vector<1x8xf32>
    %c0_921 = arith.constant 0 : index
    %c9_922 = arith.constant 9 : index
    %c104_923 = arith.constant 104 : index
    %672 = vector.load %arg2[%c0_921, %c9_922, %c104_923] : memref<1x16x256xf32, #tpu.memory_space<vmem>>, vector<1x1x8xf32>
    %673 = vector.shape_cast %672 : vector<1x1x8xf32> to vector<1x8xf32>
    %c0_924 = arith.constant 0 : index
    %c10_925 = arith.constant 10 : index
    %c104_926 = arith.constant 104 : index
    %674 = vector.load %arg2[%c0_924, %c10_925, %c104_926] : memref<1x16x256xf32, #tpu.memory_space<vmem>>, vector<1x1x8xf32>
    %675 = vector.shape_cast %674 : vector<1x1x8xf32> to vector<1x8xf32>
    %c0_927 = arith.constant 0 : index
    %c11_928 = arith.constant 11 : index
    %c104_929 = arith.constant 104 : index
    %676 = vector.load %arg2[%c0_927, %c11_928, %c104_929] : memref<1x16x256xf32, #tpu.memory_space<vmem>>, vector<1x1x8xf32>
    %677 = vector.shape_cast %676 : vector<1x1x8xf32> to vector<1x8xf32>
    %c0_930 = arith.constant 0 : index
    %c8_931 = arith.constant 8 : index
    %c112_932 = arith.constant 112 : index
    %678 = vector.load %arg2[%c0_930, %c8_931, %c112_932] : memref<1x16x256xf32, #tpu.memory_space<vmem>>, vector<1x1x8xf32>
    %679 = vector.shape_cast %678 : vector<1x1x8xf32> to vector<1x8xf32>
    %c0_933 = arith.constant 0 : index
    %c9_934 = arith.constant 9 : index
    %c112_935 = arith.constant 112 : index
    %680 = vector.load %arg2[%c0_933, %c9_934, %c112_935] : memref<1x16x256xf32, #tpu.memory_space<vmem>>, vector<1x1x8xf32>
    %681 = vector.shape_cast %680 : vector<1x1x8xf32> to vector<1x8xf32>
    %c0_936 = arith.constant 0 : index
    %c10_937 = arith.constant 10 : index
    %c112_938 = arith.constant 112 : index
    %682 = vector.load %arg2[%c0_936, %c10_937, %c112_938] : memref<1x16x256xf32, #tpu.memory_space<vmem>>, vector<1x1x8xf32>
    %683 = vector.shape_cast %682 : vector<1x1x8xf32> to vector<1x8xf32>
    %c0_939 = arith.constant 0 : index
    %c11_940 = arith.constant 11 : index
    %c112_941 = arith.constant 112 : index
    %684 = vector.load %arg2[%c0_939, %c11_940, %c112_941] : memref<1x16x256xf32, #tpu.memory_space<vmem>>, vector<1x1x8xf32>
    %685 = vector.shape_cast %684 : vector<1x1x8xf32> to vector<1x8xf32>
    %c0_942 = arith.constant 0 : index
    %c8_943 = arith.constant 8 : index
    %c120_944 = arith.constant 120 : index
    %686 = vector.load %arg2[%c0_942, %c8_943, %c120_944] : memref<1x16x256xf32, #tpu.memory_space<vmem>>, vector<1x1x8xf32>
    %687 = vector.shape_cast %686 : vector<1x1x8xf32> to vector<1x8xf32>
    %c0_945 = arith.constant 0 : index
    %c9_946 = arith.constant 9 : index
    %c120_947 = arith.constant 120 : index
    %688 = vector.load %arg2[%c0_945, %c9_946, %c120_947] : memref<1x16x256xf32, #tpu.memory_space<vmem>>, vector<1x1x8xf32>
    %689 = vector.shape_cast %688 : vector<1x1x8xf32> to vector<1x8xf32>
    %c0_948 = arith.constant 0 : index
    %c10_949 = arith.constant 10 : index
    %c120_950 = arith.constant 120 : index
    %690 = vector.load %arg2[%c0_948, %c10_949, %c120_950] : memref<1x16x256xf32, #tpu.memory_space<vmem>>, vector<1x1x8xf32>
    %691 = vector.shape_cast %690 : vector<1x1x8xf32> to vector<1x8xf32>
    %c0_951 = arith.constant 0 : index
    %c11_952 = arith.constant 11 : index
    %c120_953 = arith.constant 120 : index
    %692 = vector.load %arg2[%c0_951, %c11_952, %c120_953] : memref<1x16x256xf32, #tpu.memory_space<vmem>>, vector<1x1x8xf32>
    %693 = vector.shape_cast %692 : vector<1x1x8xf32> to vector<1x8xf32>
    %694 = tpu.concatenate %631, %633, %635, %637, %639, %641, %643, %645, %647, %649, %651, %653, %655, %657, %659, %661 in 1 : vector<1x8xf32>, vector<1x8xf32>, vector<1x8xf32>, vector<1x8xf32>, vector<1x8xf32>, vector<1x8xf32>, vector<1x8xf32>, vector<1x8xf32>, vector<1x8xf32>, vector<1x8xf32>, vector<1x8xf32>, vector<1x8xf32>, vector<1x8xf32>, vector<1x8xf32>, vector<1x8xf32>, vector<1x8xf32> -> vector<1x128xf32>
    %695 = tpu.concatenate %663, %665, %667, %669, %671, %673, %675, %677, %679, %681, %683, %685, %687, %689, %691, %693 in 1 : vector<1x8xf32>, vector<1x8xf32>, vector<1x8xf32>, vector<1x8xf32>, vector<1x8xf32>, vector<1x8xf32>, vector<1x8xf32>, vector<1x8xf32>, vector<1x8xf32>, vector<1x8xf32>, vector<1x8xf32>, vector<1x8xf32>, vector<1x8xf32>, vector<1x8xf32>, vector<1x8xf32>, vector<1x8xf32> -> vector<1x128xf32>
    %696 = tpu.concatenate %694, %695 in 1 : vector<1x128xf32>, vector<1x128xf32> -> vector<1x256xf32>
    %c0_954 = arith.constant 0 : index
    %c1_955 = arith.constant 1 : index
    %c2_956 = arith.constant 2 : index
    %c0_957 = arith.constant 0 : index
    %697 = vector.load %arg3[%c0_954, %c1_955, %c2_956, %c0_957] : memref<1x4x4x256xf32, #tpu.memory_space<vmem>>, vector<1x1x1x256xf32>
    %698 = vector.shape_cast %697 : vector<1x1x1x256xf32> to vector<1x256xf32>
    %699 = vector.shape_cast %696 : vector<1x256xf32> to vector<1x1x1x256xf32>
    tpu.vector_store %arg3[%c0_954, %c1_955, %c2_956, %c0_957], %699 {strides = array<i32>} : memref<1x4x4x256xf32, #tpu.memory_space<vmem>>, vector<1x1x1x256xf32>,
    %c0_958 = arith.constant 0 : index
    %c8_959 = arith.constant 8 : index
    %c128_960 = arith.constant 128 : index
    %700 = vector.load %arg2[%c0_958, %c8_959, %c128_960] : memref<1x16x256xf32, #tpu.memory_space<vmem>>, vector<1x1x8xf32>
    %701 = vector.shape_cast %700 : vector<1x1x8xf32> to vector<1x8xf32>
    %c0_961 = arith.constant 0 : index
    %c9_962 = arith.constant 9 : index
    %c128_963 = arith.constant 128 : index
    %702 = vector.load %arg2[%c0_961, %c9_962, %c128_963] : memref<1x16x256xf32, #tpu.memory_space<vmem>>, vector<1x1x8xf32>
    %703 = vector.shape_cast %702 : vector<1x1x8xf32> to vector<1x8xf32>
    %c0_964 = arith.constant 0 : index
    %c10_965 = arith.constant 10 : index
    %c128_966 = arith.constant 128 : index
    %704 = vector.load %arg2[%c0_964, %c10_965, %c128_966] : memref<1x16x256xf32, #tpu.memory_space<vmem>>, vector<1x1x8xf32>
    %705 = vector.shape_cast %704 : vector<1x1x8xf32> to vector<1x8xf32>
    %c0_967 = arith.constant 0 : index
    %c11_968 = arith.constant 11 : index
    %c128_969 = arith.constant 128 : index
    %706 = vector.load %arg2[%c0_967, %c11_968, %c128_969] : memref<1x16x256xf32, #tpu.memory_space<vmem>>, vector<1x1x8xf32>
    %707 = vector.shape_cast %706 : vector<1x1x8xf32> to vector<1x8xf32>
    %c0_970 = arith.constant 0 : index
    %c8_971 = arith.constant 8 : index
    %c136_972 = arith.constant 136 : index
    %708 = vector.load %arg2[%c0_970, %c8_971, %c136_972] : memref<1x16x256xf32, #tpu.memory_space<vmem>>, vector<1x1x8xf32>
    %709 = vector.shape_cast %708 : vector<1x1x8xf32> to vector<1x8xf32>
    %c0_973 = arith.constant 0 : index
    %c9_974 = arith.constant 9 : index
    %c136_975 = arith.constant 136 : index
    %710 = vector.load %arg2[%c0_973, %c9_974, %c136_975] : memref<1x16x256xf32, #tpu.memory_space<vmem>>, vector<1x1x8xf32>
    %711 = vector.shape_cast %710 : vector<1x1x8xf32> to vector<1x8xf32>
    %c0_976 = arith.constant 0 : index
    %c10_977 = arith.constant 10 : index
    %c136_978 = arith.constant 136 : index
    %712 = vector.load %arg2[%c0_976, %c10_977, %c136_978] : memref<1x16x256xf32, #tpu.memory_space<vmem>>, vector<1x1x8xf32>
    %713 = vector.shape_cast %712 : vector<1x1x8xf32> to vector<1x8xf32>
    %c0_979 = arith.constant 0 : index
    %c11_980 = arith.constant 11 : index
    %c136_981 = arith.constant 136 : index
    %714 = vector.load %arg2[%c0_979, %c11_980, %c136_981] : memref<1x16x256xf32, #tpu.memory_space<vmem>>, vector<1x1x8xf32>
    %715 = vector.shape_cast %714 : vector<1x1x8xf32> to vector<1x8xf32>
    %c0_982 = arith.constant 0 : index
    %c8_983 = arith.constant 8 : index
    %c144_984 = arith.constant 144 : index
    %716 = vector.load %arg2[%c0_982, %c8_983, %c144_984] : memref<1x16x256xf32, #tpu.memory_space<vmem>>, vector<1x1x8xf32>
    %717 = vector.shape_cast %716 : vector<1x1x8xf32> to vector<1x8xf32>
    %c0_985 = arith.constant 0 : index
    %c9_986 = arith.constant 9 : index
    %c144_987 = arith.constant 144 : index
    %718 = vector.load %arg2[%c0_985, %c9_986, %c144_987] : memref<1x16x256xf32, #tpu.memory_space<vmem>>, vector<1x1x8xf32>
    %719 = vector.shape_cast %718 : vector<1x1x8xf32> to vector<1x8xf32>
    %c0_988 = arith.constant 0 : index
    %c10_989 = arith.constant 10 : index
    %c144_990 = arith.constant 144 : index
    %720 = vector.load %arg2[%c0_988, %c10_989, %c144_990] : memref<1x16x256xf32, #tpu.memory_space<vmem>>, vector<1x1x8xf32>
    %721 = vector.shape_cast %720 : vector<1x1x8xf32> to vector<1x8xf32>
    %c0_991 = arith.constant 0 : index
    %c11_992 = arith.constant 11 : index
    %c144_993 = arith.constant 144 : index
    %722 = vector.load %arg2[%c0_991, %c11_992, %c144_993] : memref<1x16x256xf32, #tpu.memory_space<vmem>>, vector<1x1x8xf32>
    %723 = vector.shape_cast %722 : vector<1x1x8xf32> to vector<1x8xf32>
    %c0_994 = arith.constant 0 : index
    %c8_995 = arith.constant 8 : index
    %c152_996 = arith.constant 152 : index
    %724 = vector.load %arg2[%c0_994, %c8_995, %c152_996] : memref<1x16x256xf32, #tpu.memory_space<vmem>>, vector<1x1x8xf32>
    %725 = vector.shape_cast %724 : vector<1x1x8xf32> to vector<1x8xf32>
    %c0_997 = arith.constant 0 : index
    %c9_998 = arith.constant 9 : index
    %c152_999 = arith.constant 152 : index
    %726 = vector.load %arg2[%c0_997, %c9_998, %c152_999] : memref<1x16x256xf32, #tpu.memory_space<vmem>>, vector<1x1x8xf32>
    %727 = vector.shape_cast %726 : vector<1x1x8xf32> to vector<1x8xf32>
    %c0_1000 = arith.constant 0 : index
    %c10_1001 = arith.constant 10 : index
    %c152_1002 = arith.constant 152 : index
    %728 = vector.load %arg2[%c0_1000, %c10_1001, %c152_1002] : memref<1x16x256xf32, #tpu.memory_space<vmem>>, vector<1x1x8xf32>
    %729 = vector.shape_cast %728 : vector<1x1x8xf32> to vector<1x8xf32>
    %c0_1003 = arith.constant 0 : index
    %c11_1004 = arith.constant 11 : index
    %c152_1005 = arith.constant 152 : index
    %730 = vector.load %arg2[%c0_1003, %c11_1004, %c152_1005] : memref<1x16x256xf32, #tpu.memory_space<vmem>>, vector<1x1x8xf32>
    %731 = vector.shape_cast %730 : vector<1x1x8xf32> to vector<1x8xf32>
    %c0_1006 = arith.constant 0 : index
    %c8_1007 = arith.constant 8 : index
    %c160_1008 = arith.constant 160 : index
    %732 = vector.load %arg2[%c0_1006, %c8_1007, %c160_1008] : memref<1x16x256xf32, #tpu.memory_space<vmem>>, vector<1x1x8xf32>
    %733 = vector.shape_cast %732 : vector<1x1x8xf32> to vector<1x8xf32>
    %c0_1009 = arith.constant 0 : index
    %c9_1010 = arith.constant 9 : index
    %c160_1011 = arith.constant 160 : index
    %734 = vector.load %arg2[%c0_1009, %c9_1010, %c160_1011] : memref<1x16x256xf32, #tpu.memory_space<vmem>>, vector<1x1x8xf32>
    %735 = vector.shape_cast %734 : vector<1x1x8xf32> to vector<1x8xf32>
    %c0_1012 = arith.constant 0 : index
    %c10_1013 = arith.constant 10 : index
    %c160_1014 = arith.constant 160 : index
    %736 = vector.load %arg2[%c0_1012, %c10_1013, %c160_1014] : memref<1x16x256xf32, #tpu.memory_space<vmem>>, vector<1x1x8xf32>
    %737 = vector.shape_cast %736 : vector<1x1x8xf32> to vector<1x8xf32>
    %c0_1015 = arith.constant 0 : index
    %c11_1016 = arith.constant 11 : index
    %c160_1017 = arith.constant 160 : index
    %738 = vector.load %arg2[%c0_1015, %c11_1016, %c160_1017] : memref<1x16x256xf32, #tpu.memory_space<vmem>>, vector<1x1x8xf32>
    %739 = vector.shape_cast %738 : vector<1x1x8xf32> to vector<1x8xf32>
    %c0_1018 = arith.constant 0 : index
    %c8_1019 = arith.constant 8 : index
    %c168_1020 = arith.constant 168 : index
    %740 = vector.load %arg2[%c0_1018, %c8_1019, %c168_1020] : memref<1x16x256xf32, #tpu.memory_space<vmem>>, vector<1x1x8xf32>
    %741 = vector.shape_cast %740 : vector<1x1x8xf32> to vector<1x8xf32>
    %c0_1021 = arith.constant 0 : index
    %c9_1022 = arith.constant 9 : index
    %c168_1023 = arith.constant 168 : index
    %742 = vector.load %arg2[%c0_1021, %c9_1022, %c168_1023] : memref<1x16x256xf32, #tpu.memory_space<vmem>>, vector<1x1x8xf32>
    %743 = vector.shape_cast %742 : vector<1x1x8xf32> to vector<1x8xf32>
    %c0_1024 = arith.constant 0 : index
    %c10_1025 = arith.constant 10 : index
    %c168_1026 = arith.constant 168 : index
    %744 = vector.load %arg2[%c0_1024, %c10_1025, %c168_1026] : memref<1x16x256xf32, #tpu.memory_space<vmem>>, vector<1x1x8xf32>
    %745 = vector.shape_cast %744 : vector<1x1x8xf32> to vector<1x8xf32>
    %c0_1027 = arith.constant 0 : index
    %c11_1028 = arith.constant 11 : index
    %c168_1029 = arith.constant 168 : index
    %746 = vector.load %arg2[%c0_1027, %c11_1028, %c168_1029] : memref<1x16x256xf32, #tpu.memory_space<vmem>>, vector<1x1x8xf32>
    %747 = vector.shape_cast %746 : vector<1x1x8xf32> to vector<1x8xf32>
    %c0_1030 = arith.constant 0 : index
    %c8_1031 = arith.constant 8 : index
    %c176_1032 = arith.constant 176 : index
    %748 = vector.load %arg2[%c0_1030, %c8_1031, %c176_1032] : memref<1x16x256xf32, #tpu.memory_space<vmem>>, vector<1x1x8xf32>
    %749 = vector.shape_cast %748 : vector<1x1x8xf32> to vector<1x8xf32>
    %c0_1033 = arith.constant 0 : index
    %c9_1034 = arith.constant 9 : index
    %c176_1035 = arith.constant 176 : index
    %750 = vector.load %arg2[%c0_1033, %c9_1034, %c176_1035] : memref<1x16x256xf32, #tpu.memory_space<vmem>>, vector<1x1x8xf32>
    %751 = vector.shape_cast %750 : vector<1x1x8xf32> to vector<1x8xf32>
    %c0_1036 = arith.constant 0 : index
    %c10_1037 = arith.constant 10 : index
    %c176_1038 = arith.constant 176 : index
    %752 = vector.load %arg2[%c0_1036, %c10_1037, %c176_1038] : memref<1x16x256xf32, #tpu.memory_space<vmem>>, vector<1x1x8xf32>
    %753 = vector.shape_cast %752 : vector<1x1x8xf32> to vector<1x8xf32>
    %c0_1039 = arith.constant 0 : index
    %c11_1040 = arith.constant 11 : index
    %c176_1041 = arith.constant 176 : index
    %754 = vector.load %arg2[%c0_1039, %c11_1040, %c176_1041] : memref<1x16x256xf32, #tpu.memory_space<vmem>>, vector<1x1x8xf32>
    %755 = vector.shape_cast %754 : vector<1x1x8xf32> to vector<1x8xf32>
    %c0_1042 = arith.constant 0 : index
    %c8_1043 = arith.constant 8 : index
    %c184_1044 = arith.constant 184 : index
    %756 = vector.load %arg2[%c0_1042, %c8_1043, %c184_1044] : memref<1x16x256xf32, #tpu.memory_space<vmem>>, vector<1x1x8xf32>
    %757 = vector.shape_cast %756 : vector<1x1x8xf32> to vector<1x8xf32>
    %c0_1045 = arith.constant 0 : index
    %c9_1046 = arith.constant 9 : index
    %c184_1047 = arith.constant 184 : index
    %758 = vector.load %arg2[%c0_1045, %c9_1046, %c184_1047] : memref<1x16x256xf32, #tpu.memory_space<vmem>>, vector<1x1x8xf32>
    %759 = vector.shape_cast %758 : vector<1x1x8xf32> to vector<1x8xf32>
    %c0_1048 = arith.constant 0 : index
    %c10_1049 = arith.constant 10 : index
    %c184_1050 = arith.constant 184 : index
    %760 = vector.load %arg2[%c0_1048, %c10_1049, %c184_1050] : memref<1x16x256xf32, #tpu.memory_space<vmem>>, vector<1x1x8xf32>
    %761 = vector.shape_cast %760 : vector<1x1x8xf32> to vector<1x8xf32>
    %c0_1051 = arith.constant 0 : index
    %c11_1052 = arith.constant 11 : index
    %c184_1053 = arith.constant 184 : index
    %762 = vector.load %arg2[%c0_1051, %c11_1052, %c184_1053] : memref<1x16x256xf32, #tpu.memory_space<vmem>>, vector<1x1x8xf32>
    %763 = vector.shape_cast %762 : vector<1x1x8xf32> to vector<1x8xf32>
    %764 = tpu.concatenate %701, %703, %705, %707, %709, %711, %713, %715, %717, %719, %721, %723, %725, %727, %729, %731 in 1 : vector<1x8xf32>, vector<1x8xf32>, vector<1x8xf32>, vector<1x8xf32>, vector<1x8xf32>, vector<1x8xf32>, vector<1x8xf32>, vector<1x8xf32>, vector<1x8xf32>, vector<1x8xf32>, vector<1x8xf32>, vector<1x8xf32>, vector<1x8xf32>, vector<1x8xf32>, vector<1x8xf32>, vector<1x8xf32> -> vector<1x128xf32>
    %765 = tpu.concatenate %733, %735, %737, %739, %741, %743, %745, %747, %749, %751, %753, %755, %757, %759, %761, %763 in 1 : vector<1x8xf32>, vector<1x8xf32>, vector<1x8xf32>, vector<1x8xf32>, vector<1x8xf32>, vector<1x8xf32>, vector<1x8xf32>, vector<1x8xf32>, vector<1x8xf32>, vector<1x8xf32>, vector<1x8xf32>, vector<1x8xf32>, vector<1x8xf32>, vector<1x8xf32>, vector<1x8xf32>, vector<1x8xf32> -> vector<1x128xf32>
    %766 = tpu.concatenate %764, %765 in 1 : vector<1x128xf32>, vector<1x128xf32> -> vector<1x256xf32>
    %c0_1054 = arith.constant 0 : index
    %c2_1055 = arith.constant 2 : index
    %c2_1056 = arith.constant 2 : index
    %c0_1057 = arith.constant 0 : index
    %767 = vector.load %arg3[%c0_1054, %c2_1055, %c2_1056, %c0_1057] : memref<1x4x4x256xf32, #tpu.memory_space<vmem>>, vector<1x1x1x256xf32>
    %768 = vector.shape_cast %767 : vector<1x1x1x256xf32> to vector<1x256xf32>
    %769 = vector.shape_cast %766 : vector<1x256xf32> to vector<1x1x1x256xf32>
    tpu.vector_store %arg3[%c0_1054, %c2_1055, %c2_1056, %c0_1057], %769 {strides = array<i32>} : memref<1x4x4x256xf32, #tpu.memory_space<vmem>>, vector<1x1x1x256xf32>,
    %c0_1058 = arith.constant 0 : index
    %c8_1059 = arith.constant 8 : index
    %c192_1060 = arith.constant 192 : index
    %770 = vector.load %arg2[%c0_1058, %c8_1059, %c192_1060] : memref<1x16x256xf32, #tpu.memory_space<vmem>>, vector<1x1x8xf32>
    %771 = vector.shape_cast %770 : vector<1x1x8xf32> to vector<1x8xf32>
    %c0_1061 = arith.constant 0 : index
    %c9_1062 = arith.constant 9 : index
    %c192_1063 = arith.constant 192 : index
    %772 = vector.load %arg2[%c0_1061, %c9_1062, %c192_1063] : memref<1x16x256xf32, #tpu.memory_space<vmem>>, vector<1x1x8xf32>
    %773 = vector.shape_cast %772 : vector<1x1x8xf32> to vector<1x8xf32>
    %c0_1064 = arith.constant 0 : index
    %c10_1065 = arith.constant 10 : index
    %c192_1066 = arith.constant 192 : index
    %774 = vector.load %arg2[%c0_1064, %c10_1065, %c192_1066] : memref<1x16x256xf32, #tpu.memory_space<vmem>>, vector<1x1x8xf32>
    %775 = vector.shape_cast %774 : vector<1x1x8xf32> to vector<1x8xf32>
    %c0_1067 = arith.constant 0 : index
    %c11_1068 = arith.constant 11 : index
    %c192_1069 = arith.constant 192 : index
    %776 = vector.load %arg2[%c0_1067, %c11_1068, %c192_1069] : memref<1x16x256xf32, #tpu.memory_space<vmem>>, vector<1x1x8xf32>
    %777 = vector.shape_cast %776 : vector<1x1x8xf32> to vector<1x8xf32>
    %c0_1070 = arith.constant 0 : index
    %c8_1071 = arith.constant 8 : index
    %c200_1072 = arith.constant 200 : index
    %778 = vector.load %arg2[%c0_1070, %c8_1071, %c200_1072] : memref<1x16x256xf32, #tpu.memory_space<vmem>>, vector<1x1x8xf32>
    %779 = vector.shape_cast %778 : vector<1x1x8xf32> to vector<1x8xf32>
    %c0_1073 = arith.constant 0 : index
    %c9_1074 = arith.constant 9 : index
    %c200_1075 = arith.constant 200 : index
    %780 = vector.load %arg2[%c0_1073, %c9_1074, %c200_1075] : memref<1x16x256xf32, #tpu.memory_space<vmem>>, vector<1x1x8xf32>
    %781 = vector.shape_cast %780 : vector<1x1x8xf32> to vector<1x8xf32>
    %c0_1076 = arith.constant 0 : index
    %c10_1077 = arith.constant 10 : index
    %c200_1078 = arith.constant 200 : index
    %782 = vector.load %arg2[%c0_1076, %c10_1077, %c200_1078] : memref<1x16x256xf32, #tpu.memory_space<vmem>>, vector<1x1x8xf32>
    %783 = vector.shape_cast %782 : vector<1x1x8xf32> to vector<1x8xf32>
    %c0_1079 = arith.constant 0 : index
    %c11_1080 = arith.constant 11 : index
    %c200_1081 = arith.constant 200 : index
    %784 = vector.load %arg2[%c0_1079, %c11_1080, %c200_1081] : memref<1x16x256xf32, #tpu.memory_space<vmem>>, vector<1x1x8xf32>
    %785 = vector.shape_cast %784 : vector<1x1x8xf32> to vector<1x8xf32>
    %c0_1082 = arith.constant 0 : index
    %c8_1083 = arith.constant 8 : index
    %c208_1084 = arith.constant 208 : index
    %786 = vector.load %arg2[%c0_1082, %c8_1083, %c208_1084] : memref<1x16x256xf32, #tpu.memory_space<vmem>>, vector<1x1x8xf32>
    %787 = vector.shape_cast %786 : vector<1x1x8xf32> to vector<1x8xf32>
    %c0_1085 = arith.constant 0 : index
    %c9_1086 = arith.constant 9 : index
    %c208_1087 = arith.constant 208 : index
    %788 = vector.load %arg2[%c0_1085, %c9_1086, %c208_1087] : memref<1x16x256xf32, #tpu.memory_space<vmem>>, vector<1x1x8xf32>
    %789 = vector.shape_cast %788 : vector<1x1x8xf32> to vector<1x8xf32>
    %c0_1088 = arith.constant 0 : index
    %c10_1089 = arith.constant 10 : index
    %c208_1090 = arith.constant 208 : index
    %790 = vector.load %arg2[%c0_1088, %c10_1089, %c208_1090] : memref<1x16x256xf32, #tpu.memory_space<vmem>>, vector<1x1x8xf32>
    %791 = vector.shape_cast %790 : vector<1x1x8xf32> to vector<1x8xf32>
    %c0_1091 = arith.constant 0 : index
    %c11_1092 = arith.constant 11 : index
    %c208_1093 = arith.constant 208 : index
    %792 = vector.load %arg2[%c0_1091, %c11_1092, %c208_1093] : memref<1x16x256xf32, #tpu.memory_space<vmem>>, vector<1x1x8xf32>
    %793 = vector.shape_cast %792 : vector<1x1x8xf32> to vector<1x8xf32>
    %c0_1094 = arith.constant 0 : index
    %c8_1095 = arith.constant 8 : index
    %c216_1096 = arith.constant 216 : index
    %794 = vector.load %arg2[%c0_1094, %c8_1095, %c216_1096] : memref<1x16x256xf32, #tpu.memory_space<vmem>>, vector<1x1x8xf32>
    %795 = vector.shape_cast %794 : vector<1x1x8xf32> to vector<1x8xf32>
    %c0_1097 = arith.constant 0 : index
    %c9_1098 = arith.constant 9 : index
    %c216_1099 = arith.constant 216 : index
    %796 = vector.load %arg2[%c0_1097, %c9_1098, %c216_1099] : memref<1x16x256xf32, #tpu.memory_space<vmem>>, vector<1x1x8xf32>
    %797 = vector.shape_cast %796 : vector<1x1x8xf32> to vector<1x8xf32>
    %c0_1100 = arith.constant 0 : index
    %c10_1101 = arith.constant 10 : index
    %c216_1102 = arith.constant 216 : index
    %798 = vector.load %arg2[%c0_1100, %c10_1101, %c216_1102] : memref<1x16x256xf32, #tpu.memory_space<vmem>>, vector<1x1x8xf32>
    %799 = vector.shape_cast %798 : vector<1x1x8xf32> to vector<1x8xf32>
    %c0_1103 = arith.constant 0 : index
    %c11_1104 = arith.constant 11 : index
    %c216_1105 = arith.constant 216 : index
    %800 = vector.load %arg2[%c0_1103, %c11_1104, %c216_1105] : memref<1x16x256xf32, #tpu.memory_space<vmem>>, vector<1x1x8xf32>
    %801 = vector.shape_cast %800 : vector<1x1x8xf32> to vector<1x8xf32>
    %c0_1106 = arith.constant 0 : index
    %c8_1107 = arith.constant 8 : index
    %c224_1108 = arith.constant 224 : index
    %802 = vector.load %arg2[%c0_1106, %c8_1107, %c224_1108] : memref<1x16x256xf32, #tpu.memory_space<vmem>>, vector<1x1x8xf32>
    %803 = vector.shape_cast %802 : vector<1x1x8xf32> to vector<1x8xf32>
    %c0_1109 = arith.constant 0 : index
    %c9_1110 = arith.constant 9 : index
    %c224_1111 = arith.constant 224 : index
    %804 = vector.load %arg2[%c0_1109, %c9_1110, %c224_1111] : memref<1x16x256xf32, #tpu.memory_space<vmem>>, vector<1x1x8xf32>
    %805 = vector.shape_cast %804 : vector<1x1x8xf32> to vector<1x8xf32>
    %c0_1112 = arith.constant 0 : index
    %c10_1113 = arith.constant 10 : index
    %c224_1114 = arith.constant 224 : index
    %806 = vector.load %arg2[%c0_1112, %c10_1113, %c224_1114] : memref<1x16x256xf32, #tpu.memory_space<vmem>>, vector<1x1x8xf32>
    %807 = vector.shape_cast %806 : vector<1x1x8xf32> to vector<1x8xf32>
    %c0_1115 = arith.constant 0 : index
    %c11_1116 = arith.constant 11 : index
    %c224_1117 = arith.constant 224 : index
    %808 = vector.load %arg2[%c0_1115, %c11_1116, %c224_1117] : memref<1x16x256xf32, #tpu.memory_space<vmem>>, vector<1x1x8xf32>
    %809 = vector.shape_cast %808 : vector<1x1x8xf32> to vector<1x8xf32>
    %c0_1118 = arith.constant 0 : index
    %c8_1119 = arith.constant 8 : index
    %c232_1120 = arith.constant 232 : index
    %810 = vector.load %arg2[%c0_1118, %c8_1119, %c232_1120] : memref<1x16x256xf32, #tpu.memory_space<vmem>>, vector<1x1x8xf32>
    %811 = vector.shape_cast %810 : vector<1x1x8xf32> to vector<1x8xf32>
    %c0_1121 = arith.constant 0 : index
    %c9_1122 = arith.constant 9 : index
    %c232_1123 = arith.constant 232 : index
    %812 = vector.load %arg2[%c0_1121, %c9_1122, %c232_1123] : memref<1x16x256xf32, #tpu.memory_space<vmem>>, vector<1x1x8xf32>
    %813 = vector.shape_cast %812 : vector<1x1x8xf32> to vector<1x8xf32>
    %c0_1124 = arith.constant 0 : index
    %c10_1125 = arith.constant 10 : index
    %c232_1126 = arith.constant 232 : index
    %814 = vector.load %arg2[%c0_1124, %c10_1125, %c232_1126] : memref<1x16x256xf32, #tpu.memory_space<vmem>>, vector<1x1x8xf32>
    %815 = vector.shape_cast %814 : vector<1x1x8xf32> to vector<1x8xf32>
    %c0_1127 = arith.constant 0 : index
    %c11_1128 = arith.constant 11 : index
    %c232_1129 = arith.constant 232 : index
    %816 = vector.load %arg2[%c0_1127, %c11_1128, %c232_1129] : memref<1x16x256xf32, #tpu.memory_space<vmem>>, vector<1x1x8xf32>
    %817 = vector.shape_cast %816 : vector<1x1x8xf32> to vector<1x8xf32>
    %c0_1130 = arith.constant 0 : index
    %c8_1131 = arith.constant 8 : index
    %c240_1132 = arith.constant 240 : index
    %818 = vector.load %arg2[%c0_1130, %c8_1131, %c240_1132] : memref<1x16x256xf32, #tpu.memory_space<vmem>>, vector<1x1x8xf32>
    %819 = vector.shape_cast %818 : vector<1x1x8xf32> to vector<1x8xf32>
    %c0_1133 = arith.constant 0 : index
    %c9_1134 = arith.constant 9 : index
    %c240_1135 = arith.constant 240 : index
    %820 = vector.load %arg2[%c0_1133, %c9_1134, %c240_1135] : memref<1x16x256xf32, #tpu.memory_space<vmem>>, vector<1x1x8xf32>
    %821 = vector.shape_cast %820 : vector<1x1x8xf32> to vector<1x8xf32>
    %c0_1136 = arith.constant 0 : index
    %c10_1137 = arith.constant 10 : index
    %c240_1138 = arith.constant 240 : index
    %822 = vector.load %arg2[%c0_1136, %c10_1137, %c240_1138] : memref<1x16x256xf32, #tpu.memory_space<vmem>>, vector<1x1x8xf32>
    %823 = vector.shape_cast %822 : vector<1x1x8xf32> to vector<1x8xf32>
    %c0_1139 = arith.constant 0 : index
    %c11_1140 = arith.constant 11 : index
    %c240_1141 = arith.constant 240 : index
    %824 = vector.load %arg2[%c0_1139, %c11_1140, %c240_1141] : memref<1x16x256xf32, #tpu.memory_space<vmem>>, vector<1x1x8xf32>
    %825 = vector.shape_cast %824 : vector<1x1x8xf32> to vector<1x8xf32>
    %c0_1142 = arith.constant 0 : index
    %c8_1143 = arith.constant 8 : index
    %c248_1144 = arith.constant 248 : index
    %826 = vector.load %arg2[%c0_1142, %c8_1143, %c248_1144] : memref<1x16x256xf32, #tpu.memory_space<vmem>>, vector<1x1x8xf32>
    %827 = vector.shape_cast %826 : vector<1x1x8xf32> to vector<1x8xf32>
    %c0_1145 = arith.constant 0 : index
    %c9_1146 = arith.constant 9 : index
    %c248_1147 = arith.constant 248 : index
    %828 = vector.load %arg2[%c0_1145, %c9_1146, %c248_1147] : memref<1x16x256xf32, #tpu.memory_space<vmem>>, vector<1x1x8xf32>
    %829 = vector.shape_cast %828 : vector<1x1x8xf32> to vector<1x8xf32>
    %c0_1148 = arith.constant 0 : index
    %c10_1149 = arith.constant 10 : index
    %c248_1150 = arith.constant 248 : index
    %830 = vector.load %arg2[%c0_1148, %c10_1149, %c248_1150] : memref<1x16x256xf32, #tpu.memory_space<vmem>>, vector<1x1x8xf32>
    %831 = vector.shape_cast %830 : vector<1x1x8xf32> to vector<1x8xf32>
    %c0_1151 = arith.constant 0 : index
    %c11_1152 = arith.constant 11 : index
    %c248_1153 = arith.constant 248 : index
    %832 = vector.load %arg2[%c0_1151, %c11_1152, %c248_1153] : memref<1x16x256xf32, #tpu.memory_space<vmem>>, vector<1x1x8xf32>
    %833 = vector.shape_cast %832 : vector<1x1x8xf32> to vector<1x8xf32>
    %834 = tpu.concatenate %771, %773, %775, %777, %779, %781, %783, %785, %787, %789, %791, %793, %795, %797, %799, %801 in 1 : vector<1x8xf32>, vector<1x8xf32>, vector<1x8xf32>, vector<1x8xf32>, vector<1x8xf32>, vector<1x8xf32>, vector<1x8xf32>, vector<1x8xf32>, vector<1x8xf32>, vector<1x8xf32>, vector<1x8xf32>, vector<1x8xf32>, vector<1x8xf32>, vector<1x8xf32>, vector<1x8xf32>, vector<1x8xf32> -> vector<1x128xf32>
    %835 = tpu.concatenate %803, %805, %807, %809, %811, %813, %815, %817, %819, %821, %823, %825, %827, %829, %831, %833 in 1 : vector<1x8xf32>, vector<1x8xf32>, vector<1x8xf32>, vector<1x8xf32>, vector<1x8xf32>, vector<1x8xf32>, vector<1x8xf32>, vector<1x8xf32>, vector<1x8xf32>, vector<1x8xf32>, vector<1x8xf32>, vector<1x8xf32>, vector<1x8xf32>, vector<1x8xf32>, vector<1x8xf32>, vector<1x8xf32> -> vector<1x128xf32>
    %836 = tpu.concatenate %834, %835 in 1 : vector<1x128xf32>, vector<1x128xf32> -> vector<1x256xf32>
    %c0_1154 = arith.constant 0 : index
    %c3_1155 = arith.constant 3 : index
    %c2_1156 = arith.constant 2 : index
    %c0_1157 = arith.constant 0 : index
    %837 = vector.load %arg3[%c0_1154, %c3_1155, %c2_1156, %c0_1157] : memref<1x4x4x256xf32, #tpu.memory_space<vmem>>, vector<1x1x1x256xf32>
    %838 = vector.shape_cast %837 : vector<1x1x1x256xf32> to vector<1x256xf32>
    %839 = vector.shape_cast %836 : vector<1x256xf32> to vector<1x1x1x256xf32>
    tpu.vector_store %arg3[%c0_1154, %c3_1155, %c2_1156, %c0_1157], %839 {strides = array<i32>} : memref<1x4x4x256xf32, #tpu.memory_space<vmem>>, vector<1x1x1x256xf32>,
    %c0_1158 = arith.constant 0 : index
    %c12 = arith.constant 12 : index
    %c0_1159 = arith.constant 0 : index
    %840 = vector.load %arg2[%c0_1158, %c12, %c0_1159] : memref<1x16x256xf32, #tpu.memory_space<vmem>>, vector<1x1x8xf32>
    %841 = vector.shape_cast %840 : vector<1x1x8xf32> to vector<1x8xf32>
    %c0_1160 = arith.constant 0 : index
    %c13 = arith.constant 13 : index
    %c0_1161 = arith.constant 0 : index
    %842 = vector.load %arg2[%c0_1160, %c13, %c0_1161] : memref<1x16x256xf32, #tpu.memory_space<vmem>>, vector<1x1x8xf32>
    %843 = vector.shape_cast %842 : vector<1x1x8xf32> to vector<1x8xf32>
    %c0_1162 = arith.constant 0 : index
    %c14 = arith.constant 14 : index
    %c0_1163 = arith.constant 0 : index
    %844 = vector.load %arg2[%c0_1162, %c14, %c0_1163] : memref<1x16x256xf32, #tpu.memory_space<vmem>>, vector<1x1x8xf32>
    %845 = vector.shape_cast %844 : vector<1x1x8xf32> to vector<1x8xf32>
    %c0_1164 = arith.constant 0 : index
    %c15 = arith.constant 15 : index
    %c0_1165 = arith.constant 0 : index
    %846 = vector.load %arg2[%c0_1164, %c15, %c0_1165] : memref<1x16x256xf32, #tpu.memory_space<vmem>>, vector<1x1x8xf32>
    %847 = vector.shape_cast %846 : vector<1x1x8xf32> to vector<1x8xf32>
    %c0_1166 = arith.constant 0 : index
    %c12_1167 = arith.constant 12 : index
    %c8_1168 = arith.constant 8 : index
    %848 = vector.load %arg2[%c0_1166, %c12_1167, %c8_1168] : memref<1x16x256xf32, #tpu.memory_space<vmem>>, vector<1x1x8xf32>
    %849 = vector.shape_cast %848 : vector<1x1x8xf32> to vector<1x8xf32>
    %c0_1169 = arith.constant 0 : index
    %c13_1170 = arith.constant 13 : index
    %c8_1171 = arith.constant 8 : index
    %850 = vector.load %arg2[%c0_1169, %c13_1170, %c8_1171] : memref<1x16x256xf32, #tpu.memory_space<vmem>>, vector<1x1x8xf32>
    %851 = vector.shape_cast %850 : vector<1x1x8xf32> to vector<1x8xf32>
    %c0_1172 = arith.constant 0 : index
    %c14_1173 = arith.constant 14 : index
    %c8_1174 = arith.constant 8 : index
    %852 = vector.load %arg2[%c0_1172, %c14_1173, %c8_1174] : memref<1x16x256xf32, #tpu.memory_space<vmem>>, vector<1x1x8xf32>
    %853 = vector.shape_cast %852 : vector<1x1x8xf32> to vector<1x8xf32>
    %c0_1175 = arith.constant 0 : index
    %c15_1176 = arith.constant 15 : index
    %c8_1177 = arith.constant 8 : index
    %854 = vector.load %arg2[%c0_1175, %c15_1176, %c8_1177] : memref<1x16x256xf32, #tpu.memory_space<vmem>>, vector<1x1x8xf32>
    %855 = vector.shape_cast %854 : vector<1x1x8xf32> to vector<1x8xf32>
    %c0_1178 = arith.constant 0 : index
    %c12_1179 = arith.constant 12 : index
    %c16_1180 = arith.constant 16 : index
    %856 = vector.load %arg2[%c0_1178, %c12_1179, %c16_1180] : memref<1x16x256xf32, #tpu.memory_space<vmem>>, vector<1x1x8xf32>
    %857 = vector.shape_cast %856 : vector<1x1x8xf32> to vector<1x8xf32>
    %c0_1181 = arith.constant 0 : index
    %c13_1182 = arith.constant 13 : index
    %c16_1183 = arith.constant 16 : index
    %858 = vector.load %arg2[%c0_1181, %c13_1182, %c16_1183] : memref<1x16x256xf32, #tpu.memory_space<vmem>>, vector<1x1x8xf32>
    %859 = vector.shape_cast %858 : vector<1x1x8xf32> to vector<1x8xf32>
    %c0_1184 = arith.constant 0 : index
    %c14_1185 = arith.constant 14 : index
    %c16_1186 = arith.constant 16 : index
    %860 = vector.load %arg2[%c0_1184, %c14_1185, %c16_1186] : memref<1x16x256xf32, #tpu.memory_space<vmem>>, vector<1x1x8xf32>
    %861 = vector.shape_cast %860 : vector<1x1x8xf32> to vector<1x8xf32>
    %c0_1187 = arith.constant 0 : index
    %c15_1188 = arith.constant 15 : index
    %c16_1189 = arith.constant 16 : index
    %862 = vector.load %arg2[%c0_1187, %c15_1188, %c16_1189] : memref<1x16x256xf32, #tpu.memory_space<vmem>>, vector<1x1x8xf32>
    %863 = vector.shape_cast %862 : vector<1x1x8xf32> to vector<1x8xf32>
    %c0_1190 = arith.constant 0 : index
    %c12_1191 = arith.constant 12 : index
    %c24_1192 = arith.constant 24 : index
    %864 = vector.load %arg2[%c0_1190, %c12_1191, %c24_1192] : memref<1x16x256xf32, #tpu.memory_space<vmem>>, vector<1x1x8xf32>
    %865 = vector.shape_cast %864 : vector<1x1x8xf32> to vector<1x8xf32>
    %c0_1193 = arith.constant 0 : index
    %c13_1194 = arith.constant 13 : index
    %c24_1195 = arith.constant 24 : index
    %866 = vector.load %arg2[%c0_1193, %c13_1194, %c24_1195] : memref<1x16x256xf32, #tpu.memory_space<vmem>>, vector<1x1x8xf32>
    %867 = vector.shape_cast %866 : vector<1x1x8xf32> to vector<1x8xf32>
    %c0_1196 = arith.constant 0 : index
    %c14_1197 = arith.constant 14 : index
    %c24_1198 = arith.constant 24 : index
    %868 = vector.load %arg2[%c0_1196, %c14_1197, %c24_1198] : memref<1x16x256xf32, #tpu.memory_space<vmem>>, vector<1x1x8xf32>
    %869 = vector.shape_cast %868 : vector<1x1x8xf32> to vector<1x8xf32>
    %c0_1199 = arith.constant 0 : index
    %c15_1200 = arith.constant 15 : index
    %c24_1201 = arith.constant 24 : index
    %870 = vector.load %arg2[%c0_1199, %c15_1200, %c24_1201] : memref<1x16x256xf32, #tpu.memory_space<vmem>>, vector<1x1x8xf32>
    %871 = vector.shape_cast %870 : vector<1x1x8xf32> to vector<1x8xf32>
    %c0_1202 = arith.constant 0 : index
    %c12_1203 = arith.constant 12 : index
    %c32_1204 = arith.constant 32 : index
    %872 = vector.load %arg2[%c0_1202, %c12_1203, %c32_1204] : memref<1x16x256xf32, #tpu.memory_space<vmem>>, vector<1x1x8xf32>
    %873 = vector.shape_cast %872 : vector<1x1x8xf32> to vector<1x8xf32>
    %c0_1205 = arith.constant 0 : index
    %c13_1206 = arith.constant 13 : index
    %c32_1207 = arith.constant 32 : index
    %874 = vector.load %arg2[%c0_1205, %c13_1206, %c32_1207] : memref<1x16x256xf32, #tpu.memory_space<vmem>>, vector<1x1x8xf32>
    %875 = vector.shape_cast %874 : vector<1x1x8xf32> to vector<1x8xf32>
    %c0_1208 = arith.constant 0 : index
    %c14_1209 = arith.constant 14 : index
    %c32_1210 = arith.constant 32 : index
    %876 = vector.load %arg2[%c0_1208, %c14_1209, %c32_1210] : memref<1x16x256xf32, #tpu.memory_space<vmem>>, vector<1x1x8xf32>
    %877 = vector.shape_cast %876 : vector<1x1x8xf32> to vector<1x8xf32>
    %c0_1211 = arith.constant 0 : index
    %c15_1212 = arith.constant 15 : index
    %c32_1213 = arith.constant 32 : index
    %878 = vector.load %arg2[%c0_1211, %c15_1212, %c32_1213] : memref<1x16x256xf32, #tpu.memory_space<vmem>>, vector<1x1x8xf32>
    %879 = vector.shape_cast %878 : vector<1x1x8xf32> to vector<1x8xf32>
    %c0_1214 = arith.constant 0 : index
    %c12_1215 = arith.constant 12 : index
    %c40_1216 = arith.constant 40 : index
    %880 = vector.load %arg2[%c0_1214, %c12_1215, %c40_1216] : memref<1x16x256xf32, #tpu.memory_space<vmem>>, vector<1x1x8xf32>
    %881 = vector.shape_cast %880 : vector<1x1x8xf32> to vector<1x8xf32>
    %c0_1217 = arith.constant 0 : index
    %c13_1218 = arith.constant 13 : index
    %c40_1219 = arith.constant 40 : index
    %882 = vector.load %arg2[%c0_1217, %c13_1218, %c40_1219] : memref<1x16x256xf32, #tpu.memory_space<vmem>>, vector<1x1x8xf32>
    %883 = vector.shape_cast %882 : vector<1x1x8xf32> to vector<1x8xf32>
    %c0_1220 = arith.constant 0 : index
    %c14_1221 = arith.constant 14 : index
    %c40_1222 = arith.constant 40 : index
    %884 = vector.load %arg2[%c0_1220, %c14_1221, %c40_1222] : memref<1x16x256xf32, #tpu.memory_space<vmem>>, vector<1x1x8xf32>
    %885 = vector.shape_cast %884 : vector<1x1x8xf32> to vector<1x8xf32>
    %c0_1223 = arith.constant 0 : index
    %c15_1224 = arith.constant 15 : index
    %c40_1225 = arith.constant 40 : index
    %886 = vector.load %arg2[%c0_1223, %c15_1224, %c40_1225] : memref<1x16x256xf32, #tpu.memory_space<vmem>>, vector<1x1x8xf32>
    %887 = vector.shape_cast %886 : vector<1x1x8xf32> to vector<1x8xf32>
    %c0_1226 = arith.constant 0 : index
    %c12_1227 = arith.constant 12 : index
    %c48_1228 = arith.constant 48 : index
    %888 = vector.load %arg2[%c0_1226, %c12_1227, %c48_1228] : memref<1x16x256xf32, #tpu.memory_space<vmem>>, vector<1x1x8xf32>
    %889 = vector.shape_cast %888 : vector<1x1x8xf32> to vector<1x8xf32>
    %c0_1229 = arith.constant 0 : index
    %c13_1230 = arith.constant 13 : index
    %c48_1231 = arith.constant 48 : index
    %890 = vector.load %arg2[%c0_1229, %c13_1230, %c48_1231] : memref<1x16x256xf32, #tpu.memory_space<vmem>>, vector<1x1x8xf32>
    %891 = vector.shape_cast %890 : vector<1x1x8xf32> to vector<1x8xf32>
    %c0_1232 = arith.constant 0 : index
    %c14_1233 = arith.constant 14 : index
    %c48_1234 = arith.constant 48 : index
    %892 = vector.load %arg2[%c0_1232, %c14_1233, %c48_1234] : memref<1x16x256xf32, #tpu.memory_space<vmem>>, vector<1x1x8xf32>
    %893 = vector.shape_cast %892 : vector<1x1x8xf32> to vector<1x8xf32>
    %c0_1235 = arith.constant 0 : index
    %c15_1236 = arith.constant 15 : index
    %c48_1237 = arith.constant 48 : index
    %894 = vector.load %arg2[%c0_1235, %c15_1236, %c48_1237] : memref<1x16x256xf32, #tpu.memory_space<vmem>>, vector<1x1x8xf32>
    %895 = vector.shape_cast %894 : vector<1x1x8xf32> to vector<1x8xf32>
    %c0_1238 = arith.constant 0 : index
    %c12_1239 = arith.constant 12 : index
    %c56_1240 = arith.constant 56 : index
    %896 = vector.load %arg2[%c0_1238, %c12_1239, %c56_1240] : memref<1x16x256xf32, #tpu.memory_space<vmem>>, vector<1x1x8xf32>
    %897 = vector.shape_cast %896 : vector<1x1x8xf32> to vector<1x8xf32>
    %c0_1241 = arith.constant 0 : index
    %c13_1242 = arith.constant 13 : index
    %c56_1243 = arith.constant 56 : index
    %898 = vector.load %arg2[%c0_1241, %c13_1242, %c56_1243] : memref<1x16x256xf32, #tpu.memory_space<vmem>>, vector<1x1x8xf32>
    %899 = vector.shape_cast %898 : vector<1x1x8xf32> to vector<1x8xf32>
    %c0_1244 = arith.constant 0 : index
    %c14_1245 = arith.constant 14 : index
    %c56_1246 = arith.constant 56 : index
    %900 = vector.load %arg2[%c0_1244, %c14_1245, %c56_1246] : memref<1x16x256xf32, #tpu.memory_space<vmem>>, vector<1x1x8xf32>
    %901 = vector.shape_cast %900 : vector<1x1x8xf32> to vector<1x8xf32>
    %c0_1247 = arith.constant 0 : index
    %c15_1248 = arith.constant 15 : index
    %c56_1249 = arith.constant 56 : index
    %902 = vector.load %arg2[%c0_1247, %c15_1248, %c56_1249] : memref<1x16x256xf32, #tpu.memory_space<vmem>>, vector<1x1x8xf32>
    %903 = vector.shape_cast %902 : vector<1x1x8xf32> to vector<1x8xf32>
    %904 = tpu.concatenate %841, %843, %845, %847, %849, %851, %853, %855, %857, %859, %861, %863, %865, %867, %869, %871 in 1 : vector<1x8xf32>, vector<1x8xf32>, vector<1x8xf32>, vector<1x8xf32>, vector<1x8xf32>, vector<1x8xf32>, vector<1x8xf32>, vector<1x8xf32>, vector<1x8xf32>, vector<1x8xf32>, vector<1x8xf32>, vector<1x8xf32>, vector<1x8xf32>, vector<1x8xf32>, vector<1x8xf32>, vector<1x8xf32> -> vector<1x128xf32>
    %905 = tpu.concatenate %873, %875, %877, %879, %881, %883, %885, %887, %889, %891, %893, %895, %897, %899, %901, %903 in 1 : vector<1x8xf32>, vector<1x8xf32>, vector<1x8xf32>, vector<1x8xf32>, vector<1x8xf32>, vector<1x8xf32>, vector<1x8xf32>, vector<1x8xf32>, vector<1x8xf32>, vector<1x8xf32>, vector<1x8xf32>, vector<1x8xf32>, vector<1x8xf32>, vector<1x8xf32>, vector<1x8xf32>, vector<1x8xf32> -> vector<1x128xf32>
    %906 = tpu.concatenate %904, %905 in 1 : vector<1x128xf32>, vector<1x128xf32> -> vector<1x256xf32>
    %c0_1250 = arith.constant 0 : index
    %c0_1251 = arith.constant 0 : index
    %c3_1252 = arith.constant 3 : index
    %c0_1253 = arith.constant 0 : index
    %907 = vector.load %arg3[%c0_1250, %c0_1251, %c3_1252, %c0_1253] : memref<1x4x4x256xf32, #tpu.memory_space<vmem>>, vector<1x1x1x256xf32>
    %908 = vector.shape_cast %907 : vector<1x1x1x256xf32> to vector<1x256xf32>
    %909 = vector.shape_cast %906 : vector<1x256xf32> to vector<1x1x1x256xf32>
    tpu.vector_store %arg3[%c0_1250, %c0_1251, %c3_1252, %c0_1253], %909 {strides = array<i32>} : memref<1x4x4x256xf32, #tpu.memory_space<vmem>>, vector<1x1x1x256xf32>,
    %c0_1254 = arith.constant 0 : index
    %c12_1255 = arith.constant 12 : index
    %c64_1256 = arith.constant 64 : index
    %910 = vector.load %arg2[%c0_1254, %c12_1255, %c64_1256] : memref<1x16x256xf32, #tpu.memory_space<vmem>>, vector<1x1x8xf32>
    %911 = vector.shape_cast %910 : vector<1x1x8xf32> to vector<1x8xf32>
    %c0_1257 = arith.constant 0 : index
    %c13_1258 = arith.constant 13 : index
    %c64_1259 = arith.constant 64 : index
    %912 = vector.load %arg2[%c0_1257, %c13_1258, %c64_1259] : memref<1x16x256xf32, #tpu.memory_space<vmem>>, vector<1x1x8xf32>
    %913 = vector.shape_cast %912 : vector<1x1x8xf32> to vector<1x8xf32>
    %c0_1260 = arith.constant 0 : index
    %c14_1261 = arith.constant 14 : index
    %c64_1262 = arith.constant 64 : index
    %914 = vector.load %arg2[%c0_1260, %c14_1261, %c64_1262] : memref<1x16x256xf32, #tpu.memory_space<vmem>>, vector<1x1x8xf32>
    %915 = vector.shape_cast %914 : vector<1x1x8xf32> to vector<1x8xf32>
    %c0_1263 = arith.constant 0 : index
    %c15_1264 = arith.constant 15 : index
    %c64_1265 = arith.constant 64 : index
    %916 = vector.load %arg2[%c0_1263, %c15_1264, %c64_1265] : memref<1x16x256xf32, #tpu.memory_space<vmem>>, vector<1x1x8xf32>
    %917 = vector.shape_cast %916 : vector<1x1x8xf32> to vector<1x8xf32>
    %c0_1266 = arith.constant 0 : index
    %c12_1267 = arith.constant 12 : index
    %c72_1268 = arith.constant 72 : index
    %918 = vector.load %arg2[%c0_1266, %c12_1267, %c72_1268] : memref<1x16x256xf32, #tpu.memory_space<vmem>>, vector<1x1x8xf32>
    %919 = vector.shape_cast %918 : vector<1x1x8xf32> to vector<1x8xf32>
    %c0_1269 = arith.constant 0 : index
    %c13_1270 = arith.constant 13 : index
    %c72_1271 = arith.constant 72 : index
    %920 = vector.load %arg2[%c0_1269, %c13_1270, %c72_1271] : memref<1x16x256xf32, #tpu.memory_space<vmem>>, vector<1x1x8xf32>
    %921 = vector.shape_cast %920 : vector<1x1x8xf32> to vector<1x8xf32>
    %c0_1272 = arith.constant 0 : index
    %c14_1273 = arith.constant 14 : index
    %c72_1274 = arith.constant 72 : index
    %922 = vector.load %arg2[%c0_1272, %c14_1273, %c72_1274] : memref<1x16x256xf32, #tpu.memory_space<vmem>>, vector<1x1x8xf32>
    %923 = vector.shape_cast %922 : vector<1x1x8xf32> to vector<1x8xf32>
    %c0_1275 = arith.constant 0 : index
    %c15_1276 = arith.constant 15 : index
    %c72_1277 = arith.constant 72 : index
    %924 = vector.load %arg2[%c0_1275, %c15_1276, %c72_1277] : memref<1x16x256xf32, #tpu.memory_space<vmem>>, vector<1x1x8xf32>
    %925 = vector.shape_cast %924 : vector<1x1x8xf32> to vector<1x8xf32>
    %c0_1278 = arith.constant 0 : index
    %c12_1279 = arith.constant 12 : index
    %c80_1280 = arith.constant 80 : index
    %926 = vector.load %arg2[%c0_1278, %c12_1279, %c80_1280] : memref<1x16x256xf32, #tpu.memory_space<vmem>>, vector<1x1x8xf32>
    %927 = vector.shape_cast %926 : vector<1x1x8xf32> to vector<1x8xf32>
    %c0_1281 = arith.constant 0 : index
    %c13_1282 = arith.constant 13 : index
    %c80_1283 = arith.constant 80 : index
    %928 = vector.load %arg2[%c0_1281, %c13_1282, %c80_1283] : memref<1x16x256xf32, #tpu.memory_space<vmem>>, vector<1x1x8xf32>
    %929 = vector.shape_cast %928 : vector<1x1x8xf32> to vector<1x8xf32>
    %c0_1284 = arith.constant 0 : index
    %c14_1285 = arith.constant 14 : index
    %c80_1286 = arith.constant 80 : index
    %930 = vector.load %arg2[%c0_1284, %c14_1285, %c80_1286] : memref<1x16x256xf32, #tpu.memory_space<vmem>>, vector<1x1x8xf32>
    %931 = vector.shape_cast %930 : vector<1x1x8xf32> to vector<1x8xf32>
    %c0_1287 = arith.constant 0 : index
    %c15_1288 = arith.constant 15 : index
    %c80_1289 = arith.constant 80 : index
    %932 = vector.load %arg2[%c0_1287, %c15_1288, %c80_1289] : memref<1x16x256xf32, #tpu.memory_space<vmem>>, vector<1x1x8xf32>
    %933 = vector.shape_cast %932 : vector<1x1x8xf32> to vector<1x8xf32>
    %c0_1290 = arith.constant 0 : index
    %c12_1291 = arith.constant 12 : index
    %c88_1292 = arith.constant 88 : index
    %934 = vector.load %arg2[%c0_1290, %c12_1291, %c88_1292] : memref<1x16x256xf32, #tpu.memory_space<vmem>>, vector<1x1x8xf32>
    %935 = vector.shape_cast %934 : vector<1x1x8xf32> to vector<1x8xf32>
    %c0_1293 = arith.constant 0 : index
    %c13_1294 = arith.constant 13 : index
    %c88_1295 = arith.constant 88 : index
    %936 = vector.load %arg2[%c0_1293, %c13_1294, %c88_1295] : memref<1x16x256xf32, #tpu.memory_space<vmem>>, vector<1x1x8xf32>
    %937 = vector.shape_cast %936 : vector<1x1x8xf32> to vector<1x8xf32>
    %c0_1296 = arith.constant 0 : index
    %c14_1297 = arith.constant 14 : index
    %c88_1298 = arith.constant 88 : index
    %938 = vector.load %arg2[%c0_1296, %c14_1297, %c88_1298] : memref<1x16x256xf32, #tpu.memory_space<vmem>>, vector<1x1x8xf32>
    %939 = vector.shape_cast %938 : vector<1x1x8xf32> to vector<1x8xf32>
    %c0_1299 = arith.constant 0 : index
    %c15_1300 = arith.constant 15 : index
    %c88_1301 = arith.constant 88 : index
    %940 = vector.load %arg2[%c0_1299, %c15_1300, %c88_1301] : memref<1x16x256xf32, #tpu.memory_space<vmem>>, vector<1x1x8xf32>
    %941 = vector.shape_cast %940 : vector<1x1x8xf32> to vector<1x8xf32>
    %c0_1302 = arith.constant 0 : index
    %c12_1303 = arith.constant 12 : index
    %c96_1304 = arith.constant 96 : index
    %942 = vector.load %arg2[%c0_1302, %c12_1303, %c96_1304] : memref<1x16x256xf32, #tpu.memory_space<vmem>>, vector<1x1x8xf32>
    %943 = vector.shape_cast %942 : vector<1x1x8xf32> to vector<1x8xf32>
    %c0_1305 = arith.constant 0 : index
    %c13_1306 = arith.constant 13 : index
    %c96_1307 = arith.constant 96 : index
    %944 = vector.load %arg2[%c0_1305, %c13_1306, %c96_1307] : memref<1x16x256xf32, #tpu.memory_space<vmem>>, vector<1x1x8xf32>
    %945 = vector.shape_cast %944 : vector<1x1x8xf32> to vector<1x8xf32>
    %c0_1308 = arith.constant 0 : index
    %c14_1309 = arith.constant 14 : index
    %c96_1310 = arith.constant 96 : index
    %946 = vector.load %arg2[%c0_1308, %c14_1309, %c96_1310] : memref<1x16x256xf32, #tpu.memory_space<vmem>>, vector<1x1x8xf32>
    %947 = vector.shape_cast %946 : vector<1x1x8xf32> to vector<1x8xf32>
    %c0_1311 = arith.constant 0 : index
    %c15_1312 = arith.constant 15 : index
    %c96_1313 = arith.constant 96 : index
    %948 = vector.load %arg2[%c0_1311, %c15_1312, %c96_1313] : memref<1x16x256xf32, #tpu.memory_space<vmem>>, vector<1x1x8xf32>
    %949 = vector.shape_cast %948 : vector<1x1x8xf32> to vector<1x8xf32>
    %c0_1314 = arith.constant 0 : index
    %c12_1315 = arith.constant 12 : index
    %c104_1316 = arith.constant 104 : index
    %950 = vector.load %arg2[%c0_1314, %c12_1315, %c104_1316] : memref<1x16x256xf32, #tpu.memory_space<vmem>>, vector<1x1x8xf32>
    %951 = vector.shape_cast %950 : vector<1x1x8xf32> to vector<1x8xf32>
    %c0_1317 = arith.constant 0 : index
    %c13_1318 = arith.constant 13 : index
    %c104_1319 = arith.constant 104 : index
    %952 = vector.load %arg2[%c0_1317, %c13_1318, %c104_1319] : memref<1x16x256xf32, #tpu.memory_space<vmem>>, vector<1x1x8xf32>
    %953 = vector.shape_cast %952 : vector<1x1x8xf32> to vector<1x8xf32>
    %c0_1320 = arith.constant 0 : index
    %c14_1321 = arith.constant 14 : index
    %c104_1322 = arith.constant 104 : index
    %954 = vector.load %arg2[%c0_1320, %c14_1321, %c104_1322] : memref<1x16x256xf32, #tpu.memory_space<vmem>>, vector<1x1x8xf32>
    %955 = vector.shape_cast %954 : vector<1x1x8xf32> to vector<1x8xf32>
    %c0_1323 = arith.constant 0 : index
    %c15_1324 = arith.constant 15 : index
    %c104_1325 = arith.constant 104 : index
    %956 = vector.load %arg2[%c0_1323, %c15_1324, %c104_1325] : memref<1x16x256xf32, #tpu.memory_space<vmem>>, vector<1x1x8xf32>
    %957 = vector.shape_cast %956 : vector<1x1x8xf32> to vector<1x8xf32>
    %c0_1326 = arith.constant 0 : index
    %c12_1327 = arith.constant 12 : index
    %c112_1328 = arith.constant 112 : index
    %958 = vector.load %arg2[%c0_1326, %c12_1327, %c112_1328] : memref<1x16x256xf32, #tpu.memory_space<vmem>>, vector<1x1x8xf32>
    %959 = vector.shape_cast %958 : vector<1x1x8xf32> to vector<1x8xf32>
    %c0_1329 = arith.constant 0 : index
    %c13_1330 = arith.constant 13 : index
    %c112_1331 = arith.constant 112 : index
    %960 = vector.load %arg2[%c0_1329, %c13_1330, %c112_1331] : memref<1x16x256xf32, #tpu.memory_space<vmem>>, vector<1x1x8xf32>
    %961 = vector.shape_cast %960 : vector<1x1x8xf32> to vector<1x8xf32>
    %c0_1332 = arith.constant 0 : index
    %c14_1333 = arith.constant 14 : index
    %c112_1334 = arith.constant 112 : index
    %962 = vector.load %arg2[%c0_1332, %c14_1333, %c112_1334] : memref<1x16x256xf32, #tpu.memory_space<vmem>>, vector<1x1x8xf32>
    %963 = vector.shape_cast %962 : vector<1x1x8xf32> to vector<1x8xf32>
    %c0_1335 = arith.constant 0 : index
    %c15_1336 = arith.constant 15 : index
    %c112_1337 = arith.constant 112 : index
    %964 = vector.load %arg2[%c0_1335, %c15_1336, %c112_1337] : memref<1x16x256xf32, #tpu.memory_space<vmem>>, vector<1x1x8xf32>
    %965 = vector.shape_cast %964 : vector<1x1x8xf32> to vector<1x8xf32>
    %c0_1338 = arith.constant 0 : index
    %c12_1339 = arith.constant 12 : index
    %c120_1340 = arith.constant 120 : index
    %966 = vector.load %arg2[%c0_1338, %c12_1339, %c120_1340] : memref<1x16x256xf32, #tpu.memory_space<vmem>>, vector<1x1x8xf32>
    %967 = vector.shape_cast %966 : vector<1x1x8xf32> to vector<1x8xf32>
    %c0_1341 = arith.constant 0 : index
    %c13_1342 = arith.constant 13 : index
    %c120_1343 = arith.constant 120 : index
    %968 = vector.load %arg2[%c0_1341, %c13_1342, %c120_1343] : memref<1x16x256xf32, #tpu.memory_space<vmem>>, vector<1x1x8xf32>
    %969 = vector.shape_cast %968 : vector<1x1x8xf32> to vector<1x8xf32>
    %c0_1344 = arith.constant 0 : index
    %c14_1345 = arith.constant 14 : index
    %c120_1346 = arith.constant 120 : index
    %970 = vector.load %arg2[%c0_1344, %c14_1345, %c120_1346] : memref<1x16x256xf32, #tpu.memory_space<vmem>>, vector<1x1x8xf32>
    %971 = vector.shape_cast %970 : vector<1x1x8xf32> to vector<1x8xf32>
    %c0_1347 = arith.constant 0 : index
    %c15_1348 = arith.constant 15 : index
    %c120_1349 = arith.constant 120 : index
    %972 = vector.load %arg2[%c0_1347, %c15_1348, %c120_1349] : memref<1x16x256xf32, #tpu.memory_space<vmem>>, vector<1x1x8xf32>
    %973 = vector.shape_cast %972 : vector<1x1x8xf32> to vector<1x8xf32>
    %974 = tpu.concatenate %911, %913, %915, %917, %919, %921, %923, %925, %927, %929, %931, %933, %935, %937, %939, %941 in 1 : vector<1x8xf32>, vector<1x8xf32>, vector<1x8xf32>, vector<1x8xf32>, vector<1x8xf32>, vector<1x8xf32>, vector<1x8xf32>, vector<1x8xf32>, vector<1x8xf32>, vector<1x8xf32>, vector<1x8xf32>, vector<1x8xf32>, vector<1x8xf32>, vector<1x8xf32>, vector<1x8xf32>, vector<1x8xf32> -> vector<1x128xf32>
    %975 = tpu.concatenate %943, %945, %947, %949, %951, %953, %955, %957, %959, %961, %963, %965, %967, %969, %971, %973 in 1 : vector<1x8xf32>, vector<1x8xf32>, vector<1x8xf32>, vector<1x8xf32>, vector<1x8xf32>, vector<1x8xf32>, vector<1x8xf32>, vector<1x8xf32>, vector<1x8xf32>, vector<1x8xf32>, vector<1x8xf32>, vector<1x8xf32>, vector<1x8xf32>, vector<1x8xf32>, vector<1x8xf32>, vector<1x8xf32> -> vector<1x128xf32>
    %976 = tpu.concatenate %974, %975 in 1 : vector<1x128xf32>, vector<1x128xf32> -> vector<1x256xf32>
    %c0_1350 = arith.constant 0 : index
    %c1_1351 = arith.constant 1 : index
    %c3_1352 = arith.constant 3 : index
    %c0_1353 = arith.constant 0 : index
    %977 = vector.load %arg3[%c0_1350, %c1_1351, %c3_1352, %c0_1353] : memref<1x4x4x256xf32, #tpu.memory_space<vmem>>, vector<1x1x1x256xf32>
    %978 = vector.shape_cast %977 : vector<1x1x1x256xf32> to vector<1x256xf32>
    %979 = vector.shape_cast %976 : vector<1x256xf32> to vector<1x1x1x256xf32>
    tpu.vector_store %arg3[%c0_1350, %c1_1351, %c3_1352, %c0_1353], %979 {strides = array<i32>} : memref<1x4x4x256xf32, #tpu.memory_space<vmem>>, vector<1x1x1x256xf32>,
    %c0_1354 = arith.constant 0 : index
    %c12_1355 = arith.constant 12 : index
    %c128_1356 = arith.constant 128 : index
    %980 = vector.load %arg2[%c0_1354, %c12_1355, %c128_1356] : memref<1x16x256xf32, #tpu.memory_space<vmem>>, vector<1x1x8xf32>
    %981 = vector.shape_cast %980 : vector<1x1x8xf32> to vector<1x8xf32>
    %c0_1357 = arith.constant 0 : index
    %c13_1358 = arith.constant 13 : index
    %c128_1359 = arith.constant 128 : index
    %982 = vector.load %arg2[%c0_1357, %c13_1358, %c128_1359] : memref<1x16x256xf32, #tpu.memory_space<vmem>>, vector<1x1x8xf32>
    %983 = vector.shape_cast %982 : vector<1x1x8xf32> to vector<1x8xf32>
    %c0_1360 = arith.constant 0 : index
    %c14_1361 = arith.constant 14 : index
    %c128_1362 = arith.constant 128 : index
    %984 = vector.load %arg2[%c0_1360, %c14_1361, %c128_1362] : memref<1x16x256xf32, #tpu.memory_space<vmem>>, vector<1x1x8xf32>
    %985 = vector.shape_cast %984 : vector<1x1x8xf32> to vector<1x8xf32>
    %c0_1363 = arith.constant 0 : index
    %c15_1364 = arith.constant 15 : index
    %c128_1365 = arith.constant 128 : index
    %986 = vector.load %arg2[%c0_1363, %c15_1364, %c128_1365] : memref<1x16x256xf32, #tpu.memory_space<vmem>>, vector<1x1x8xf32>
    %987 = vector.shape_cast %986 : vector<1x1x8xf32> to vector<1x8xf32>
    %c0_1366 = arith.constant 0 : index
    %c12_1367 = arith.constant 12 : index
    %c136_1368 = arith.constant 136 : index
    %988 = vector.load %arg2[%c0_1366, %c12_1367, %c136_1368] : memref<1x16x256xf32, #tpu.memory_space<vmem>>, vector<1x1x8xf32>
    %989 = vector.shape_cast %988 : vector<1x1x8xf32> to vector<1x8xf32>
    %c0_1369 = arith.constant 0 : index
    %c13_1370 = arith.constant 13 : index
    %c136_1371 = arith.constant 136 : index
    %990 = vector.load %arg2[%c0_1369, %c13_1370, %c136_1371] : memref<1x16x256xf32, #tpu.memory_space<vmem>>, vector<1x1x8xf32>
    %991 = vector.shape_cast %990 : vector<1x1x8xf32> to vector<1x8xf32>
    %c0_1372 = arith.constant 0 : index
    %c14_1373 = arith.constant 14 : index
    %c136_1374 = arith.constant 136 : index
    %992 = vector.load %arg2[%c0_1372, %c14_1373, %c136_1374] : memref<1x16x256xf32, #tpu.memory_space<vmem>>, vector<1x1x8xf32>
    %993 = vector.shape_cast %992 : vector<1x1x8xf32> to vector<1x8xf32>
    %c0_1375 = arith.constant 0 : index
    %c15_1376 = arith.constant 15 : index
    %c136_1377 = arith.constant 136 : index
    %994 = vector.load %arg2[%c0_1375, %c15_1376, %c136_1377] : memref<1x16x256xf32, #tpu.memory_space<vmem>>, vector<1x1x8xf32>
    %995 = vector.shape_cast %994 : vector<1x1x8xf32> to vector<1x8xf32>
    %c0_1378 = arith.constant 0 : index
    %c12_1379 = arith.constant 12 : index
    %c144_1380 = arith.constant 144 : index
    %996 = vector.load %arg2[%c0_1378, %c12_1379, %c144_1380] : memref<1x16x256xf32, #tpu.memory_space<vmem>>, vector<1x1x8xf32>
    %997 = vector.shape_cast %996 : vector<1x1x8xf32> to vector<1x8xf32>
    %c0_1381 = arith.constant 0 : index
    %c13_1382 = arith.constant 13 : index
    %c144_1383 = arith.constant 144 : index
    %998 = vector.load %arg2[%c0_1381, %c13_1382, %c144_1383] : memref<1x16x256xf32, #tpu.memory_space<vmem>>, vector<1x1x8xf32>
    %999 = vector.shape_cast %998 : vector<1x1x8xf32> to vector<1x8xf32>
    %c0_1384 = arith.constant 0 : index
    %c14_1385 = arith.constant 14 : index
    %c144_1386 = arith.constant 144 : index
    %1000 = vector.load %arg2[%c0_1384, %c14_1385, %c144_1386] : memref<1x16x256xf32, #tpu.memory_space<vmem>>, vector<1x1x8xf32>
    %1001 = vector.shape_cast %1000 : vector<1x1x8xf32> to vector<1x8xf32>
    %c0_1387 = arith.constant 0 : index
    %c15_1388 = arith.constant 15 : index
    %c144_1389 = arith.constant 144 : index
    %1002 = vector.load %arg2[%c0_1387, %c15_1388, %c144_1389] : memref<1x16x256xf32, #tpu.memory_space<vmem>>, vector<1x1x8xf32>
    %1003 = vector.shape_cast %1002 : vector<1x1x8xf32> to vector<1x8xf32>
    %c0_1390 = arith.constant 0 : index
    %c12_1391 = arith.constant 12 : index
    %c152_1392 = arith.constant 152 : index
    %1004 = vector.load %arg2[%c0_1390, %c12_1391, %c152_1392] : memref<1x16x256xf32, #tpu.memory_space<vmem>>, vector<1x1x8xf32>
    %1005 = vector.shape_cast %1004 : vector<1x1x8xf32> to vector<1x8xf32>
    %c0_1393 = arith.constant 0 : index
    %c13_1394 = arith.constant 13 : index
    %c152_1395 = arith.constant 152 : index
    %1006 = vector.load %arg2[%c0_1393, %c13_1394, %c152_1395] : memref<1x16x256xf32, #tpu.memory_space<vmem>>, vector<1x1x8xf32>
    %1007 = vector.shape_cast %1006 : vector<1x1x8xf32> to vector<1x8xf32>
    %c0_1396 = arith.constant 0 : index
    %c14_1397 = arith.constant 14 : index
    %c152_1398 = arith.constant 152 : index
    %1008 = vector.load %arg2[%c0_1396, %c14_1397, %c152_1398] : memref<1x16x256xf32, #tpu.memory_space<vmem>>, vector<1x1x8xf32>
    %1009 = vector.shape_cast %1008 : vector<1x1x8xf32> to vector<1x8xf32>
    %c0_1399 = arith.constant 0 : index
    %c15_1400 = arith.constant 15 : index
    %c152_1401 = arith.constant 152 : index
    %1010 = vector.load %arg2[%c0_1399, %c15_1400, %c152_1401] : memref<1x16x256xf32, #tpu.memory_space<vmem>>, vector<1x1x8xf32>
    %1011 = vector.shape_cast %1010 : vector<1x1x8xf32> to vector<1x8xf32>
    %c0_1402 = arith.constant 0 : index
    %c12_1403 = arith.constant 12 : index
    %c160_1404 = arith.constant 160 : index
    %1012 = vector.load %arg2[%c0_1402, %c12_1403, %c160_1404] : memref<1x16x256xf32, #tpu.memory_space<vmem>>, vector<1x1x8xf32>
    %1013 = vector.shape_cast %1012 : vector<1x1x8xf32> to vector<1x8xf32>
    %c0_1405 = arith.constant 0 : index
    %c13_1406 = arith.constant 13 : index
    %c160_1407 = arith.constant 160 : index
    %1014 = vector.load %arg2[%c0_1405, %c13_1406, %c160_1407] : memref<1x16x256xf32, #tpu.memory_space<vmem>>, vector<1x1x8xf32>
    %1015 = vector.shape_cast %1014 : vector<1x1x8xf32> to vector<1x8xf32>
    %c0_1408 = arith.constant 0 : index
    %c14_1409 = arith.constant 14 : index
    %c160_1410 = arith.constant 160 : index
    %1016 = vector.load %arg2[%c0_1408, %c14_1409, %c160_1410] : memref<1x16x256xf32, #tpu.memory_space<vmem>>, vector<1x1x8xf32>
    %1017 = vector.shape_cast %1016 : vector<1x1x8xf32> to vector<1x8xf32>
    %c0_1411 = arith.constant 0 : index
    %c15_1412 = arith.constant 15 : index
    %c160_1413 = arith.constant 160 : index
    %1018 = vector.load %arg2[%c0_1411, %c15_1412, %c160_1413] : memref<1x16x256xf32, #tpu.memory_space<vmem>>, vector<1x1x8xf32>
    %1019 = vector.shape_cast %1018 : vector<1x1x8xf32> to vector<1x8xf32>
    %c0_1414 = arith.constant 0 : index
    %c12_1415 = arith.constant 12 : index
    %c168_1416 = arith.constant 168 : index
    %1020 = vector.load %arg2[%c0_1414, %c12_1415, %c168_1416] : memref<1x16x256xf32, #tpu.memory_space<vmem>>, vector<1x1x8xf32>
    %1021 = vector.shape_cast %1020 : vector<1x1x8xf32> to vector<1x8xf32>
    %c0_1417 = arith.constant 0 : index
    %c13_1418 = arith.constant 13 : index
    %c168_1419 = arith.constant 168 : index
    %1022 = vector.load %arg2[%c0_1417, %c13_1418, %c168_1419] : memref<1x16x256xf32, #tpu.memory_space<vmem>>, vector<1x1x8xf32>
    %1023 = vector.shape_cast %1022 : vector<1x1x8xf32> to vector<1x8xf32>
    %c0_1420 = arith.constant 0 : index
    %c14_1421 = arith.constant 14 : index
    %c168_1422 = arith.constant 168 : index
    %1024 = vector.load %arg2[%c0_1420, %c14_1421, %c168_1422] : memref<1x16x256xf32, #tpu.memory_space<vmem>>, vector<1x1x8xf32>
    %1025 = vector.shape_cast %1024 : vector<1x1x8xf32> to vector<1x8xf32>
    %c0_1423 = arith.constant 0 : index
    %c15_1424 = arith.constant 15 : index
    %c168_1425 = arith.constant 168 : index
    %1026 = vector.load %arg2[%c0_1423, %c15_1424, %c168_1425] : memref<1x16x256xf32, #tpu.memory_space<vmem>>, vector<1x1x8xf32>
    %1027 = vector.shape_cast %1026 : vector<1x1x8xf32> to vector<1x8xf32>
    %c0_1426 = arith.constant 0 : index
    %c12_1427 = arith.constant 12 : index
    %c176_1428 = arith.constant 176 : index
    %1028 = vector.load %arg2[%c0_1426, %c12_1427, %c176_1428] : memref<1x16x256xf32, #tpu.memory_space<vmem>>, vector<1x1x8xf32>
    %1029 = vector.shape_cast %1028 : vector<1x1x8xf32> to vector<1x8xf32>
    %c0_1429 = arith.constant 0 : index
    %c13_1430 = arith.constant 13 : index
    %c176_1431 = arith.constant 176 : index
    %1030 = vector.load %arg2[%c0_1429, %c13_1430, %c176_1431] : memref<1x16x256xf32, #tpu.memory_space<vmem>>, vector<1x1x8xf32>
    %1031 = vector.shape_cast %1030 : vector<1x1x8xf32> to vector<1x8xf32>
    %c0_1432 = arith.constant 0 : index
    %c14_1433 = arith.constant 14 : index
    %c176_1434 = arith.constant 176 : index
    %1032 = vector.load %arg2[%c0_1432, %c14_1433, %c176_1434] : memref<1x16x256xf32, #tpu.memory_space<vmem>>, vector<1x1x8xf32>
    %1033 = vector.shape_cast %1032 : vector<1x1x8xf32> to vector<1x8xf32>
    %c0_1435 = arith.constant 0 : index
    %c15_1436 = arith.constant 15 : index
    %c176_1437 = arith.constant 176 : index
    %1034 = vector.load %arg2[%c0_1435, %c15_1436, %c176_1437] : memref<1x16x256xf32, #tpu.memory_space<vmem>>, vector<1x1x8xf32>
    %1035 = vector.shape_cast %1034 : vector<1x1x8xf32> to vector<1x8xf32>
    %c0_1438 = arith.constant 0 : index
    %c12_1439 = arith.constant 12 : index
    %c184_1440 = arith.constant 184 : index
    %1036 = vector.load %arg2[%c0_1438, %c12_1439, %c184_1440] : memref<1x16x256xf32, #tpu.memory_space<vmem>>, vector<1x1x8xf32>
    %1037 = vector.shape_cast %1036 : vector<1x1x8xf32> to vector<1x8xf32>
    %c0_1441 = arith.constant 0 : index
    %c13_1442 = arith.constant 13 : index
    %c184_1443 = arith.constant 184 : index
    %1038 = vector.load %arg2[%c0_1441, %c13_1442, %c184_1443] : memref<1x16x256xf32, #tpu.memory_space<vmem>>, vector<1x1x8xf32>
    %1039 = vector.shape_cast %1038 : vector<1x1x8xf32> to vector<1x8xf32>
    %c0_1444 = arith.constant 0 : index
    %c14_1445 = arith.constant 14 : index
    %c184_1446 = arith.constant 184 : index
    %1040 = vector.load %arg2[%c0_1444, %c14_1445, %c184_1446] : memref<1x16x256xf32, #tpu.memory_space<vmem>>, vector<1x1x8xf32>
    %1041 = vector.shape_cast %1040 : vector<1x1x8xf32> to vector<1x8xf32>
    %c0_1447 = arith.constant 0 : index
    %c15_1448 = arith.constant 15 : index
    %c184_1449 = arith.constant 184 : index
    %1042 = vector.load %arg2[%c0_1447, %c15_1448, %c184_1449] : memref<1x16x256xf32, #tpu.memory_space<vmem>>, vector<1x1x8xf32>
    %1043 = vector.shape_cast %1042 : vector<1x1x8xf32> to vector<1x8xf32>
    %1044 = tpu.concatenate %981, %983, %985, %987, %989, %991, %993, %995, %997, %999, %1001, %1003, %1005, %1007, %1009, %1011 in 1 : vector<1x8xf32>, vector<1x8xf32>, vector<1x8xf32>, vector<1x8xf32>, vector<1x8xf32>, vector<1x8xf32>, vector<1x8xf32>, vector<1x8xf32>, vector<1x8xf32>, vector<1x8xf32>, vector<1x8xf32>, vector<1x8xf32>, vector<1x8xf32>, vector<1x8xf32>, vector<1x8xf32>, vector<1x8xf32> -> vector<1x128xf32>
    %1045 = tpu.concatenate %1013, %1015, %1017, %1019, %1021, %1023, %1025, %1027, %1029, %1031, %1033, %1035, %1037, %1039, %1041, %1043 in 1 : vector<1x8xf32>, vector<1x8xf32>, vector<1x8xf32>, vector<1x8xf32>, vector<1x8xf32>, vector<1x8xf32>, vector<1x8xf32>, vector<1x8xf32>, vector<1x8xf32>, vector<1x8xf32>, vector<1x8xf32>, vector<1x8xf32>, vector<1x8xf32>, vector<1x8xf32>, vector<1x8xf32>, vector<1x8xf32> -> vector<1x128xf32>
    %1046 = tpu.concatenate %1044, %1045 in 1 : vector<1x128xf32>, vector<1x128xf32> -> vector<1x256xf32>
    %c0_1450 = arith.constant 0 : index
    %c2_1451 = arith.constant 2 : index
    %c3_1452 = arith.constant 3 : index
    %c0_1453 = arith.constant 0 : index
    %1047 = vector.load %arg3[%c0_1450, %c2_1451, %c3_1452, %c0_1453] : memref<1x4x4x256xf32, #tpu.memory_space<vmem>>, vector<1x1x1x256xf32>
    %1048 = vector.shape_cast %1047 : vector<1x1x1x256xf32> to vector<1x256xf32>
    %1049 = vector.shape_cast %1046 : vector<1x256xf32> to vector<1x1x1x256xf32>
    tpu.vector_store %arg3[%c0_1450, %c2_1451, %c3_1452, %c0_1453], %1049 {strides = array<i32>} : memref<1x4x4x256xf32, #tpu.memory_space<vmem>>, vector<1x1x1x256xf32>,
    %c0_1454 = arith.constant 0 : index
    %c12_1455 = arith.constant 12 : index
    %c192_1456 = arith.constant 192 : index
    %1050 = vector.load %arg2[%c0_1454, %c12_1455, %c192_1456] : memref<1x16x256xf32, #tpu.memory_space<vmem>>, vector<1x1x8xf32>
    %1051 = vector.shape_cast %1050 : vector<1x1x8xf32> to vector<1x8xf32>
    %c0_1457 = arith.constant 0 : index
    %c13_1458 = arith.constant 13 : index
    %c192_1459 = arith.constant 192 : index
    %1052 = vector.load %arg2[%c0_1457, %c13_1458, %c192_1459] : memref<1x16x256xf32, #tpu.memory_space<vmem>>, vector<1x1x8xf32>
    %1053 = vector.shape_cast %1052 : vector<1x1x8xf32> to vector<1x8xf32>
    %c0_1460 = arith.constant 0 : index
    %c14_1461 = arith.constant 14 : index
    %c192_1462 = arith.constant 192 : index
    %1054 = vector.load %arg2[%c0_1460, %c14_1461, %c192_1462] : memref<1x16x256xf32, #tpu.memory_space<vmem>>, vector<1x1x8xf32>
    %1055 = vector.shape_cast %1054 : vector<1x1x8xf32> to vector<1x8xf32>
    %c0_1463 = arith.constant 0 : index
    %c15_1464 = arith.constant 15 : index
    %c192_1465 = arith.constant 192 : index
    %1056 = vector.load %arg2[%c0_1463, %c15_1464, %c192_1465] : memref<1x16x256xf32, #tpu.memory_space<vmem>>, vector<1x1x8xf32>
    %1057 = vector.shape_cast %1056 : vector<1x1x8xf32> to vector<1x8xf32>
    %c0_1466 = arith.constant 0 : index
    %c12_1467 = arith.constant 12 : index
    %c200_1468 = arith.constant 200 : index
    %1058 = vector.load %arg2[%c0_1466, %c12_1467, %c200_1468] : memref<1x16x256xf32, #tpu.memory_space<vmem>>, vector<1x1x8xf32>
    %1059 = vector.shape_cast %1058 : vector<1x1x8xf32> to vector<1x8xf32>
    %c0_1469 = arith.constant 0 : index
    %c13_1470 = arith.constant 13 : index
    %c200_1471 = arith.constant 200 : index
    %1060 = vector.load %arg2[%c0_1469, %c13_1470, %c200_1471] : memref<1x16x256xf32, #tpu.memory_space<vmem>>, vector<1x1x8xf32>
    %1061 = vector.shape_cast %1060 : vector<1x1x8xf32> to vector<1x8xf32>
    %c0_1472 = arith.constant 0 : index
    %c14_1473 = arith.constant 14 : index
    %c200_1474 = arith.constant 200 : index
    %1062 = vector.load %arg2[%c0_1472, %c14_1473, %c200_1474] : memref<1x16x256xf32, #tpu.memory_space<vmem>>, vector<1x1x8xf32>
    %1063 = vector.shape_cast %1062 : vector<1x1x8xf32> to vector<1x8xf32>
    %c0_1475 = arith.constant 0 : index
    %c15_1476 = arith.constant 15 : index
    %c200_1477 = arith.constant 200 : index
    %1064 = vector.load %arg2[%c0_1475, %c15_1476, %c200_1477] : memref<1x16x256xf32, #tpu.memory_space<vmem>>, vector<1x1x8xf32>
    %1065 = vector.shape_cast %1064 : vector<1x1x8xf32> to vector<1x8xf32>
    %c0_1478 = arith.constant 0 : index
    %c12_1479 = arith.constant 12 : index
    %c208_1480 = arith.constant 208 : index
    %1066 = vector.load %arg2[%c0_1478, %c12_1479, %c208_1480] : memref<1x16x256xf32, #tpu.memory_space<vmem>>, vector<1x1x8xf32>
    %1067 = vector.shape_cast %1066 : vector<1x1x8xf32> to vector<1x8xf32>
    %c0_1481 = arith.constant 0 : index
    %c13_1482 = arith.constant 13 : index
    %c208_1483 = arith.constant 208 : index
    %1068 = vector.load %arg2[%c0_1481, %c13_1482, %c208_1483] : memref<1x16x256xf32, #tpu.memory_space<vmem>>, vector<1x1x8xf32>
    %1069 = vector.shape_cast %1068 : vector<1x1x8xf32> to vector<1x8xf32>
    %c0_1484 = arith.constant 0 : index
    %c14_1485 = arith.constant 14 : index
    %c208_1486 = arith.constant 208 : index
    %1070 = vector.load %arg2[%c0_1484, %c14_1485, %c208_1486] : memref<1x16x256xf32, #tpu.memory_space<vmem>>, vector<1x1x8xf32>
    %1071 = vector.shape_cast %1070 : vector<1x1x8xf32> to vector<1x8xf32>
    %c0_1487 = arith.constant 0 : index
    %c15_1488 = arith.constant 15 : index
    %c208_1489 = arith.constant 208 : index
    %1072 = vector.load %arg2[%c0_1487, %c15_1488, %c208_1489] : memref<1x16x256xf32, #tpu.memory_space<vmem>>, vector<1x1x8xf32>
    %1073 = vector.shape_cast %1072 : vector<1x1x8xf32> to vector<1x8xf32>
    %c0_1490 = arith.constant 0 : index
    %c12_1491 = arith.constant 12 : index
    %c216_1492 = arith.constant 216 : index
    %1074 = vector.load %arg2[%c0_1490, %c12_1491, %c216_1492] : memref<1x16x256xf32, #tpu.memory_space<vmem>>, vector<1x1x8xf32>
    %1075 = vector.shape_cast %1074 : vector<1x1x8xf32> to vector<1x8xf32>
    %c0_1493 = arith.constant 0 : index
    %c13_1494 = arith.constant 13 : index
    %c216_1495 = arith.constant 216 : index
    %1076 = vector.load %arg2[%c0_1493, %c13_1494, %c216_1495] : memref<1x16x256xf32, #tpu.memory_space<vmem>>, vector<1x1x8xf32>
    %1077 = vector.shape_cast %1076 : vector<1x1x8xf32> to vector<1x8xf32>
    %c0_1496 = arith.constant 0 : index
    %c14_1497 = arith.constant 14 : index
    %c216_1498 = arith.constant 216 : index
    %1078 = vector.load %arg2[%c0_1496, %c14_1497, %c216_1498] : memref<1x16x256xf32, #tpu.memory_space<vmem>>, vector<1x1x8xf32>
    %1079 = vector.shape_cast %1078 : vector<1x1x8xf32> to vector<1x8xf32>
    %c0_1499 = arith.constant 0 : index
    %c15_1500 = arith.constant 15 : index
    %c216_1501 = arith.constant 216 : index
    %1080 = vector.load %arg2[%c0_1499, %c15_1500, %c216_1501] : memref<1x16x256xf32, #tpu.memory_space<vmem>>, vector<1x1x8xf32>
    %1081 = vector.shape_cast %1080 : vector<1x1x8xf32> to vector<1x8xf32>
    %c0_1502 = arith.constant 0 : index
    %c12_1503 = arith.constant 12 : index
    %c224_1504 = arith.constant 224 : index
    %1082 = vector.load %arg2[%c0_1502, %c12_1503, %c224_1504] : memref<1x16x256xf32, #tpu.memory_space<vmem>>, vector<1x1x8xf32>
    %1083 = vector.shape_cast %1082 : vector<1x1x8xf32> to vector<1x8xf32>
    %c0_1505 = arith.constant 0 : index
    %c13_1506 = arith.constant 13 : index
    %c224_1507 = arith.constant 224 : index
    %1084 = vector.load %arg2[%c0_1505, %c13_1506, %c224_1507] : memref<1x16x256xf32, #tpu.memory_space<vmem>>, vector<1x1x8xf32>
    %1085 = vector.shape_cast %1084 : vector<1x1x8xf32> to vector<1x8xf32>
    %c0_1508 = arith.constant 0 : index
    %c14_1509 = arith.constant 14 : index
    %c224_1510 = arith.constant 224 : index
    %1086 = vector.load %arg2[%c0_1508, %c14_1509, %c224_1510] : memref<1x16x256xf32, #tpu.memory_space<vmem>>, vector<1x1x8xf32>
    %1087 = vector.shape_cast %1086 : vector<1x1x8xf32> to vector<1x8xf32>
    %c0_1511 = arith.constant 0 : index
    %c15_1512 = arith.constant 15 : index
    %c224_1513 = arith.constant 224 : index
    %1088 = vector.load %arg2[%c0_1511, %c15_1512, %c224_1513] : memref<1x16x256xf32, #tpu.memory_space<vmem>>, vector<1x1x8xf32>
    %1089 = vector.shape_cast %1088 : vector<1x1x8xf32> to vector<1x8xf32>
    %c0_1514 = arith.constant 0 : index
    %c12_1515 = arith.constant 12 : index
    %c232_1516 = arith.constant 232 : index
    %1090 = vector.load %arg2[%c0_1514, %c12_1515, %c232_1516] : memref<1x16x256xf32, #tpu.memory_space<vmem>>, vector<1x1x8xf32>
    %1091 = vector.shape_cast %1090 : vector<1x1x8xf32> to vector<1x8xf32>
    %c0_1517 = arith.constant 0 : index
    %c13_1518 = arith.constant 13 : index
    %c232_1519 = arith.constant 232 : index
    %1092 = vector.load %arg2[%c0_1517, %c13_1518, %c232_1519] : memref<1x16x256xf32, #tpu.memory_space<vmem>>, vector<1x1x8xf32>
    %1093 = vector.shape_cast %1092 : vector<1x1x8xf32> to vector<1x8xf32>
    %c0_1520 = arith.constant 0 : index
    %c14_1521 = arith.constant 14 : index
    %c232_1522 = arith.constant 232 : index
    %1094 = vector.load %arg2[%c0_1520, %c14_1521, %c232_1522] : memref<1x16x256xf32, #tpu.memory_space<vmem>>, vector<1x1x8xf32>
    %1095 = vector.shape_cast %1094 : vector<1x1x8xf32> to vector<1x8xf32>
    %c0_1523 = arith.constant 0 : index
    %c15_1524 = arith.constant 15 : index
    %c232_1525 = arith.constant 232 : index
    %1096 = vector.load %arg2[%c0_1523, %c15_1524, %c232_1525] : memref<1x16x256xf32, #tpu.memory_space<vmem>>, vector<1x1x8xf32>
    %1097 = vector.shape_cast %1096 : vector<1x1x8xf32> to vector<1x8xf32>
    %c0_1526 = arith.constant 0 : index
    %c12_1527 = arith.constant 12 : index
    %c240_1528 = arith.constant 240 : index
    %1098 = vector.load %arg2[%c0_1526, %c12_1527, %c240_1528] : memref<1x16x256xf32, #tpu.memory_space<vmem>>, vector<1x1x8xf32>
    %1099 = vector.shape_cast %1098 : vector<1x1x8xf32> to vector<1x8xf32>
    %c0_1529 = arith.constant 0 : index
    %c13_1530 = arith.constant 13 : index
    %c240_1531 = arith.constant 240 : index
    %1100 = vector.load %arg2[%c0_1529, %c13_1530, %c240_1531] : memref<1x16x256xf32, #tpu.memory_space<vmem>>, vector<1x1x8xf32>
    %1101 = vector.shape_cast %1100 : vector<1x1x8xf32> to vector<1x8xf32>
    %c0_1532 = arith.constant 0 : index
    %c14_1533 = arith.constant 14 : index
    %c240_1534 = arith.constant 240 : index
    %1102 = vector.load %arg2[%c0_1532, %c14_1533, %c240_1534] : memref<1x16x256xf32, #tpu.memory_space<vmem>>, vector<1x1x8xf32>
    %1103 = vector.shape_cast %1102 : vector<1x1x8xf32> to vector<1x8xf32>
    %c0_1535 = arith.constant 0 : index
    %c15_1536 = arith.constant 15 : index
    %c240_1537 = arith.constant 240 : index
    %1104 = vector.load %arg2[%c0_1535, %c15_1536, %c240_1537] : memref<1x16x256xf32, #tpu.memory_space<vmem>>, vector<1x1x8xf32>
    %1105 = vector.shape_cast %1104 : vector<1x1x8xf32> to vector<1x8xf32>
    %c0_1538 = arith.constant 0 : index
    %c12_1539 = arith.constant 12 : index
    %c248_1540 = arith.constant 248 : index
    %1106 = vector.load %arg2[%c0_1538, %c12_1539, %c248_1540] : memref<1x16x256xf32, #tpu.memory_space<vmem>>, vector<1x1x8xf32>
    %1107 = vector.shape_cast %1106 : vector<1x1x8xf32> to vector<1x8xf32>
    %c0_1541 = arith.constant 0 : index
    %c13_1542 = arith.constant 13 : index
    %c248_1543 = arith.constant 248 : index
    %1108 = vector.load %arg2[%c0_1541, %c13_1542, %c248_1543] : memref<1x16x256xf32, #tpu.memory_space<vmem>>, vector<1x1x8xf32>
    %1109 = vector.shape_cast %1108 : vector<1x1x8xf32> to vector<1x8xf32>
    %c0_1544 = arith.constant 0 : index
    %c14_1545 = arith.constant 14 : index
    %c248_1546 = arith.constant 248 : index
    %1110 = vector.load %arg2[%c0_1544, %c14_1545, %c248_1546] : memref<1x16x256xf32, #tpu.memory_space<vmem>>, vector<1x1x8xf32>
    %1111 = vector.shape_cast %1110 : vector<1x1x8xf32> to vector<1x8xf32>
    %c0_1547 = arith.constant 0 : index
    %c15_1548 = arith.constant 15 : index
    %c248_1549 = arith.constant 248 : index
    %1112 = vector.load %arg2[%c0_1547, %c15_1548, %c248_1549] : memref<1x16x256xf32, #tpu.memory_space<vmem>>, vector<1x1x8xf32>
    %1113 = vector.shape_cast %1112 : vector<1x1x8xf32> to vector<1x8xf32>
    %1114 = tpu.concatenate %1051, %1053, %1055, %1057, %1059, %1061, %1063, %1065, %1067, %1069, %1071, %1073, %1075, %1077, %1079, %1081 in 1 : vector<1x8xf32>, vector<1x8xf32>, vector<1x8xf32>, vector<1x8xf32>, vector<1x8xf32>, vector<1x8xf32>, vector<1x8xf32>, vector<1x8xf32>, vector<1x8xf32>, vector<1x8xf32>, vector<1x8xf32>, vector<1x8xf32>, vector<1x8xf32>, vector<1x8xf32>, vector<1x8xf32>, vector<1x8xf32> -> vector<1x128xf32>
    %1115 = tpu.concatenate %1083, %1085, %1087, %1089, %1091, %1093, %1095, %1097, %1099, %1101, %1103, %1105, %1107, %1109, %1111, %1113 in 1 : vector<1x8xf32>, vector<1x8xf32>, vector<1x8xf32>, vector<1x8xf32>, vector<1x8xf32>, vector<1x8xf32>, vector<1x8xf32>, vector<1x8xf32>, vector<1x8xf32>, vector<1x8xf32>, vector<1x8xf32>, vector<1x8xf32>, vector<1x8xf32>, vector<1x8xf32>, vector<1x8xf32>, vector<1x8xf32> -> vector<1x128xf32>
    %1116 = tpu.concatenate %1114, %1115 in 1 : vector<1x128xf32>, vector<1x128xf32> -> vector<1x256xf32>
    %c0_1550 = arith.constant 0 : index
    %c3_1551 = arith.constant 3 : index
    %c3_1552 = arith.constant 3 : index
    %c0_1553 = arith.constant 0 : index
    %1117 = vector.load %arg3[%c0_1550, %c3_1551, %c3_1552, %c0_1553] : memref<1x4x4x256xf32, #tpu.memory_space<vmem>>, vector<1x1x1x256xf32>
    %1118 = vector.shape_cast %1117 : vector<1x1x1x256xf32> to vector<1x256xf32>
    %1119 = vector.shape_cast %1116 : vector<1x256xf32> to vector<1x1x1x256xf32>
    tpu.vector_store %arg3[%c0_1550, %c3_1551, %c3_1552, %c0_1553], %1119 {strides = array<i32>} : memref<1x4x4x256xf32, #tpu.memory_space<vmem>>, vector<1x1x1x256xf32>,
    return
  }
  func.func @transform_0(%arg0: i32, %arg1: i32) -> (i32, i32, i32) {
    %c0_i32 = arith.constant 0 : i32
    %c0_i32_0 = arith.constant 0 : i32
    return %arg0, %arg1, %c0_i32 : i32, i32, i32
  }
  func.func @transform_1(%arg0: i32, %arg1: i32) -> (i32, i32, i32, i32) {
    %c0_i32 = arith.constant 0 : i32
    %c0_i32_0 = arith.constant 0 : i32
    %c0_i32_1 = arith.constant 0 : i32
    return %arg0, %c0_i32, %arg1, %c0_i32_0 : i32, i32, i32, i32
  }
}

</mosaic_0001>

<llo_original>
// kernel: tpu_custom_call.1
$region0: #{tpu_custom_call.1}
  #allocation0 [shape = 'u32[]', space=smem, size = 0x4, offset = 0x4, fixed_abs, tag = 'smem constant byte address 0x4 - core index']
  #allocation1 [shape = 'u32[144,128]{1,0:T(1,128)}', space=vmem, size = 0x12000, scoped, tag = 'internal scratch']
  %s0 = inlined_call_operand.hbm [shape: f32[2,16,256], index: 0, kind: input, shape index: {}]
  %s1 = inlined_call_operand.hbm [shape: f32[2,4,4,256], index: 1, kind: output, shape index: {}]
  %s2 = sld [smem:[#allocation0]]
  $region41: #{tpu_custom_call.1} parent=0
    _
  %s4 = ssub.s32 1, %s2
  %s5 = scalar_select 0, %s4, %s2
  $region1: #{tpu_custom_call.1} parent=0
    #allocation2 [shape = 'u8[32768]{0}', space=vmem, size = 0x8000, scoped, tag = 'input window, operand 0']
    #allocation3 [shape = 's32[2]{0}', space=sflag, size = 0x8, scoped, tag = 'scoped memory for tpu_custom_call.1']
    #allocation4 [shape = 's32[2]{0}', space=sflag, size = 0x8, scoped, tag = 'scoped memory for tpu_custom_call.1']
    #allocation5 [shape = 'u8[32768]{0}', space=vmem, size = 0x8000, scoped, tag = 'output window, operand 0']
    %6 = vsyncpa [#allocation3], 0
    %s7 = scalar_lea.sflag [#allocation3], 1
    %8 = vsyncpa %s7, 0
    %9 = vsyncpa [#allocation4], 0
    %s10 = scalar_lea.sflag [#allocation4], 1
    %11 = vsyncpa %s10, 0
    loop: start=0, step=1, limit=4
    $region2: #{tpu_custom_call.1} parent=1 // loop_pre_header
      _
    $region3: #{tpu_custom_call.1} parent=1 // loop_header
      %s13 = sphi 0, %s17
      %p14 = scmp.ge.s32.totalorder %s13, 4
      %s20 = sphi 0, %s32
      %s21 = sphi 0, %s28
      %s22 = sphi 0, %s20
      %s23 = sphi 0, %s21
      %s24 = sphi 0, %s22
      %s25 = sphi 0, %s23
      %s37 = sphi 0, %s39
      %s40 = sphi 0, %s37
      %s41 = sphi 0, %s40
      %s57 = sphi 0, %s41
      %s65 = sphi 0, %s67
      %s68 = sphi 0, %s65
      %s69 = sphi 0, %s68
      %s85 = sphi 0, %s69
    $region4: #{tpu_custom_call.1} parent=1 // loop_header_branch
      %16 = sbr.rel (%p14) target = $region8
    $region5: #{tpu_custom_call.1} parent=1 // loop_body
      %s18 = ssub.s32 %s13, 1
      %s19 = ssub.s32 %s13, 2
      %s26 = sadd.s32 1, %s21
      %p27 = scmp.ge.s32.totalorder %s26, 1
      %s28 = scalar_select %p27, 0, %s26
      %s29 = sadd.s32 1, %s20
      %s30 = scalar_select %p27, %s29, %s20
      %p31 = scmp.ge.s32.totalorder %s30, 2
      %s32 = scalar_select %p31, 0, %s30
      %s33 = ssub.s32 %s20, %s32
      %s34 = ssub.s32 %s21, %s28
      %s35 = sor.u32 %s33, %s34
      %p36 = scmp.eq.s32.totalorder %s35, 0
      %s38 = sadd.s32 %s37, 1
      %s39 = scalar_select %p36, %s37, %s38
      %p42 = pneg %p36
      %p43 = scmp.eq.s32.totalorder %s13, 1
      %p44 = por %p42, %p43
      %p45 = scmp.ne.s32.totalorder %s37, %s40
      %p46 = scmp.eq.s32.totalorder %s13, 0
      %p47 = por %p45, %p46
      %p48 = scmp.ne.s32.totalorder %s37, %s40
      %p49 = scmp.eq.s32.totalorder %s18, 1
      %p50 = por %p48, %p49
      %p51 = scmp.ne.s32.totalorder %s40, %s41
      %p52 = scmp.eq.s32.totalorder %s18, 0
      %p53 = por %p51, %p52
      %p54 = scmp.ne.s32.totalorder %s40, %s41
      %p55 = scmp.eq.s32.totalorder %s19, 1
      %p56 = por %p54, %p55
      %p58 = scmp.ne.s32.totalorder %s41, %s57
      %p59 = scmp.eq.s32.totalorder %s19, 0
      %p60 = por %p58, %p59
      %s61 = ssub.s32 %s20, %s32
      %s62 = ssub.s32 %s21, %s28
      %s63 = sor.u32 %s61, %s62
      %p64 = scmp.eq.s32.totalorder %s63, 0
      %s66 = sadd.s32 %s65, 1
      %s67 = scalar_select %p64, %s65, %s66
      %p70 = pneg %p64
      %p71 = scmp.eq.s32.totalorder %s13, 1
      %p72 = por %p70, %p71
      %p73 = scmp.ne.s32.totalorder %s65, %s68
      %p74 = scmp.eq.s32.totalorder %s13, 0
      %p75 = por %p73, %p74
      %p76 = scmp.ne.s32.totalorder %s65, %s68
      %p77 = scmp.eq.s32.totalorder %s18, 1
      %p78 = por %p76, %p77
      %p79 = scmp.ne.s32.totalorder %s68, %s69
      %p80 = scmp.eq.s32.totalorder %s18, 0
      %p81 = por %p79, %p80
      %p82 = scmp.ne.s32.totalorder %s68, %s69
      %p83 = scmp.eq.s32.totalorder %s19, 1
      %p84 = por %p82, %p83
      %p86 = scmp.ne.s32.totalorder %s69, %s85
      %p87 = scmp.eq.s32.totalorder %s19, 0
      %p88 = por %p86, %p87
      %p89 = scmp.le.s32.totalorder 1, %s13
      %p90 = scmp.lt.s32.totalorder %s13, 3
      %p91 = pnand %p89, %p90
      %p92 = pneg %p91
      // Predicated region
      $region9: #{tpu_custom_call.1} parent=5 // pred_check
        _
      $region10: #{tpu_custom_call.1} parent=5 // pred_check_branch
        %94 = sbr.rel (%p91) target = $region12
      $region11: #{tpu_custom_call.1} parent=5 // pred_region
        %s95 = ssub.s32 %s13, 1
      $region12: #{tpu_custom_call.1} parent=5 // pred_fallthru
        _
      %p96 = scmp.lt.s32.totalorder %s13, 2
      // Predicated region
      $region13: #{tpu_custom_call.1} parent=5 // pred_check
        %p97 = pneg %p96
      $region14: #{tpu_custom_call.1} parent=5 // pred_check_branch
        %99 = sbr.rel (%p97) target = $region16
      $region15: #{tpu_custom_call.1} parent=5 // pred_region
        // Predicated region
        $region17: #{tpu_custom_call.1} parent=15 // pred_check
          %p100 = pneg %p47
        $region18: #{tpu_custom_call.1} parent=15 // pred_check_branch
          %102 = sbr.rel (%p100) target = $region20
        $region19: #{tpu_custom_call.1} parent=15 // pred_region
          %s103 = sand.u32 %s37, 1
          %s104 = scalar_lea.sflag [#allocation3], %s103
          %s105 = sand.u32 %s37, 1
          %s106 = smul.addr %s105, 32
          %s107 = scalar_lea.vmem [#allocation2], %s106
          %s108 = smul.u32 2, %s21
          %s110 = ssub.s32 512, 512
          %111 = vsyncadd %s104, %s110
          %s112 = smul.addr %s108, 2
          %s113 = smul.addr %s20, 4
          %s114 = sadd.s32 %s112, %s113
          %s115 = smul.addr %s114, 128
          %s116 = scalar_lea.hbm %s0, %s115
          %s117 = sshll.u32 %s107, 4
          %s118 = int_to_ptr.vmem [resolvable:$true] %s117
          %123 = dma.hbm_to_vmem [thread:$0]  %s116, 512, %s118, %s104, 256, 256, 16
        $region20: #{tpu_custom_call.1} parent=15 // pred_fallthru
          _
      $region16: #{tpu_custom_call.1} parent=5 // pred_fallthru
        _
      %p124 = scmp.le.s32.totalorder 1, %s13
      %p125 = scmp.lt.s32.totalorder %s13, 3
      %p126 = pnand %p124, %p125
      %p127 = pneg %p126
      // Predicated region
      $region21: #{tpu_custom_call.1} parent=5 // pred_check
        _
      $region22: #{tpu_custom_call.1} parent=5 // pred_check_branch
        %129 = sbr.rel (%p126) target = $region24
      $region23: #{tpu_custom_call.1} parent=5 // pred_region
        %s130 = ssub.s32 %s13, 1
        %s131 = sand.u32 %s40, 1
        %s132 = scalar_lea.sflag [#allocation3], %s131
        %s133 = sand.u32 %s40, 1
        %s134 = smul.addr %s133, 32
        %s135 = scalar_lea.vmem [#allocation2], %s134
        // Predicated region
        $region25: #{tpu_custom_call.1} parent=23 // pred_check
          %p136 = pneg %p53
        $region26: #{tpu_custom_call.1} parent=23 // pred_check_branch
          %138 = sbr.rel (%p136) target = $region28
        $region27: #{tpu_custom_call.1} parent=23 // pred_region
          %139 = dma.done %s132, 512
        $region28: #{tpu_custom_call.1} parent=23 // pred_fallthru
          _
        %s140 = sand.u32 %s40, 1
        %s141 = scalar_lea.sflag [#allocation3], %s140
        %s142 = sand.u32 %s40, 1
        %s143 = smul.addr %s142, 32
        %s144 = scalar_lea.vmem [#allocation2], %s143
        %p145 = pneg %p53
        %p146 = pneg %p50
        %p147 = pneg %p81
        %p148 = pneg %p78
        %s149 = sand.u32 %s68, 1
        %s150 = scalar_lea.sflag [#allocation4], %s149
        %s151 = sand.u32 %s68, 1
        %s152 = smul.addr %s151, 32
        %s153 = scalar_lea.vmem [#allocation5], %s152
        %s154 = smul.u32 2, %s23
        %v155 = vld [vmem:[%s135] ss:$0 sm:$0xff]
        %v156 = vld [vmem:[%s135 + $0x1] ss:$0 sm:$0xff]
        %v157 = vld [vmem:[%s135 + $0x2] ss:$0 sm:$0xff]
        %v158 = vld [vmem:[%s135 + $0x3] ss:$0 sm:$0xff]
        %160 = vrot.lane.b32.xlu0 %v156, 8
        %v161 = vpop.permute.xlu0 %160
        %164 = vrot.lane.b32.xlu0 %v157, 16
        %v165 = vpop.permute.xlu0 %164
        %168 = vrot.lane.b32.xlu0 %v158, 24
        %v169 = vpop.permute.xlu0 %168
        %172 = vrot.lane.b32.xlu0 %v155, 24
        %v173 = vpop.permute.xlu0 %172
        %175 = vrot.lane.b32.xlu0 %v156, 32
        %v176 = vpop.permute.xlu0 %175
        %178 = vrot.lane.b32.xlu0 %v157, 40
        %v179 = vpop.permute.xlu0 %178
        %181 = vrot.lane.b32.xlu0 %v158, 48
        %v182 = vpop.permute.xlu0 %181
        %184 = vrot.lane.b32.xlu0 %v155, 48
        %v185 = vpop.permute.xlu0 %184
        %187 = vrot.lane.b32.xlu0 %v156, 56
        %v188 = vpop.permute.xlu0 %187
        %190 = vrot.lane.b32.xlu0 %v157, 64
        %v191 = vpop.permute.xlu0 %190
        %193 = vrot.lane.b32.xlu0 %v158, 72
        %v194 = vpop.permute.xlu0 %193
        %196 = vrot.lane.b32.xlu0 %v155, 72
        %v197 = vpop.permute.xlu0 %196
        %199 = vrot.lane.b32.xlu0 %v156, 80
        %v200 = vpop.permute.xlu0 %199
        %202 = vrot.lane.b32.xlu0 %v157, 88
        %v203 = vpop.permute.xlu0 %202
        %205 = vrot.lane.b32.xlu0 %v158, 96
        %v206 = vpop.permute.xlu0 %205
        %vm208 = vcmask 64512
        %v209 = vsel %vm208, %v155, %v161
        %vm210 = vcmask 130048
        %v211 = vsel %vm210, %v209, %v165
        %vm212 = vcmask 195584
        %v213 = vsel %vm212, %v211, %v169
        %vm214 = vcmask 261120
        %v215 = vsel %vm214, %v213, %v173
        %vm216 = vcmask 326656
        %v217 = vsel %vm216, %v215, %v176
        %vm218 = vcmask 392192
        %v219 = vsel %vm218, %v217, %v179
        %vm220 = vcmask 457728
        %v221 = vsel %vm220, %v219, %v182
        %vm222 = vcmask 523264
        %v223 = vsel %vm222, %v221, %v185
        %vm224 = vcmask 588800
        %v225 = vsel %vm224, %v223, %v188
        %vm226 = vcmask 654336
        %v227 = vsel %vm226, %v225, %v191
        %vm228 = vcmask 719872
        %v229 = vsel %vm228, %v227, %v194
        %vm230 = vcmask 785408
        %v231 = vsel %vm230, %v229, %v197
        %vm232 = vcmask 850944
        %v233 = vsel %vm232, %v231, %v200
        %vm234 = vcmask 916480
        %v235 = vsel %vm234, %v233, %v203
        %vm236 = vcmask 982016
        %v237 = vsel %vm236, %v235, %v206
        %238 = vrot.lane.b32.xlu0 %v155, 96
        %v239 = vpop.permute.xlu0 %238
        %241 = vrot.lane.b32.xlu0 %v156, 104
        %v242 = vpop.permute.xlu0 %241
        %244 = vrot.lane.b32.xlu0 %v157, 112
        %v245 = vpop.permute.xlu0 %244
        %247 = vrot.lane.b32.xlu0 %v158, 120
        %v248 = vpop.permute.xlu0 %247
        %250 = vrot.lane.b32.xlu0 %v155, 120
        %v251 = vpop.permute.xlu0 %250
        %253 = vrot.lane.b32.xlu0 %v157, 8
        %v254 = vpop.permute.xlu0 %253
        %256 = vrot.lane.b32.xlu0 %v158, 16
        %v257 = vpop.permute.xlu0 %256
        %259 = vrot.lane.b32.xlu0 %v155, 16
        %v260 = vpop.permute.xlu0 %259
        %262 = vrot.lane.b32.xlu0 %v156, 24
        %v263 = vpop.permute.xlu0 %262
        %265 = vrot.lane.b32.xlu0 %v157, 32
        %v266 = vpop.permute.xlu0 %265
        %268 = vrot.lane.b32.xlu0 %v158, 40
        %v269 = vpop.permute.xlu0 %268
        %271 = vrot.lane.b32.xlu0 %v155, 40
        %v272 = vpop.permute.xlu0 %271
        %274 = vrot.lane.b32.xlu0 %v156, 48
        %v275 = vpop.permute.xlu0 %274
        %277 = vrot.lane.b32.xlu0 %v157, 56
        %v278 = vpop.permute.xlu0 %277
        %280 = vrot.lane.b32.xlu0 %v158, 64
        %v281 = vpop.permute.xlu0 %280
        %v283 = vsel %vm208, %v239, %v242
        %v284 = vsel %vm210, %v283, %v245
        %v285 = vsel %vm212, %v284, %v248
        %v286 = vsel %vm214, %v285, %v251
        %v287 = vsel %vm216, %v286, %v156
        %v288 = vsel %vm218, %v287, %v254
        %v289 = vsel %vm220, %v288, %v257
        %v290 = vsel %vm222, %v289, %v260
        %v291 = vsel %vm224, %v290, %v263
        %v292 = vsel %vm226, %v291, %v266
        %v293 = vsel %vm228, %v292, %v269
        %v294 = vsel %vm230, %v293, %v272
        %v295 = vsel %vm232, %v294, %v275
        %v296 = vsel %vm234, %v295, %v278
        %v297 = vsel %vm236, %v296, %v281
        %v300 = vcombine.low %v237, %v297
        %v302 = vunpack.c.l.s4 1966171168
        %v303 = vunpack.c.0.s8 %v302
        %v304 = vlaneseq
        %v305 = vshrl.u32 %v304, 7
        %v306 = vsub.s32 %v303, %v305
        %v307 = vrot.slane %v300, %v306
        %v309 = vunpack.c.l.s4 1966171168
        %v310 = vunpack.c.0.s8 %v309
        %v311 = vlaneseq
        %v312 = vshrl.u32 %v311, 7
        %v313 = vsub.s32 %v310, %v312
        %v314 = vrot.slane %v307, %v313
        %v316 = vlaneseq
        %vm317 = vcmp.ge.s32.totalorder %v316, 0
        %vm318 = vcmp.lt.s32.totalorder %v316, 256
        %vm319 = vmand %vm317, %vm318
        %320 = vst.msk [vmem:[%s153] ss:$4 sm:$0x3] %vm319, %v314
        %v321 = vld [vmem:[%s135] ss:$0 sm:$0xff]
        %v322 = vld [vmem:[%s135 + $0x1] ss:$0 sm:$0xff]
        %v323 = vld [vmem:[%s135 + $0x2] ss:$0 sm:$0xff]
        %v324 = vld [vmem:[%s135 + $0x3] ss:$0 sm:$0xff]
        %326 = vrot.lane.b32.xlu0 %v321, 64
        %v327 = vpop.permute.xlu0 %326
        %330 = vrot.lane.b32.xlu0 %v322, 72
        %v331 = vpop.permute.xlu0 %330
        %334 = vrot.lane.b32.xlu0 %v323, 80
        %v335 = vpop.permute.xlu0 %334
        %338 = vrot.lane.b32.xlu0 %v324, 88
        %v339 = vpop.permute.xlu0 %338
        %341 = vrot.lane.b32.xlu0 %v321, 88
        %v342 = vpop.permute.xlu0 %341
        %344 = vrot.lane.b32.xlu0 %v322, 96
        %v345 = vpop.permute.xlu0 %344
        %347 = vrot.lane.b32.xlu0 %v323, 104
        %v348 = vpop.permute.xlu0 %347
        %350 = vrot.lane.b32.xlu0 %v324, 112
        %v351 = vpop.permute.xlu0 %350
        %353 = vrot.lane.b32.xlu0 %v321, 112
        %v354 = vpop.permute.xlu0 %353
        %356 = vrot.lane.b32.xlu0 %v322, 120
        %v357 = vpop.permute.xlu0 %356
        %359 = vrot.lane.b32.xlu0 %v324, 8
        %v360 = vpop.permute.xlu0 %359
        %362 = vrot.lane.b32.xlu0 %v321, 8
        %v363 = vpop.permute.xlu0 %362
        %365 = vrot.lane.b32.xlu0 %v322, 16
        %v366 = vpop.permute.xlu0 %365
        %368 = vrot.lane.b32.xlu0 %v323, 24
        %v369 = vpop.permute.xlu0 %368
        %371 = vrot.lane.b32.xlu0 %v324, 32
        %v372 = vpop.permute.xlu0 %371
        %v374 = vsel %vm208, %v327, %v331
        %v375 = vsel %vm210, %v374, %v335
        %v376 = vsel %vm212, %v375, %v339
        %v377 = vsel %vm214, %v376, %v342
        %v378 = vsel %vm216, %v377, %v345
        %v379 = vsel %vm218, %v378, %v348
        %v380 = vsel %vm220, %v379, %v351
        %v381 = vsel %vm222, %v380, %v354
        %v382 = vsel %vm224, %v381, %v357
        %v383 = vsel %vm226, %v382, %v323
        %v384 = vsel %vm228, %v383, %v360
        %v385 = vsel %vm230, %v384, %v363
        %v386 = vsel %vm232, %v385, %v366
        %v387 = vsel %vm234, %v386, %v369
        %v388 = vsel %vm236, %v387, %v372
        %389 = vrot.lane.b32.xlu0 %v321, 32
        %v390 = vpop.permute.xlu0 %389
        %392 = vrot.lane.b32.xlu0 %v322, 40
        %v393 = vpop.permute.xlu0 %392
        %395 = vrot.lane.b32.xlu0 %v323, 48
        %v396 = vpop.permute.xlu0 %395
        %398 = vrot.lane.b32.xlu0 %v324, 56
        %v399 = vpop.permute.xlu0 %398
        %401 = vrot.lane.b32.xlu0 %v321, 56
        %v402 = vpop.permute.xlu0 %401
        %404 = vrot.lane.b32.xlu0 %v322, 64
        %v405 = vpop.permute.xlu0 %404
        %407 = vrot.lane.b32.xlu0 %v323, 72
        %v408 = vpop.permute.xlu0 %407
        %410 = vrot.lane.b32.xlu0 %v324, 80
        %v411 = vpop.permute.xlu0 %410
        %413 = vrot.lane.b32.xlu0 %v321, 80
        %v414 = vpop.permute.xlu0 %413
        %416 = vrot.lane.b32.xlu0 %v322, 88
        %v417 = vpop.permute.xlu0 %416
        %419 = vrot.lane.b32.xlu0 %v323, 96
        %v420 = vpop.permute.xlu0 %419
        %422 = vrot.lane.b32.xlu0 %v324, 104
        %v423 = vpop.permute.xlu0 %422
        %425 = vrot.lane.b32.xlu0 %v321, 104
        %v426 = vpop.permute.xlu0 %425
        %428 = vrot.lane.b32.xlu0 %v322, 112
        %v429 = vpop.permute.xlu0 %428
        %431 = vrot.lane.b32.xlu0 %v323, 120
        %v432 = vpop.permute.xlu0 %431
        %v434 = vsel %vm208, %v390, %v393
        %v435 = vsel %vm210, %v434, %v396
        %v436 = vsel %vm212, %v435, %v399
        %v437 = vsel %vm214, %v436, %v402
        %v438 = vsel %vm216, %v437, %v405
        %v439 = vsel %vm218, %v438, %v408
        %v440 = vsel %vm220, %v439, %v411
        %v441 = vsel %vm222, %v440, %v414
        %v442 = vsel %vm224, %v441, %v417
        %v443 = vsel %vm226, %v442, %v420
        %v444 = vsel %vm228, %v443, %v423
        %v445 = vsel %vm230, %v444, %v426
        %v446 = vsel %vm232, %v445, %v429
        %v447 = vsel %vm234, %v446, %v432
        %v448 = vsel %vm236, %v447, %v324
        %v451 = vcombine.low %v388, %v448
        %v453 = vunpack.c.l.s4 1966171168
        %v454 = vunpack.c.0.s8 %v453
        %v455 = vlaneseq
        %v456 = vshrl.u32 %v455, 7
        %v457 = vsub.s32 %v454, %v456
        %v458 = vrot.slane %v451, %v457
        %v460 = vunpack.c.l.s4 1966171168
        %v461 = vunpack.c.0.s8 %v460
        %v462 = vlaneseq
        %v463 = vshrl.u32 %v462, 7
        %v464 = vsub.s32 %v461, %v463
        %v465 = vrot.slane %v458, %v464
        %s467 = scalar_lea.vmem %s153, 8 [#allocation5]
        %468 = vst.msk [vmem:[%s467] ss:$4 sm:$0x3] %vm319, %v465
        %v469 = vld [vmem:[%s135 + $0x8] ss:$0 sm:$0xff]
        %v470 = vld [vmem:[%s135 + $0x9] ss:$0 sm:$0xff]
        %v471 = vld [vmem:[%s135 + $0xa] ss:$0 sm:$0xff]
        %v472 = vld [vmem:[%s135 + $0xb] ss:$0 sm:$0xff]
        %474 = vrot.lane.b32.xlu0 %v470, 8
        %v475 = vpop.permute.xlu0 %474
        %478 = vrot.lane.b32.xlu0 %v471, 16
        %v479 = vpop.permute.xlu0 %478
        %482 = vrot.lane.b32.xlu0 %v472, 24
        %v483 = vpop.permute.xlu0 %482
        %486 = vrot.lane.b32.xlu0 %v469, 24
        %v487 = vpop.permute.xlu0 %486
        %489 = vrot.lane.b32.xlu0 %v470, 32
        %v490 = vpop.permute.xlu0 %489
        %492 = vrot.lane.b32.xlu0 %v471, 40
        %v493 = vpop.permute.xlu0 %492
        %495 = vrot.lane.b32.xlu0 %v472, 48
        %v496 = vpop.permute.xlu0 %495
        %498 = vrot.lane.b32.xlu0 %v469, 48
        %v499 = vpop.permute.xlu0 %498
        %501 = vrot.lane.b32.xlu0 %v470, 56
        %v502 = vpop.permute.xlu0 %501
        %504 = vrot.lane.b32.xlu0 %v471, 64
        %v505 = vpop.permute.xlu0 %504
        %507 = vrot.lane.b32.xlu0 %v472, 72
        %v508 = vpop.permute.xlu0 %507
        %510 = vrot.lane.b32.xlu0 %v469, 72
        %v511 = vpop.permute.xlu0 %510
        %513 = vrot.lane.b32.xlu0 %v470, 80
        %v514 = vpop.permute.xlu0 %513
        %516 = vrot.lane.b32.xlu0 %v471, 88
        %v517 = vpop.permute.xlu0 %516
        %519 = vrot.lane.b32.xlu0 %v472, 96
        %v520 = vpop.permute.xlu0 %519
        %v522 = vsel %vm208, %v469, %v475
        %v523 = vsel %vm210, %v522, %v479
        %v524 = vsel %vm212, %v523, %v483
        %v525 = vsel %vm214, %v524, %v487
        %v526 = vsel %vm216, %v525, %v490
        %v527 = vsel %vm218, %v526, %v493
        %v528 = vsel %vm220, %v527, %v496
        %v529 = vsel %vm222, %v528, %v499
        %v530 = vsel %vm224, %v529, %v502
        %v531 = vsel %vm226, %v530, %v505
        %v532 = vsel %vm228, %v531, %v508
        %v533 = vsel %vm230, %v532, %v511
        %v534 = vsel %vm232, %v533, %v514
        %v535 = vsel %vm234, %v534, %v517
        %v536 = vsel %vm236, %v535, %v520
        %537 = vrot.lane.b32.xlu0 %v469, 96
        %v538 = vpop.permute.xlu0 %537
        %540 = vrot.lane.b32.xlu0 %v470, 104
        %v541 = vpop.permute.xlu0 %540
        %543 = vrot.lane.b32.xlu0 %v471, 112
        %v544 = vpop.permute.xlu0 %543
        %546 = vrot.lane.b32.xlu0 %v472, 120
        %v547 = vpop.permute.xlu0 %546
        %549 = vrot.lane.b32.xlu0 %v469, 120
        %v550 = vpop.permute.xlu0 %549
        %552 = vrot.lane.b32.xlu0 %v471, 8
        %v553 = vpop.permute.xlu0 %552
        %555 = vrot.lane.b32.xlu0 %v472, 16
        %v556 = vpop.permute.xlu0 %555
        %558 = vrot.lane.b32.xlu0 %v469, 16
        %v559 = vpop.permute.xlu0 %558
        %561 = vrot.lane.b32.xlu0 %v470, 24
        %v562 = vpop.permute.xlu0 %561
        %564 = vrot.lane.b32.xlu0 %v471, 32
        %v565 = vpop.permute.xlu0 %564
        %567 = vrot.lane.b32.xlu0 %v472, 40
        %v568 = vpop.permute.xlu0 %567
        %570 = vrot.lane.b32.xlu0 %v469, 40
        %v571 = vpop.permute.xlu0 %570
        %573 = vrot.lane.b32.xlu0 %v470, 48
        %v574 = vpop.permute.xlu0 %573
        %576 = vrot.lane.b32.xlu0 %v471, 56
        %v577 = vpop.permute.xlu0 %576
        %579 = vrot.lane.b32.xlu0 %v472, 64
        %v580 = vpop.permute.xlu0 %579
        %v582 = vsel %vm208, %v538, %v541
        %v583 = vsel %vm210, %v582, %v544
        %v584 = vsel %vm212, %v583, %v547
        %v585 = vsel %vm214, %v584, %v550
        %v586 = vsel %vm216, %v585, %v470
        %v587 = vsel %vm218, %v586, %v553
        %v588 = vsel %vm220, %v587, %v556
        %v589 = vsel %vm222, %v588, %v559
        %v590 = vsel %vm224, %v589, %v562
        %v591 = vsel %vm226, %v590, %v565
        %v592 = vsel %vm228, %v591, %v568
        %v593 = vsel %vm230, %v592, %v571
        %v594 = vsel %vm232, %v593, %v574
        %v595 = vsel %vm234, %v594, %v577
        %v596 = vsel %vm236, %v595, %v580
        %v599 = vcombine.low %v536, %v596
        %v601 = vunpack.c.l.s4 1966171168
        %v602 = vunpack.c.0.s8 %v601
        %v603 = vlaneseq
        %v604 = vshrl.u32 %v603, 7
        %v605 = vsub.s32 %v602, %v604
        %v606 = vrot.slane %v599, %v605
        %v608 = vunpack.c.l.s4 1966171168
        %v609 = vunpack.c.0.s8 %v608
        %v610 = vlaneseq
        %v611 = vshrl.u32 %v610, 7
        %v612 = vsub.s32 %v609, %v611
        %v613 = vrot.slane %v606, %v612
        %s615 = scalar_lea.vmem %s153, 16 [#allocation5]
        %616 = vst.msk [vmem:[%s615] ss:$4 sm:$0x3] %vm319, %v613
        %v617 = vld [vmem:[%s135 + $0x8] ss:$0 sm:$0xff]
        %v618 = vld [vmem:[%s135 + $0x9] ss:$0 sm:$0xff]
        %v619 = vld [vmem:[%s135 + $0xa] ss:$0 sm:$0xff]
        %v620 = vld [vmem:[%s135 + $0xb] ss:$0 sm:$0xff]
        %622 = vrot.lane.b32.xlu0 %v617, 64
        %v623 = vpop.permute.xlu0 %622
        %626 = vrot.lane.b32.xlu0 %v618, 72
        %v627 = vpop.permute.xlu0 %626
        %630 = vrot.lane.b32.xlu0 %v619, 80
        %v631 = vpop.permute.xlu0 %630
        %634 = vrot.lane.b32.xlu0 %v620, 88
        %v635 = vpop.permute.xlu0 %634
        %637 = vrot.lane.b32.xlu0 %v617, 88
        %v638 = vpop.permute.xlu0 %637
        %640 = vrot.lane.b32.xlu0 %v618, 96
        %v641 = vpop.permute.xlu0 %640
        %643 = vrot.lane.b32.xlu0 %v619, 104
        %v644 = vpop.permute.xlu0 %643
        %646 = vrot.lane.b32.xlu0 %v620, 112
        %v647 = vpop.permute.xlu0 %646
        %649 = vrot.lane.b32.xlu0 %v617, 112
        %v650 = vpop.permute.xlu0 %649
        %652 = vrot.lane.b32.xlu0 %v618, 120
        %v653 = vpop.permute.xlu0 %652
        %655 = vrot.lane.b32.xlu0 %v620, 8
        %v656 = vpop.permute.xlu0 %655
        %658 = vrot.lane.b32.xlu0 %v617, 8
        %v659 = vpop.permute.xlu0 %658
        %661 = vrot.lane.b32.xlu0 %v618, 16
        %v662 = vpop.permute.xlu0 %661
        %664 = vrot.lane.b32.xlu0 %v619, 24
        %v665 = vpop.permute.xlu0 %664
        %667 = vrot.lane.b32.xlu0 %v620, 32
        %v668 = vpop.permute.xlu0 %667
        %v670 = vsel %vm208, %v623, %v627
        %v671 = vsel %vm210, %v670, %v631
        %v672 = vsel %vm212, %v671, %v635
        %v673 = vsel %vm214, %v672, %v638
        %v674 = vsel %vm216, %v673, %v641
        %v675 = vsel %vm218, %v674, %v644
        %v676 = vsel %vm220, %v675, %v647
        %v677 = vsel %vm222, %v676, %v650
        %v678 = vsel %vm224, %v677, %v653
        %v679 = vsel %vm226, %v678, %v619
        %v680 = vsel %vm228, %v679, %v656
        %v681 = vsel %vm230, %v680, %v659
        %v682 = vsel %vm232, %v681, %v662
        %v683 = vsel %vm234, %v682, %v665
        %v684 = vsel %vm236, %v683, %v668
        %685 = vrot.lane.b32.xlu0 %v617, 32
        %v686 = vpop.permute.xlu0 %685
        %688 = vrot.lane.b32.xlu0 %v618, 40
        %v689 = vpop.permute.xlu0 %688
        %691 = vrot.lane.b32.xlu0 %v619, 48
        %v692 = vpop.permute.xlu0 %691
        %694 = vrot.lane.b32.xlu0 %v620, 56
        %v695 = vpop.permute.xlu0 %694
        %697 = vrot.lane.b32.xlu0 %v617, 56
        %v698 = vpop.permute.xlu0 %697
        %700 = vrot.lane.b32.xlu0 %v618, 64
        %v701 = vpop.permute.xlu0 %700
        %703 = vrot.lane.b32.xlu0 %v619, 72
        %v704 = vpop.permute.xlu0 %703
        %706 = vrot.lane.b32.xlu0 %v620, 80
        %v707 = vpop.permute.xlu0 %706
        %709 = vrot.lane.b32.xlu0 %v617, 80
        %v710 = vpop.permute.xlu0 %709
        %712 = vrot.lane.b32.xlu0 %v618, 88
        %v713 = vpop.permute.xlu0 %712
        %715 = vrot.lane.b32.xlu0 %v619, 96
        %v716 = vpop.permute.xlu0 %715
        %718 = vrot.lane.b32.xlu0 %v620, 104
        %v719 = vpop.permute.xlu0 %718
        %721 = vrot.lane.b32.xlu0 %v617, 104
        %v722 = vpop.permute.xlu0 %721
        %724 = vrot.lane.b32.xlu0 %v618, 112
        %v725 = vpop.permute.xlu0 %724
        %727 = vrot.lane.b32.xlu0 %v619, 120
        %v728 = vpop.permute.xlu0 %727
        %v730 = vsel %vm208, %v686, %v689
        %v731 = vsel %vm210, %v730, %v692
        %v732 = vsel %vm212, %v731, %v695
        %v733 = vsel %vm214, %v732, %v698
        %v734 = vsel %vm216, %v733, %v701
        %v735 = vsel %vm218, %v734, %v704
        %v736 = vsel %vm220, %v735, %v707
        %v737 = vsel %vm222, %v736, %v710
        %v738 = vsel %vm224, %v737, %v713
        %v739 = vsel %vm226, %v738, %v716
        %v740 = vsel %vm228, %v739, %v719
        %v741 = vsel %vm230, %v740, %v722
        %v742 = vsel %vm232, %v741, %v725
        %v743 = vsel %vm234, %v742, %v728
        %v744 = vsel %vm236, %v743, %v620
        %v747 = vcombine.low %v684, %v744
        %v749 = vunpack.c.l.s4 1966171168
        %v750 = vunpack.c.0.s8 %v749
        %v751 = vlaneseq
        %v752 = vshrl.u32 %v751, 7
        %v753 = vsub.s32 %v750, %v752
        %v754 = vrot.slane %v747, %v753
        %v756 = vunpack.c.l.s4 1966171168
        %v757 = vunpack.c.0.s8 %v756
        %v758 = vlaneseq
        %v759 = vshrl.u32 %v758, 7
        %v760 = vsub.s32 %v757, %v759
        %v761 = vrot.slane %v754, %v760
        %s763 = scalar_lea.vmem %s153, 24 [#allocation5]
        %764 = vst.msk [vmem:[%s763] ss:$4 sm:$0x3] %vm319, %v761
        %v765 = vld [vmem:[%s135 + $0x4] ss:$0 sm:$0xff]
        %v766 = vld [vmem:[%s135 + $0x5] ss:$0 sm:$0xff]
        %v767 = vld [vmem:[%s135 + $0x6] ss:$0 sm:$0xff]
        %v768 = vld [vmem:[%s135 + $0x7] ss:$0 sm:$0xff]
        %770 = vrot.lane.b32.xlu0 %v766, 8
        %v771 = vpop.permute.xlu0 %770
        %774 = vrot.lane.b32.xlu0 %v767, 16
        %v775 = vpop.permute.xlu0 %774
        %778 = vrot.lane.b32.xlu0 %v768, 24
        %v779 = vpop.permute.xlu0 %778
        %782 = vrot.lane.b32.xlu0 %v765, 24
        %v783 = vpop.permute.xlu0 %782
        %785 = vrot.lane.b32.xlu0 %v766, 32
        %v786 = vpop.permute.xlu0 %785
        %788 = vrot.lane.b32.xlu0 %v767, 40
        %v789 = vpop.permute.xlu0 %788
        %791 = vrot.lane.b32.xlu0 %v768, 48
        %v792 = vpop.permute.xlu0 %791
        %794 = vrot.lane.b32.xlu0 %v765, 48
        %v795 = vpop.permute.xlu0 %794
        %797 = vrot.lane.b32.xlu0 %v766, 56
        %v798 = vpop.permute.xlu0 %797
        %800 = vrot.lane.b32.xlu0 %v767, 64
        %v801 = vpop.permute.xlu0 %800
        %803 = vrot.lane.b32.xlu0 %v768, 72
        %v804 = vpop.permute.xlu0 %803
        %806 = vrot.lane.b32.xlu0 %v765, 72
        %v807 = vpop.permute.xlu0 %806
        %809 = vrot.lane.b32.xlu0 %v766, 80
        %v810 = vpop.permute.xlu0 %809
        %812 = vrot.lane.b32.xlu0 %v767, 88
        %v813 = vpop.permute.xlu0 %812
        %815 = vrot.lane.b32.xlu0 %v768, 96
        %v816 = vpop.permute.xlu0 %815
        %v818 = vsel %vm208, %v765, %v771
        %v819 = vsel %vm210, %v818, %v775
        %v820 = vsel %vm212, %v819, %v779
        %v821 = vsel %vm214, %v820, %v783
        %v822 = vsel %vm216, %v821, %v786
        %v823 = vsel %vm218, %v822, %v789
        %v824 = vsel %vm220, %v823, %v792
        %v825 = vsel %vm222, %v824, %v795
        %v826 = vsel %vm224, %v825, %v798
        %v827 = vsel %vm226, %v826, %v801
        %v828 = vsel %vm228, %v827, %v804
        %v829 = vsel %vm230, %v828, %v807
        %v830 = vsel %vm232, %v829, %v810
        %v831 = vsel %vm234, %v830, %v813
        %v832 = vsel %vm236, %v831, %v816
        %833 = vrot.lane.b32.xlu0 %v765, 96
        %v834 = vpop.permute.xlu0 %833
        %836 = vrot.lane.b32.xlu0 %v766, 104
        %v837 = vpop.permute.xlu0 %836
        %839 = vrot.lane.b32.xlu0 %v767, 112
        %v840 = vpop.permute.xlu0 %839
        %842 = vrot.lane.b32.xlu0 %v768, 120
        %v843 = vpop.permute.xlu0 %842
        %845 = vrot.lane.b32.xlu0 %v765, 120
        %v846 = vpop.permute.xlu0 %845
        %848 = vrot.lane.b32.xlu0 %v767, 8
        %v849 = vpop.permute.xlu0 %848
        %851 = vrot.lane.b32.xlu0 %v768, 16
        %v852 = vpop.permute.xlu0 %851
        %854 = vrot.lane.b32.xlu0 %v765, 16
        %v855 = vpop.permute.xlu0 %854
        %857 = vrot.lane.b32.xlu0 %v766, 24
        %v858 = vpop.permute.xlu0 %857
        %860 = vrot.lane.b32.xlu0 %v767, 32
        %v861 = vpop.permute.xlu0 %860
        %863 = vrot.lane.b32.xlu0 %v768, 40
        %v864 = vpop.permute.xlu0 %863
        %866 = vrot.lane.b32.xlu0 %v765, 40
        %v867 = vpop.permute.xlu0 %866
        %869 = vrot.lane.b32.xlu0 %v766, 48
        %v870 = vpop.permute.xlu0 %869
        %872 = vrot.lane.b32.xlu0 %v767, 56
        %v873 = vpop.permute.xlu0 %872
        %875 = vrot.lane.b32.xlu0 %v768, 64
        %v876 = vpop.permute.xlu0 %875
        %v878 = vsel %vm208, %v834, %v837
        %v879 = vsel %vm210, %v878, %v840
        %v880 = vsel %vm212, %v879, %v843
        %v881 = vsel %vm214, %v880, %v846
        %v882 = vsel %vm216, %v881, %v766
        %v883 = vsel %vm218, %v882, %v849
        %v884 = vsel %vm220, %v883, %v852
        %v885 = vsel %vm222, %v884, %v855
        %v886 = vsel %vm224, %v885, %v858
        %v887 = vsel %vm226, %v886, %v861
        %v888 = vsel %vm228, %v887, %v864
        %v889 = vsel %vm230, %v888, %v867
        %v890 = vsel %vm232, %v889, %v870
        %v891 = vsel %vm234, %v890, %v873
        %v892 = vsel %vm236, %v891, %v876
        %v895 = vcombine.low %v832, %v892
        %v897 = vunpack.c.l.s4 1966171168
        %v898 = vunpack.c.0.s8 %v897
        %v899 = vlaneseq
        %v900 = vshrl.u32 %v899, 7
        %v901 = vsub.s32 %v898, %v900
        %v902 = vrot.slane %v895, %v901
        %v904 = vunpack.c.l.s4 1966171168
        %v905 = vunpack.c.0.s8 %v904
        %v906 = vlaneseq
        %v907 = vshrl.u32 %v906, 7
        %v908 = vsub.s32 %v905, %v907
        %v909 = vrot.slane %v902, %v908
        %s911 = scalar_lea.vmem %s153, 1 [#allocation5]
        %912 = vst.msk [vmem:[%s911] ss:$4 sm:$0x3] %vm319, %v909
        %v913 = vld [vmem:[%s135 + $0x4] ss:$0 sm:$0xff]
        %v914 = vld [vmem:[%s135 + $0x5] ss:$0 sm:$0xff]
        %v915 = vld [vmem:[%s135 + $0x6] ss:$0 sm:$0xff]
        %v916 = vld [vmem:[%s135 + $0x7] ss:$0 sm:$0xff]
        %918 = vrot.lane.b32.xlu0 %v913, 64
        %v919 = vpop.permute.xlu0 %918
        %922 = vrot.lane.b32.xlu0 %v914, 72
        %v923 = vpop.permute.xlu0 %922
        %926 = vrot.lane.b32.xlu0 %v915, 80
        %v927 = vpop.permute.xlu0 %926
        %930 = vrot.lane.b32.xlu0 %v916, 88
        %v931 = vpop.permute.xlu0 %930
        %933 = vrot.lane.b32.xlu0 %v913, 88
        %v934 = vpop.permute.xlu0 %933
        %936 = vrot.lane.b32.xlu0 %v914, 96
        %v937 = vpop.permute.xlu0 %936
        %939 = vrot.lane.b32.xlu0 %v915, 104
        %v940 = vpop.permute.xlu0 %939
        %942 = vrot.lane.b32.xlu0 %v916, 112
        %v943 = vpop.permute.xlu0 %942
        %945 = vrot.lane.b32.xlu0 %v913, 112
        %v946 = vpop.permute.xlu0 %945
        %948 = vrot.lane.b32.xlu0 %v914, 120
        %v949 = vpop.permute.xlu0 %948
        %951 = vrot.lane.b32.xlu0 %v916, 8
        %v952 = vpop.permute.xlu0 %951
        %954 = vrot.lane.b32.xlu0 %v913, 8
        %v955 = vpop.permute.xlu0 %954
        %957 = vrot.lane.b32.xlu0 %v914, 16
        %v958 = vpop.permute.xlu0 %957
        %960 = vrot.lane.b32.xlu0 %v915, 24
        %v961 = vpop.permute.xlu0 %960
        %963 = vrot.lane.b32.xlu0 %v916, 32
        %v964 = vpop.permute.xlu0 %963
        %v966 = vsel %vm208, %v919, %v923
        %v967 = vsel %vm210, %v966, %v927
        %v968 = vsel %vm212, %v967, %v931
        %v969 = vsel %vm214, %v968, %v934
        %v970 = vsel %vm216, %v969, %v937
        %v971 = vsel %vm218, %v970, %v940
        %v972 = vsel %vm220, %v971, %v943
        %v973 = vsel %vm222, %v972, %v946
        %v974 = vsel %vm224, %v973, %v949
        %v975 = vsel %vm226, %v974, %v915
        %v976 = vsel %vm228, %v975, %v952
        %v977 = vsel %vm230, %v976, %v955
        %v978 = vsel %vm232, %v977, %v958
        %v979 = vsel %vm234, %v978, %v961
        %v980 = vsel %vm236, %v979, %v964
        %981 = vrot.lane.b32.xlu0 %v913, 32
        %v982 = vpop.permute.xlu0 %981
        %984 = vrot.lane.b32.xlu0 %v914, 40
        %v985 = vpop.permute.xlu0 %984
        %987 = vrot.lane.b32.xlu0 %v915, 48
        %v988 = vpop.permute.xlu0 %987
        %990 = vrot.lane.b32.xlu0 %v916, 56
        %v991 = vpop.permute.xlu0 %990
        %993 = vrot.lane.b32.xlu0 %v913, 56
        %v994 = vpop.permute.xlu0 %993
        %996 = vrot.lane.b32.xlu0 %v914, 64
        %v997 = vpop.permute.xlu0 %996
        %999 = vrot.lane.b32.xlu0 %v915, 72
        %v1000 = vpop.permute.xlu0 %999
        %1002 = vrot.lane.b32.xlu0 %v916, 80
        %v1003 = vpop.permute.xlu0 %1002
        %1005 = vrot.lane.b32.xlu0 %v913, 80
        %v1006 = vpop.permute.xlu0 %1005
        %1008 = vrot.lane.b32.xlu0 %v914, 88
        %v1009 = vpop.permute.xlu0 %1008
        %1011 = vrot.lane.b32.xlu0 %v915, 96
        %v1012 = vpop.permute.xlu0 %1011
        %1014 = vrot.lane.b32.xlu0 %v916, 104
        %v1015 = vpop.permute.xlu0 %1014
        %1017 = vrot.lane.b32.xlu0 %v913, 104
        %v1018 = vpop.permute.xlu0 %1017
        %1020 = vrot.lane.b32.xlu0 %v914, 112
        %v1021 = vpop.permute.xlu0 %1020
        %1023 = vrot.lane.b32.xlu0 %v915, 120
        %v1024 = vpop.permute.xlu0 %1023
        %v1026 = vsel %vm208, %v982, %v985
        %v1027 = vsel %vm210, %v1026, %v988
        %v1028 = vsel %vm212, %v1027, %v991
        %v1029 = vsel %vm214, %v1028, %v994
        %v1030 = vsel %vm216, %v1029, %v997
        %v1031 = vsel %vm218, %v1030, %v1000
        %v1032 = vsel %vm220, %v1031, %v1003
        %v1033 = vsel %vm222, %v1032, %v1006
        %v1034 = vsel %vm224, %v1033, %v1009
        %v1035 = vsel %vm226, %v1034, %v1012
        %v1036 = vsel %vm228, %v1035, %v1015
        %v1037 = vsel %vm230, %v1036, %v1018
        %v1038 = vsel %vm232, %v1037, %v1021
        %v1039 = vsel %vm234, %v1038, %v1024
        %v1040 = vsel %vm236, %v1039, %v916
        %v1043 = vcombine.low %v980, %v1040
        %v1045 = vunpack.c.l.s4 1966171168
        %v1046 = vunpack.c.0.s8 %v1045
        %v1047 = vlaneseq
        %v1048 = vshrl.u32 %v1047, 7
        %v1049 = vsub.s32 %v1046, %v1048
        %v1050 = vrot.slane %v1043, %v1049
        %v1052 = vunpack.c.l.s4 1966171168
        %v1053 = vunpack.c.0.s8 %v1052
        %v1054 = vlaneseq
        %v1055 = vshrl.u32 %v1054, 7
        %v1056 = vsub.s32 %v1053, %v1055
        %v1057 = vrot.slane %v1050, %v1056
        %s1059 = scalar_lea.vmem %s467, 1 [#allocation5]
        %1060 = vst.msk [vmem:[%s1059] ss:$4 sm:$0x3] %vm319, %v1057
        %v1061 = vld [vmem:[%s135 + $0xc] ss:$0 sm:$0xff]
        %v1062 = vld [vmem:[%s135 + $0xd] ss:$0 sm:$0xff]
        %v1063 = vld [vmem:[%s135 + $0xe] ss:$0 sm:$0xff]
        %v1064 = vld [vmem:[%s135 + $0xf] ss:$0 sm:$0xff]
        %1066 = vrot.lane.b32.xlu0 %v1062, 8
        %v1067 = vpop.permute.xlu0 %1066
        %1070 = vrot.lane.b32.xlu0 %v1063, 16
        %v1071 = vpop.permute.xlu0 %1070
        %1074 = vrot.lane.b32.xlu0 %v1064, 24
        %v1075 = vpop.permute.xlu0 %1074
        %1078 = vrot.lane.b32.xlu0 %v1061, 24
        %v1079 = vpop.permute.xlu0 %1078
        %1081 = vrot.lane.b32.xlu0 %v1062, 32
        %v1082 = vpop.permute.xlu0 %1081
        %1084 = vrot.lane.b32.xlu0 %v1063, 40
        %v1085 = vpop.permute.xlu0 %1084
        %1087 = vrot.lane.b32.xlu0 %v1064, 48
        %v1088 = vpop.permute.xlu0 %1087
        %1090 = vrot.lane.b32.xlu0 %v1061, 48
        %v1091 = vpop.permute.xlu0 %1090
        %1093 = vrot.lane.b32.xlu0 %v1062, 56
        %v1094 = vpop.permute.xlu0 %1093
        %1096 = vrot.lane.b32.xlu0 %v1063, 64
        %v1097 = vpop.permute.xlu0 %1096
        %1099 = vrot.lane.b32.xlu0 %v1064, 72
        %v1100 = vpop.permute.xlu0 %1099
        %1102 = vrot.lane.b32.xlu0 %v1061, 72
        %v1103 = vpop.permute.xlu0 %1102
        %1105 = vrot.lane.b32.xlu0 %v1062, 80
        %v1106 = vpop.permute.xlu0 %1105
        %1108 = vrot.lane.b32.xlu0 %v1063, 88
        %v1109 = vpop.permute.xlu0 %1108
        %1111 = vrot.lane.b32.xlu0 %v1064, 96
        %v1112 = vpop.permute.xlu0 %1111
        %v1114 = vsel %vm208, %v1061, %v1067
        %v1115 = vsel %vm210, %v1114, %v1071
        %v1116 = vsel %vm212, %v1115, %v1075
        %v1117 = vsel %vm214, %v1116, %v1079
        %v1118 = vsel %vm216, %v1117, %v1082
        %v1119 = vsel %vm218, %v1118, %v1085
        %v1120 = vsel %vm220, %v1119, %v1088
        %v1121 = vsel %vm222, %v1120, %v1091
        %v1122 = vsel %vm224, %v1121, %v1094
        %v1123 = vsel %vm226, %v1122, %v1097
        %v1124 = vsel %vm228, %v1123, %v1100
        %v1125 = vsel %vm230, %v1124, %v1103
        %v1126 = vsel %vm232, %v1125, %v1106
        %v1127 = vsel %vm234, %v1126, %v1109
        %v1128 = vsel %vm236, %v1127, %v1112
        %1129 = vrot.lane.b32.xlu0 %v1061, 96
        %v1130 = vpop.permute.xlu0 %1129
        %1132 = vrot.lane.b32.xlu0 %v1062, 104
        %v1133 = vpop.permute.xlu0 %1132
        %1135 = vrot.lane.b32.xlu0 %v1063, 112
        %v1136 = vpop.permute.xlu0 %1135
        %1138 = vrot.lane.b32.xlu0 %v1064, 120
        %v1139 = vpop.permute.xlu0 %1138
        %1141 = vrot.lane.b32.xlu0 %v1061, 120
        %v1142 = vpop.permute.xlu0 %1141
        %1144 = vrot.lane.b32.xlu0 %v1063, 8
        %v1145 = vpop.permute.xlu0 %1144
        %1147 = vrot.lane.b32.xlu0 %v1064, 16
        %v1148 = vpop.permute.xlu0 %1147
        %1150 = vrot.lane.b32.xlu0 %v1061, 16
        %v1151 = vpop.permute.xlu0 %1150
        %1153 = vrot.lane.b32.xlu0 %v1062, 24
        %v1154 = vpop.permute.xlu0 %1153
        %1156 = vrot.lane.b32.xlu0 %v1063, 32
        %v1157 = vpop.permute.xlu0 %1156
        %1159 = vrot.lane.b32.xlu0 %v1064, 40
        %v1160 = vpop.permute.xlu0 %1159
        %1162 = vrot.lane.b32.xlu0 %v1061, 40
        %v1163 = vpop.permute.xlu0 %1162
        %1165 = vrot.lane.b32.xlu0 %v1062, 48
        %v1166 = vpop.permute.xlu0 %1165
        %1168 = vrot.lane.b32.xlu0 %v1063, 56
        %v1169 = vpop.permute.xlu0 %1168
        %1171 = vrot.lane.b32.xlu0 %v1064, 64
        %v1172 = vpop.permute.xlu0 %1171
        %v1174 = vsel %vm208, %v1130, %v1133
        %v1175 = vsel %vm210, %v1174, %v1136
        %v1176 = vsel %vm212, %v1175, %v1139
        %v1177 = vsel %vm214, %v1176, %v1142
        %v1178 = vsel %vm216, %v1177, %v1062
        %v1179 = vsel %vm218, %v1178, %v1145
        %v1180 = vsel %vm220, %v1179, %v1148
        %v1181 = vsel %vm222, %v1180, %v1151
        %v1182 = vsel %vm224, %v1181, %v1154
        %v1183 = vsel %vm226, %v1182, %v1157
        %v1184 = vsel %vm228, %v1183, %v1160
        %v1185 = vsel %vm230, %v1184, %v1163
        %v1186 = vsel %vm232, %v1185, %v1166
        %v1187 = vsel %vm234, %v1186, %v1169
        %v1188 = vsel %vm236, %v1187, %v1172
        %v1191 = vcombine.low %v1128, %v1188
        %v1193 = vunpack.c.l.s4 1966171168
        %v1194 = vunpack.c.0.s8 %v1193
        %v1195 = vlaneseq
        %v1196 = vshrl.u32 %v1195, 7
        %v1197 = vsub.s32 %v1194, %v1196
        %v1198 = vrot.slane %v1191, %v1197
        %v1200 = vunpack.c.l.s4 1966171168
        %v1201 = vunpack.c.0.s8 %v1200
        %v1202 = vlaneseq
        %v1203 = vshrl.u32 %v1202, 7
        %v1204 = vsub.s32 %v1201, %v1203
        %v1205 = vrot.slane %v1198, %v1204
        %s1207 = scalar_lea.vmem %s615, 1 [#allocation5]
        %1208 = vst.msk [vmem:[%s1207] ss:$4 sm:$0x3] %vm319, %v1205
        %v1209 = vld [vmem:[%s135 + $0xc] ss:$0 sm:$0xff]
        %v1210 = vld [vmem:[%s135 + $0xd] ss:$0 sm:$0xff]
        %v1211 = vld [vmem:[%s135 + $0xe] ss:$0 sm:$0xff]
        %v1212 = vld [vmem:[%s135 + $0xf] ss:$0 sm:$0xff]
        %1214 = vrot.lane.b32.xlu0 %v1209, 64
        %v1215 = vpop.permute.xlu0 %1214
        %1218 = vrot.lane.b32.xlu0 %v1210, 72
        %v1219 = vpop.permute.xlu0 %1218
        %1222 = vrot.lane.b32.xlu0 %v1211, 80
        %v1223 = vpop.permute.xlu0 %1222
        %1226 = vrot.lane.b32.xlu0 %v1212, 88
        %v1227 = vpop.permute.xlu0 %1226
        %1229 = vrot.lane.b32.xlu0 %v1209, 88
        %v1230 = vpop.permute.xlu0 %1229
        %1232 = vrot.lane.b32.xlu0 %v1210, 96
        %v1233 = vpop.permute.xlu0 %1232
        %1235 = vrot.lane.b32.xlu0 %v1211, 104
        %v1236 = vpop.permute.xlu0 %1235
        %1238 = vrot.lane.b32.xlu0 %v1212, 112
        %v1239 = vpop.permute.xlu0 %1238
        %1241 = vrot.lane.b32.xlu0 %v1209, 112
        %v1242 = vpop.permute.xlu0 %1241
        %1244 = vrot.lane.b32.xlu0 %v1210, 120
        %v1245 = vpop.permute.xlu0 %1244
        %1247 = vrot.lane.b32.xlu0 %v1212, 8
        %v1248 = vpop.permute.xlu0 %1247
        %1250 = vrot.lane.b32.xlu0 %v1209, 8
        %v1251 = vpop.permute.xlu0 %1250
        %1253 = vrot.lane.b32.xlu0 %v1210, 16
        %v1254 = vpop.permute.xlu0 %1253
        %1256 = vrot.lane.b32.xlu0 %v1211, 24
        %v1257 = vpop.permute.xlu0 %1256
        %1259 = vrot.lane.b32.xlu0 %v1212, 32
        %v1260 = vpop.permute.xlu0 %1259
        %v1262 = vsel %vm208, %v1215, %v1219
        %v1263 = vsel %vm210, %v1262, %v1223
        %v1264 = vsel %vm212, %v1263, %v1227
        %v1265 = vsel %vm214, %v1264, %v1230
        %v1266 = vsel %vm216, %v1265, %v1233
        %v1267 = vsel %vm218, %v1266, %v1236
        %v1268 = vsel %vm220, %v1267, %v1239
        %v1269 = vsel %vm222, %v1268, %v1242
        %v1270 = vsel %vm224, %v1269, %v1245
        %v1271 = vsel %vm226, %v1270, %v1211
        %v1272 = vsel %vm228, %v1271, %v1248
        %v1273 = vsel %vm230, %v1272, %v1251
        %v1274 = vsel %vm232, %v1273, %v1254
        %v1275 = vsel %vm234, %v1274, %v1257
        %v1276 = vsel %vm236, %v1275, %v1260
        %1277 = vrot.lane.b32.xlu0 %v1209, 32
        %v1278 = vpop.permute.xlu0 %1277
        %1280 = vrot.lane.b32.xlu0 %v1210, 40
        %v1281 = vpop.permute.xlu0 %1280
        %1283 = vrot.lane.b32.xlu0 %v1211, 48
        %v1284 = vpop.permute.xlu0 %1283
        %1286 = vrot.lane.b32.xlu0 %v1212, 56
        %v1287 = vpop.permute.xlu0 %1286
        %1289 = vrot.lane.b32.xlu0 %v1209, 56
        %v1290 = vpop.permute.xlu0 %1289
        %1292 = vrot.lane.b32.xlu0 %v1210, 64
        %v1293 = vpop.permute.xlu0 %1292
        %1295 = vrot.lane.b32.xlu0 %v1211, 72
        %v1296 = vpop.permute.xlu0 %1295
        %1298 = vrot.lane.b32.xlu0 %v1212, 80
        %v1299 = vpop.permute.xlu0 %1298
        %1301 = vrot.lane.b32.xlu0 %v1209, 80
        %v1302 = vpop.permute.xlu0 %1301
        %1304 = vrot.lane.b32.xlu0 %v1210, 88
        %v1305 = vpop.permute.xlu0 %1304
        %1307 = vrot.lane.b32.xlu0 %v1211, 96
        %v1308 = vpop.permute.xlu0 %1307
        %1310 = vrot.lane.b32.xlu0 %v1212, 104
        %v1311 = vpop.permute.xlu0 %1310
        %1313 = vrot.lane.b32.xlu0 %v1209, 104
        %v1314 = vpop.permute.xlu0 %1313
        %1316 = vrot.lane.b32.xlu0 %v1210, 112
        %v1317 = vpop.permute.xlu0 %1316
        %1319 = vrot.lane.b32.xlu0 %v1211, 120
        %v1320 = vpop.permute.xlu0 %1319
        %v1322 = vsel %vm208, %v1278, %v1281
        %v1323 = vsel %vm210, %v1322, %v1284
        %v1324 = vsel %vm212, %v1323, %v1287
        %v1325 = vsel %vm214, %v1324, %v1290
        %v1326 = vsel %vm216, %v1325, %v1293
        %v1327 = vsel %vm218, %v1326, %v1296
        %v1328 = vsel %vm220, %v1327, %v1299
        %v1329 = vsel %vm222, %v1328, %v1302
        %v1330 = vsel %vm224, %v1329, %v1305
        %v1331 = vsel %vm226, %v1330, %v1308
        %v1332 = vsel %vm228, %v1331, %v1311
        %v1333 = vsel %vm230, %v1332, %v1314
        %v1334 = vsel %vm232, %v1333, %v1317
        %v1335 = vsel %vm234, %v1334, %v1320
        %v1336 = vsel %vm236, %v1335, %v1212
        %v1339 = vcombine.low %v1276, %v1336
        %v1341 = vunpack.c.l.s4 1966171168
        %v1342 = vunpack.c.0.s8 %v1341
        %v1343 = vlaneseq
        %v1344 = vshrl.u32 %v1343, 7
        %v1345 = vsub.s32 %v1342, %v1344
        %v1346 = vrot.slane %v1339, %v1345
        %v1348 = vunpack.c.l.s4 1966171168
        %v1349 = vunpack.c.0.s8 %v1348
        %v1350 = vlaneseq
        %v1351 = vshrl.u32 %v1350, 7
        %v1352 = vsub.s32 %v1349, %v1351
        %v1353 = vrot.slane %v1346, %v1352
        %s1355 = scalar_lea.vmem %s763, 1 [#allocation5]
        %1356 = vst.msk [vmem:[%s1355] ss:$4 sm:$0x3] %vm319, %v1353
        %v1357 = vld [vmem:[%s135 + $0x10] ss:$0 sm:$0xff]
        %v1358 = vld [vmem:[%s135 + $0x11] ss:$0 sm:$0xff]
        %v1359 = vld [vmem:[%s135 + $0x12] ss:$0 sm:$0xff]
        %v1360 = vld [vmem:[%s135 + $0x13] ss:$0 sm:$0xff]
        %1362 = vrot.lane.b32.xlu0 %v1358, 8
        %v1363 = vpop.permute.xlu0 %1362
        %1366 = vrot.lane.b32.xlu0 %v1359, 16
        %v1367 = vpop.permute.xlu0 %1366
        %1370 = vrot.lane.b32.xlu0 %v1360, 24
        %v1371 = vpop.permute.xlu0 %1370
        %1374 = vrot.lane.b32.xlu0 %v1357, 24
        %v1375 = vpop.permute.xlu0 %1374
        %1377 = vrot.lane.b32.xlu0 %v1358, 32
        %v1378 = vpop.permute.xlu0 %1377
        %1380 = vrot.lane.b32.xlu0 %v1359, 40
        %v1381 = vpop.permute.xlu0 %1380
        %1383 = vrot.lane.b32.xlu0 %v1360, 48
        %v1384 = vpop.permute.xlu0 %1383
        %1386 = vrot.lane.b32.xlu0 %v1357, 48
        %v1387 = vpop.permute.xlu0 %1386
        %1389 = vrot.lane.b32.xlu0 %v1358, 56
        %v1390 = vpop.permute.xlu0 %1389
        %1392 = vrot.lane.b32.xlu0 %v1359, 64
        %v1393 = vpop.permute.xlu0 %1392
        %1395 = vrot.lane.b32.xlu0 %v1360, 72
        %v1396 = vpop.permute.xlu0 %1395
        %1398 = vrot.lane.b32.xlu0 %v1357, 72
        %v1399 = vpop.permute.xlu0 %1398
        %1401 = vrot.lane.b32.xlu0 %v1358, 80
        %v1402 = vpop.permute.xlu0 %1401
        %1404 = vrot.lane.b32.xlu0 %v1359, 88
        %v1405 = vpop.permute.xlu0 %1404
        %1407 = vrot.lane.b32.xlu0 %v1360, 96
        %v1408 = vpop.permute.xlu0 %1407
        %v1410 = vsel %vm208, %v1357, %v1363
        %v1411 = vsel %vm210, %v1410, %v1367
        %v1412 = vsel %vm212, %v1411, %v1371
        %v1413 = vsel %vm214, %v1412, %v1375
        %v1414 = vsel %vm216, %v1413, %v1378
        %v1415 = vsel %vm218, %v1414, %v1381
        %v1416 = vsel %vm220, %v1415, %v1384
        %v1417 = vsel %vm222, %v1416, %v1387
        %v1418 = vsel %vm224, %v1417, %v1390
        %v1419 = vsel %vm226, %v1418, %v1393
        %v1420 = vsel %vm228, %v1419, %v1396
        %v1421 = vsel %vm230, %v1420, %v1399
        %v1422 = vsel %vm232, %v1421, %v1402
        %v1423 = vsel %vm234, %v1422, %v1405
        %v1424 = vsel %vm236, %v1423, %v1408
        %1425 = vrot.lane.b32.xlu0 %v1357, 96
        %v1426 = vpop.permute.xlu0 %1425
        %1428 = vrot.lane.b32.xlu0 %v1358, 104
        %v1429 = vpop.permute.xlu0 %1428
        %1431 = vrot.lane.b32.xlu0 %v1359, 112
        %v1432 = vpop.permute.xlu0 %1431
        %1434 = vrot.lane.b32.xlu0 %v1360, 120
        %v1435 = vpop.permute.xlu0 %1434
        %1437 = vrot.lane.b32.xlu0 %v1357, 120
        %v1438 = vpop.permute.xlu0 %1437
        %1440 = vrot.lane.b32.xlu0 %v1359, 8
        %v1441 = vpop.permute.xlu0 %1440
        %1443 = vrot.lane.b32.xlu0 %v1360, 16
        %v1444 = vpop.permute.xlu0 %1443
        %1446 = vrot.lane.b32.xlu0 %v1357, 16
        %v1447 = vpop.permute.xlu0 %1446
        %1449 = vrot.lane.b32.xlu0 %v1358, 24
        %v1450 = vpop.permute.xlu0 %1449
        %1452 = vrot.lane.b32.xlu0 %v1359, 32
        %v1453 = vpop.permute.xlu0 %1452
        %1455 = vrot.lane.b32.xlu0 %v1360, 40
        %v1456 = vpop.permute.xlu0 %1455
        %1458 = vrot.lane.b32.xlu0 %v1357, 40
        %v1459 = vpop.permute.xlu0 %1458
        %1461 = vrot.lane.b32.xlu0 %v1358, 48
        %v1462 = vpop.permute.xlu0 %1461
        %1464 = vrot.lane.b32.xlu0 %v1359, 56
        %v1465 = vpop.permute.xlu0 %1464
        %1467 = vrot.lane.b32.xlu0 %v1360, 64
        %v1468 = vpop.permute.xlu0 %1467
        %v1470 = vsel %vm208, %v1426, %v1429
        %v1471 = vsel %vm210, %v1470, %v1432
        %v1472 = vsel %vm212, %v1471, %v1435
        %v1473 = vsel %vm214, %v1472, %v1438
        %v1474 = vsel %vm216, %v1473, %v1358
        %v1475 = vsel %vm218, %v1474, %v1441
        %v1476 = vsel %vm220, %v1475, %v1444
        %v1477 = vsel %vm222, %v1476, %v1447
        %v1478 = vsel %vm224, %v1477, %v1450
        %v1479 = vsel %vm226, %v1478, %v1453
        %v1480 = vsel %vm228, %v1479, %v1456
        %v1481 = vsel %vm230, %v1480, %v1459
        %v1482 = vsel %vm232, %v1481, %v1462
        %v1483 = vsel %vm234, %v1482, %v1465
        %v1484 = vsel %vm236, %v1483, %v1468
        %v1487 = vcombine.low %v1424, %v1484
        %v1489 = vunpack.c.l.s4 1966171168
        %v1490 = vunpack.c.0.s8 %v1489
        %v1491 = vlaneseq
        %v1492 = vshrl.u32 %v1491, 7
        %v1493 = vsub.s32 %v1490, %v1492
        %v1494 = vrot.slane %v1487, %v1493
        %v1496 = vunpack.c.l.s4 1966171168
        %v1497 = vunpack.c.0.s8 %v1496
        %v1498 = vlaneseq
        %v1499 = vshrl.u32 %v1498, 7
        %v1500 = vsub.s32 %v1497, %v1499
        %v1501 = vrot.slane %v1494, %v1500
        %s1503 = scalar_lea.vmem %s153, 2 [#allocation5]
        %1504 = vst.msk [vmem:[%s1503] ss:$4 sm:$0x3] %vm319, %v1501
        %v1505 = vld [vmem:[%s135 + $0x10] ss:$0 sm:$0xff]
        %v1506 = vld [vmem:[%s135 + $0x11] ss:$0 sm:$0xff]
        %v1507 = vld [vmem:[%s135 + $0x12] ss:$0 sm:$0xff]
        %v1508 = vld [vmem:[%s135 + $0x13] ss:$0 sm:$0xff]
        %1510 = vrot.lane.b32.xlu0 %v1505, 64
        %v1511 = vpop.permute.xlu0 %1510
        %1514 = vrot.lane.b32.xlu0 %v1506, 72
        %v1515 = vpop.permute.xlu0 %1514
        %1518 = vrot.lane.b32.xlu0 %v1507, 80
        %v1519 = vpop.permute.xlu0 %1518
        %1522 = vrot.lane.b32.xlu0 %v1508, 88
        %v1523 = vpop.permute.xlu0 %1522
        %1525 = vrot.lane.b32.xlu0 %v1505, 88
        %v1526 = vpop.permute.xlu0 %1525
        %1528 = vrot.lane.b32.xlu0 %v1506, 96
        %v1529 = vpop.permute.xlu0 %1528
        %1531 = vrot.lane.b32.xlu0 %v1507, 104
        %v1532 = vpop.permute.xlu0 %1531
        %1534 = vrot.lane.b32.xlu0 %v1508, 112
        %v1535 = vpop.permute.xlu0 %1534
        %1537 = vrot.lane.b32.xlu0 %v1505, 112
        %v1538 = vpop.permute.xlu0 %1537
        %1540 = vrot.lane.b32.xlu0 %v1506, 120
        %v1541 = vpop.permute.xlu0 %1540
        %1543 = vrot.lane.b32.xlu0 %v1508, 8
        %v1544 = vpop.permute.xlu0 %1543
        %1546 = vrot.lane.b32.xlu0 %v1505, 8
        %v1547 = vpop.permute.xlu0 %1546
        %1549 = vrot.lane.b32.xlu0 %v1506, 16
        %v1550 = vpop.permute.xlu0 %1549
        %1552 = vrot.lane.b32.xlu0 %v1507, 24
        %v1553 = vpop.permute.xlu0 %1552
        %1555 = vrot.lane.b32.xlu0 %v1508, 32
        %v1556 = vpop.permute.xlu0 %1555
        %v1558 = vsel %vm208, %v1511, %v1515
        %v1559 = vsel %vm210, %v1558, %v1519
        %v1560 = vsel %vm212, %v1559, %v1523
        %v1561 = vsel %vm214, %v1560, %v1526
        %v1562 = vsel %vm216, %v1561, %v1529
        %v1563 = vsel %vm218, %v1562, %v1532
        %v1564 = vsel %vm220, %v1563, %v1535
        %v1565 = vsel %vm222, %v1564, %v1538
        %v1566 = vsel %vm224, %v1565, %v1541
        %v1567 = vsel %vm226, %v1566, %v1507
        %v1568 = vsel %vm228, %v1567, %v1544
        %v1569 = vsel %vm230, %v1568, %v1547
        %v1570 = vsel %vm232, %v1569, %v1550
        %v1571 = vsel %vm234, %v1570, %v1553
        %v1572 = vsel %vm236, %v1571, %v1556
        %1573 = vrot.lane.b32.xlu0 %v1505, 32
        %v1574 = vpop.permute.xlu0 %1573
        %1576 = vrot.lane.b32.xlu0 %v1506, 40
        %v1577 = vpop.permute.xlu0 %1576
        %1579 = vrot.lane.b32.xlu0 %v1507, 48
        %v1580 = vpop.permute.xlu0 %1579
        %1582 = vrot.lane.b32.xlu0 %v1508, 56
        %v1583 = vpop.permute.xlu0 %1582
        %1585 = vrot.lane.b32.xlu0 %v1505, 56
        %v1586 = vpop.permute.xlu0 %1585
        %1588 = vrot.lane.b32.xlu0 %v1506, 64
        %v1589 = vpop.permute.xlu0 %1588
        %1591 = vrot.lane.b32.xlu0 %v1507, 72
        %v1592 = vpop.permute.xlu0 %1591
        %1594 = vrot.lane.b32.xlu0 %v1508, 80
        %v1595 = vpop.permute.xlu0 %1594
        %1597 = vrot.lane.b32.xlu0 %v1505, 80
        %v1598 = vpop.permute.xlu0 %1597
        %1600 = vrot.lane.b32.xlu0 %v1506, 88
        %v1601 = vpop.permute.xlu0 %1600
        %1603 = vrot.lane.b32.xlu0 %v1507, 96
        %v1604 = vpop.permute.xlu0 %1603
        %1606 = vrot.lane.b32.xlu0 %v1508, 104
        %v1607 = vpop.permute.xlu0 %1606
        %1609 = vrot.lane.b32.xlu0 %v1505, 104
        %v1610 = vpop.permute.xlu0 %1609
        %1612 = vrot.lane.b32.xlu0 %v1506, 112
        %v1613 = vpop.permute.xlu0 %1612
        %1615 = vrot.lane.b32.xlu0 %v1507, 120
        %v1616 = vpop.permute.xlu0 %1615
        %v1618 = vsel %vm208, %v1574, %v1577
        %v1619 = vsel %vm210, %v1618, %v1580
        %v1620 = vsel %vm212, %v1619, %v1583
        %v1621 = vsel %vm214, %v1620, %v1586
        %v1622 = vsel %vm216, %v1621, %v1589
        %v1623 = vsel %vm218, %v1622, %v1592
        %v1624 = vsel %vm220, %v1623, %v1595
        %v1625 = vsel %vm222, %v1624, %v1598
        %v1626 = vsel %vm224, %v1625, %v1601
        %v1627 = vsel %vm226, %v1626, %v1604
        %v1628 = vsel %vm228, %v1627, %v1607
        %v1629 = vsel %vm230, %v1628, %v1610
        %v1630 = vsel %vm232, %v1629, %v1613
        %v1631 = vsel %vm234, %v1630, %v1616
        %v1632 = vsel %vm236, %v1631, %v1508
        %v1635 = vcombine.low %v1572, %v1632
        %v1637 = vunpack.c.l.s4 1966171168
        %v1638 = vunpack.c.0.s8 %v1637
        %v1639 = vlaneseq
        %v1640 = vshrl.u32 %v1639, 7
        %v1641 = vsub.s32 %v1638, %v1640
        %v1642 = vrot.slane %v1635, %v1641
        %v1644 = vunpack.c.l.s4 1966171168
        %v1645 = vunpack.c.0.s8 %v1644
        %v1646 = vlaneseq
        %v1647 = vshrl.u32 %v1646, 7
        %v1648 = vsub.s32 %v1645, %v1647
        %v1649 = vrot.slane %v1642, %v1648
        %s1651 = scalar_lea.vmem %s467, 2 [#allocation5]
        %1652 = vst.msk [vmem:[%s1651] ss:$4 sm:$0x3] %vm319, %v1649
        %v1653 = vld [vmem:[%s135 + $0x18] ss:$0 sm:$0xff]
        %v1654 = vld [vmem:[%s135 + $0x19] ss:$0 sm:$0xff]
        %v1655 = vld [vmem:[%s135 + $0x1a] ss:$0 sm:$0xff]
        %v1656 = vld [vmem:[%s135 + $0x1b] ss:$0 sm:$0xff]
        %1658 = vrot.lane.b32.xlu0 %v1654, 8
        %v1659 = vpop.permute.xlu0 %1658
        %1662 = vrot.lane.b32.xlu0 %v1655, 16
        %v1663 = vpop.permute.xlu0 %1662
        %1666 = vrot.lane.b32.xlu0 %v1656, 24
        %v1667 = vpop.permute.xlu0 %1666
        %1670 = vrot.lane.b32.xlu0 %v1653, 24
        %v1671 = vpop.permute.xlu0 %1670
        %1673 = vrot.lane.b32.xlu0 %v1654, 32
        %v1674 = vpop.permute.xlu0 %1673
        %1676 = vrot.lane.b32.xlu0 %v1655, 40
        %v1677 = vpop.permute.xlu0 %1676
        %1679 = vrot.lane.b32.xlu0 %v1656, 48
        %v1680 = vpop.permute.xlu0 %1679
        %1682 = vrot.lane.b32.xlu0 %v1653, 48
        %v1683 = vpop.permute.xlu0 %1682
        %1685 = vrot.lane.b32.xlu0 %v1654, 56
        %v1686 = vpop.permute.xlu0 %1685
        %1688 = vrot.lane.b32.xlu0 %v1655, 64
        %v1689 = vpop.permute.xlu0 %1688
        %1691 = vrot.lane.b32.xlu0 %v1656, 72
        %v1692 = vpop.permute.xlu0 %1691
        %1694 = vrot.lane.b32.xlu0 %v1653, 72
        %v1695 = vpop.permute.xlu0 %1694
        %1697 = vrot.lane.b32.xlu0 %v1654, 80
        %v1698 = vpop.permute.xlu0 %1697
        %1700 = vrot.lane.b32.xlu0 %v1655, 88
        %v1701 = vpop.permute.xlu0 %1700
        %1703 = vrot.lane.b32.xlu0 %v1656, 96
        %v1704 = vpop.permute.xlu0 %1703
        %v1706 = vsel %vm208, %v1653, %v1659
        %v1707 = vsel %vm210, %v1706, %v1663
        %v1708 = vsel %vm212, %v1707, %v1667
        %v1709 = vsel %vm214, %v1708, %v1671
        %v1710 = vsel %vm216, %v1709, %v1674
        %v1711 = vsel %vm218, %v1710, %v1677
        %v1712 = vsel %vm220, %v1711, %v1680
        %v1713 = vsel %vm222, %v1712, %v1683
        %v1714 = vsel %vm224, %v1713, %v1686
        %v1715 = vsel %vm226, %v1714, %v1689
        %v1716 = vsel %vm228, %v1715, %v1692
        %v1717 = vsel %vm230, %v1716, %v1695
        %v1718 = vsel %vm232, %v1717, %v1698
        %v1719 = vsel %vm234, %v1718, %v1701
        %v1720 = vsel %vm236, %v1719, %v1704
        %1721 = vrot.lane.b32.xlu0 %v1653, 96
        %v1722 = vpop.permute.xlu0 %1721
        %1724 = vrot.lane.b32.xlu0 %v1654, 104
        %v1725 = vpop.permute.xlu0 %1724
        %1727 = vrot.lane.b32.xlu0 %v1655, 112
        %v1728 = vpop.permute.xlu0 %1727
        %1730 = vrot.lane.b32.xlu0 %v1656, 120
        %v1731 = vpop.permute.xlu0 %1730
        %1733 = vrot.lane.b32.xlu0 %v1653, 120
        %v1734 = vpop.permute.xlu0 %1733
        %1736 = vrot.lane.b32.xlu0 %v1655, 8
        %v1737 = vpop.permute.xlu0 %1736
        %1739 = vrot.lane.b32.xlu0 %v1656, 16
        %v1740 = vpop.permute.xlu0 %1739
        %1742 = vrot.lane.b32.xlu0 %v1653, 16
        %v1743 = vpop.permute.xlu0 %1742
        %1745 = vrot.lane.b32.xlu0 %v1654, 24
        %v1746 = vpop.permute.xlu0 %1745
        %1748 = vrot.lane.b32.xlu0 %v1655, 32
        %v1749 = vpop.permute.xlu0 %1748
        %1751 = vrot.lane.b32.xlu0 %v1656, 40
        %v1752 = vpop.permute.xlu0 %1751
        %1754 = vrot.lane.b32.xlu0 %v1653, 40
        %v1755 = vpop.permute.xlu0 %1754
        %1757 = vrot.lane.b32.xlu0 %v1654, 48
        %v1758 = vpop.permute.xlu0 %1757
        %1760 = vrot.lane.b32.xlu0 %v1655, 56
        %v1761 = vpop.permute.xlu0 %1760
        %1763 = vrot.lane.b32.xlu0 %v1656, 64
        %v1764 = vpop.permute.xlu0 %1763
        %v1766 = vsel %vm208, %v1722, %v1725
        %v1767 = vsel %vm210, %v1766, %v1728
        %v1768 = vsel %vm212, %v1767, %v1731
        %v1769 = vsel %vm214, %v1768, %v1734
        %v1770 = vsel %vm216, %v1769, %v1654
        %v1771 = vsel %vm218, %v1770, %v1737
        %v1772 = vsel %vm220, %v1771, %v1740
        %v1773 = vsel %vm222, %v1772, %v1743
        %v1774 = vsel %vm224, %v1773, %v1746
        %v1775 = vsel %vm226, %v1774, %v1749
        %v1776 = vsel %vm228, %v1775, %v1752
        %v1777 = vsel %vm230, %v1776, %v1755
        %v1778 = vsel %vm232, %v1777, %v1758
        %v1779 = vsel %vm234, %v1778, %v1761
        %v1780 = vsel %vm236, %v1779, %v1764
        %v1783 = vcombine.low %v1720, %v1780
        %v1785 = vunpack.c.l.s4 1966171168
        %v1786 = vunpack.c.0.s8 %v1785
        %v1787 = vlaneseq
        %v1788 = vshrl.u32 %v1787, 7
        %v1789 = vsub.s32 %v1786, %v1788
        %v1790 = vrot.slane %v1783, %v1789
        %v1792 = vunpack.c.l.s4 1966171168
        %v1793 = vunpack.c.0.s8 %v1792
        %v1794 = vlaneseq
        %v1795 = vshrl.u32 %v1794, 7
        %v1796 = vsub.s32 %v1793, %v1795
        %v1797 = vrot.slane %v1790, %v1796
        %s1799 = scalar_lea.vmem %s615, 2 [#allocation5]
        %1800 = vst.msk [vmem:[%s1799] ss:$4 sm:$0x3] %vm319, %v1797
        %v1801 = vld [vmem:[%s135 + $0x18] ss:$0 sm:$0xff]
        %v1802 = vld [vmem:[%s135 + $0x19] ss:$0 sm:$0xff]
        %v1803 = vld [vmem:[%s135 + $0x1a] ss:$0 sm:$0xff]
        %v1804 = vld [vmem:[%s135 + $0x1b] ss:$0 sm:$0xff]
        %1806 = vrot.lane.b32.xlu0 %v1801, 64
        %v1807 = vpop.permute.xlu0 %1806
        %1810 = vrot.lane.b32.xlu0 %v1802, 72
        %v1811 = vpop.permute.xlu0 %1810
        %1814 = vrot.lane.b32.xlu0 %v1803, 80
        %v1815 = vpop.permute.xlu0 %1814
        %1818 = vrot.lane.b32.xlu0 %v1804, 88
        %v1819 = vpop.permute.xlu0 %1818
        %1821 = vrot.lane.b32.xlu0 %v1801, 88
        %v1822 = vpop.permute.xlu0 %1821
        %1824 = vrot.lane.b32.xlu0 %v1802, 96
        %v1825 = vpop.permute.xlu0 %1824
        %1827 = vrot.lane.b32.xlu0 %v1803, 104
        %v1828 = vpop.permute.xlu0 %1827
        %1830 = vrot.lane.b32.xlu0 %v1804, 112
        %v1831 = vpop.permute.xlu0 %1830
        %1833 = vrot.lane.b32.xlu0 %v1801, 112
        %v1834 = vpop.permute.xlu0 %1833
        %1836 = vrot.lane.b32.xlu0 %v1802, 120
        %v1837 = vpop.permute.xlu0 %1836
        %1839 = vrot.lane.b32.xlu0 %v1804, 8
        %v1840 = vpop.permute.xlu0 %1839
        %1842 = vrot.lane.b32.xlu0 %v1801, 8
        %v1843 = vpop.permute.xlu0 %1842
        %1845 = vrot.lane.b32.xlu0 %v1802, 16
        %v1846 = vpop.permute.xlu0 %1845
        %1848 = vrot.lane.b32.xlu0 %v1803, 24
        %v1849 = vpop.permute.xlu0 %1848
        %1851 = vrot.lane.b32.xlu0 %v1804, 32
        %v1852 = vpop.permute.xlu0 %1851
        %v1854 = vsel %vm208, %v1807, %v1811
        %v1855 = vsel %vm210, %v1854, %v1815
        %v1856 = vsel %vm212, %v1855, %v1819
        %v1857 = vsel %vm214, %v1856, %v1822
        %v1858 = vsel %vm216, %v1857, %v1825
        %v1859 = vsel %vm218, %v1858, %v1828
        %v1860 = vsel %vm220, %v1859, %v1831
        %v1861 = vsel %vm222, %v1860, %v1834
        %v1862 = vsel %vm224, %v1861, %v1837
        %v1863 = vsel %vm226, %v1862, %v1803
        %v1864 = vsel %vm228, %v1863, %v1840
        %v1865 = vsel %vm230, %v1864, %v1843
        %v1866 = vsel %vm232, %v1865, %v1846
        %v1867 = vsel %vm234, %v1866, %v1849
        %v1868 = vsel %vm236, %v1867, %v1852
        %1869 = vrot.lane.b32.xlu0 %v1801, 32
        %v1870 = vpop.permute.xlu0 %1869
        %1872 = vrot.lane.b32.xlu0 %v1802, 40
        %v1873 = vpop.permute.xlu0 %1872
        %1875 = vrot.lane.b32.xlu0 %v1803, 48
        %v1876 = vpop.permute.xlu0 %1875
        %1878 = vrot.lane.b32.xlu0 %v1804, 56
        %v1879 = vpop.permute.xlu0 %1878
        %1881 = vrot.lane.b32.xlu0 %v1801, 56
        %v1882 = vpop.permute.xlu0 %1881
        %1884 = vrot.lane.b32.xlu0 %v1802, 64
        %v1885 = vpop.permute.xlu0 %1884
        %1887 = vrot.lane.b32.xlu0 %v1803, 72
        %v1888 = vpop.permute.xlu0 %1887
        %1890 = vrot.lane.b32.xlu0 %v1804, 80
        %v1891 = vpop.permute.xlu0 %1890
        %1893 = vrot.lane.b32.xlu0 %v1801, 80
        %v1894 = vpop.permute.xlu0 %1893
        %1896 = vrot.lane.b32.xlu0 %v1802, 88
        %v1897 = vpop.permute.xlu0 %1896
        %1899 = vrot.lane.b32.xlu0 %v1803, 96
        %v1900 = vpop.permute.xlu0 %1899
        %1902 = vrot.lane.b32.xlu0 %v1804, 104
        %v1903 = vpop.permute.xlu0 %1902
        %1905 = vrot.lane.b32.xlu0 %v1801, 104
        %v1906 = vpop.permute.xlu0 %1905
        %1908 = vrot.lane.b32.xlu0 %v1802, 112
        %v1909 = vpop.permute.xlu0 %1908
        %1911 = vrot.lane.b32.xlu0 %v1803, 120
        %v1912 = vpop.permute.xlu0 %1911
        %v1914 = vsel %vm208, %v1870, %v1873
        %v1915 = vsel %vm210, %v1914, %v1876
        %v1916 = vsel %vm212, %v1915, %v1879
        %v1917 = vsel %vm214, %v1916, %v1882
        %v1918 = vsel %vm216, %v1917, %v1885
        %v1919 = vsel %vm218, %v1918, %v1888
        %v1920 = vsel %vm220, %v1919, %v1891
        %v1921 = vsel %vm222, %v1920, %v1894
        %v1922 = vsel %vm224, %v1921, %v1897
        %v1923 = vsel %vm226, %v1922, %v1900
        %v1924 = vsel %vm228, %v1923, %v1903
        %v1925 = vsel %vm230, %v1924, %v1906
        %v1926 = vsel %vm232, %v1925, %v1909
        %v1927 = vsel %vm234, %v1926, %v1912
        %v1928 = vsel %vm236, %v1927, %v1804
        %v1931 = vcombine.low %v1868, %v1928
        %v1933 = vunpack.c.l.s4 1966171168
        %v1934 = vunpack.c.0.s8 %v1933
        %v1935 = vlaneseq
        %v1936 = vshrl.u32 %v1935, 7
        %v1937 = vsub.s32 %v1934, %v1936
        %v1938 = vrot.slane %v1931, %v1937
        %v1940 = vunpack.c.l.s4 1966171168
        %v1941 = vunpack.c.0.s8 %v1940
        %v1942 = vlaneseq
        %v1943 = vshrl.u32 %v1942, 7
        %v1944 = vsub.s32 %v1941, %v1943
        %v1945 = vrot.slane %v1938, %v1944
        %s1947 = scalar_lea.vmem %s763, 2 [#allocation5]
        %1948 = vst.msk [vmem:[%s1947] ss:$4 sm:$0x3] %vm319, %v1945
        %v1949 = vld [vmem:[%s135 + $0x14] ss:$0 sm:$0xff]
        %v1950 = vld [vmem:[%s135 + $0x15] ss:$0 sm:$0xff]
        %v1951 = vld [vmem:[%s135 + $0x16] ss:$0 sm:$0xff]
        %v1952 = vld [vmem:[%s135 + $0x17] ss:$0 sm:$0xff]
        %1954 = vrot.lane.b32.xlu0 %v1950, 8
        %v1955 = vpop.permute.xlu0 %1954
        %1958 = vrot.lane.b32.xlu0 %v1951, 16
        %v1959 = vpop.permute.xlu0 %1958
        %1962 = vrot.lane.b32.xlu0 %v1952, 24
        %v1963 = vpop.permute.xlu0 %1962
        %1966 = vrot.lane.b32.xlu0 %v1949, 24
        %v1967 = vpop.permute.xlu0 %1966
        %1969 = vrot.lane.b32.xlu0 %v1950, 32
        %v1970 = vpop.permute.xlu0 %1969
        %1972 = vrot.lane.b32.xlu0 %v1951, 40
        %v1973 = vpop.permute.xlu0 %1972
        %1975 = vrot.lane.b32.xlu0 %v1952, 48
        %v1976 = vpop.permute.xlu0 %1975
        %1978 = vrot.lane.b32.xlu0 %v1949, 48
        %v1979 = vpop.permute.xlu0 %1978
        %1981 = vrot.lane.b32.xlu0 %v1950, 56
        %v1982 = vpop.permute.xlu0 %1981
        %1984 = vrot.lane.b32.xlu0 %v1951, 64
        %v1985 = vpop.permute.xlu0 %1984
        %1987 = vrot.lane.b32.xlu0 %v1952, 72
        %v1988 = vpop.permute.xlu0 %1987
        %1990 = vrot.lane.b32.xlu0 %v1949, 72
        %v1991 = vpop.permute.xlu0 %1990
        %1993 = vrot.lane.b32.xlu0 %v1950, 80
        %v1994 = vpop.permute.xlu0 %1993
        %1996 = vrot.lane.b32.xlu0 %v1951, 88
        %v1997 = vpop.permute.xlu0 %1996
        %1999 = vrot.lane.b32.xlu0 %v1952, 96
        %v2000 = vpop.permute.xlu0 %1999
        %v2002 = vsel %vm208, %v1949, %v1955
        %v2003 = vsel %vm210, %v2002, %v1959
        %v2004 = vsel %vm212, %v2003, %v1963
        %v2005 = vsel %vm214, %v2004, %v1967
        %v2006 = vsel %vm216, %v2005, %v1970
        %v2007 = vsel %vm218, %v2006, %v1973
        %v2008 = vsel %vm220, %v2007, %v1976
        %v2009 = vsel %vm222, %v2008, %v1979
        %v2010 = vsel %vm224, %v2009, %v1982
        %v2011 = vsel %vm226, %v2010, %v1985
        %v2012 = vsel %vm228, %v2011, %v1988
        %v2013 = vsel %vm230, %v2012, %v1991
        %v2014 = vsel %vm232, %v2013, %v1994
        %v2015 = vsel %vm234, %v2014, %v1997
        %v2016 = vsel %vm236, %v2015, %v2000
        %2017 = vrot.lane.b32.xlu0 %v1949, 96
        %v2018 = vpop.permute.xlu0 %2017
        %2020 = vrot.lane.b32.xlu0 %v1950, 104
        %v2021 = vpop.permute.xlu0 %2020
        %2023 = vrot.lane.b32.xlu0 %v1951, 112
        %v2024 = vpop.permute.xlu0 %2023
        %2026 = vrot.lane.b32.xlu0 %v1952, 120
        %v2027 = vpop.permute.xlu0 %2026
        %2029 = vrot.lane.b32.xlu0 %v1949, 120
        %v2030 = vpop.permute.xlu0 %2029
        %2032 = vrot.lane.b32.xlu0 %v1951, 8
        %v2033 = vpop.permute.xlu0 %2032
        %2035 = vrot.lane.b32.xlu0 %v1952, 16
        %v2036 = vpop.permute.xlu0 %2035
        %2038 = vrot.lane.b32.xlu0 %v1949, 16
        %v2039 = vpop.permute.xlu0 %2038
        %2041 = vrot.lane.b32.xlu0 %v1950, 24
        %v2042 = vpop.permute.xlu0 %2041
        %2044 = vrot.lane.b32.xlu0 %v1951, 32
        %v2045 = vpop.permute.xlu0 %2044
        %2047 = vrot.lane.b32.xlu0 %v1952, 40
        %v2048 = vpop.permute.xlu0 %2047
        %2050 = vrot.lane.b32.xlu0 %v1949, 40
        %v2051 = vpop.permute.xlu0 %2050
        %2053 = vrot.lane.b32.xlu0 %v1950, 48
        %v2054 = vpop.permute.xlu0 %2053
        %2056 = vrot.lane.b32.xlu0 %v1951, 56
        %v2057 = vpop.permute.xlu0 %2056
        %2059 = vrot.lane.b32.xlu0 %v1952, 64
        %v2060 = vpop.permute.xlu0 %2059
        %v2062 = vsel %vm208, %v2018, %v2021
        %v2063 = vsel %vm210, %v2062, %v2024
        %v2064 = vsel %vm212, %v2063, %v2027
        %v2065 = vsel %vm214, %v2064, %v2030
        %v2066 = vsel %vm216, %v2065, %v1950
        %v2067 = vsel %vm218, %v2066, %v2033
        %v2068 = vsel %vm220, %v2067, %v2036
        %v2069 = vsel %vm222, %v2068, %v2039
        %v2070 = vsel %vm224, %v2069, %v2042
        %v2071 = vsel %vm226, %v2070, %v2045
        %v2072 = vsel %vm228, %v2071, %v2048
        %v2073 = vsel %vm230, %v2072, %v2051
        %v2074 = vsel %vm232, %v2073, %v2054
        %v2075 = vsel %vm234, %v2074, %v2057
        %v2076 = vsel %vm236, %v2075, %v2060
        %v2079 = vcombine.low %v2016, %v2076
        %v2081 = vunpack.c.l.s4 1966171168
        %v2082 = vunpack.c.0.s8 %v2081
        %v2083 = vlaneseq
        %v2084 = vshrl.u32 %v2083, 7
        %v2085 = vsub.s32 %v2082, %v2084
        %v2086 = vrot.slane %v2079, %v2085
        %v2088 = vunpack.c.l.s4 1966171168
        %v2089 = vunpack.c.0.s8 %v2088
        %v2090 = vlaneseq
        %v2091 = vshrl.u32 %v2090, 7
        %v2092 = vsub.s32 %v2089, %v2091
        %v2093 = vrot.slane %v2086, %v2092
        %s2095 = scalar_lea.vmem %s153, 3 [#allocation5]
        %2096 = vst.msk [vmem:[%s2095] ss:$4 sm:$0x3] %vm319, %v2093
        %v2097 = vld [vmem:[%s135 + $0x14] ss:$0 sm:$0xff]
        %v2098 = vld [vmem:[%s135 + $0x15] ss:$0 sm:$0xff]
        %v2099 = vld [vmem:[%s135 + $0x16] ss:$0 sm:$0xff]
        %v2100 = vld [vmem:[%s135 + $0x17] ss:$0 sm:$0xff]
        %2102 = vrot.lane.b32.xlu0 %v2097, 64
        %v2103 = vpop.permute.xlu0 %2102
        %2106 = vrot.lane.b32.xlu0 %v2098, 72
        %v2107 = vpop.permute.xlu0 %2106
        %2110 = vrot.lane.b32.xlu0 %v2099, 80
        %v2111 = vpop.permute.xlu0 %2110
        %2114 = vrot.lane.b32.xlu0 %v2100, 88
        %v2115 = vpop.permute.xlu0 %2114
        %2117 = vrot.lane.b32.xlu0 %v2097, 88
        %v2118 = vpop.permute.xlu0 %2117
        %2120 = vrot.lane.b32.xlu0 %v2098, 96
        %v2121 = vpop.permute.xlu0 %2120
        %2123 = vrot.lane.b32.xlu0 %v2099, 104
        %v2124 = vpop.permute.xlu0 %2123
        %2126 = vrot.lane.b32.xlu0 %v2100, 112
        %v2127 = vpop.permute.xlu0 %2126
        %2129 = vrot.lane.b32.xlu0 %v2097, 112
        %v2130 = vpop.permute.xlu0 %2129
        %2132 = vrot.lane.b32.xlu0 %v2098, 120
        %v2133 = vpop.permute.xlu0 %2132
        %2135 = vrot.lane.b32.xlu0 %v2100, 8
        %v2136 = vpop.permute.xlu0 %2135
        %2138 = vrot.lane.b32.xlu0 %v2097, 8
        %v2139 = vpop.permute.xlu0 %2138
        %2141 = vrot.lane.b32.xlu0 %v2098, 16
        %v2142 = vpop.permute.xlu0 %2141
        %2144 = vrot.lane.b32.xlu0 %v2099, 24
        %v2145 = vpop.permute.xlu0 %2144
        %2147 = vrot.lane.b32.xlu0 %v2100, 32
        %v2148 = vpop.permute.xlu0 %2147
        %v2150 = vsel %vm208, %v2103, %v2107
        %v2151 = vsel %vm210, %v2150, %v2111
        %v2152 = vsel %vm212, %v2151, %v2115
        %v2153 = vsel %vm214, %v2152, %v2118
        %v2154 = vsel %vm216, %v2153, %v2121
        %v2155 = vsel %vm218, %v2154, %v2124
        %v2156 = vsel %vm220, %v2155, %v2127
        %v2157 = vsel %vm222, %v2156, %v2130
        %v2158 = vsel %vm224, %v2157, %v2133
        %v2159 = vsel %vm226, %v2158, %v2099
        %v2160 = vsel %vm228, %v2159, %v2136
        %v2161 = vsel %vm230, %v2160, %v2139
        %v2162 = vsel %vm232, %v2161, %v2142
        %v2163 = vsel %vm234, %v2162, %v2145
        %v2164 = vsel %vm236, %v2163, %v2148
        %2165 = vrot.lane.b32.xlu0 %v2097, 32
        %v2166 = vpop.permute.xlu0 %2165
        %2168 = vrot.lane.b32.xlu0 %v2098, 40
        %v2169 = vpop.permute.xlu0 %2168
        %2171 = vrot.lane.b32.xlu0 %v2099, 48
        %v2172 = vpop.permute.xlu0 %2171
        %2174 = vrot.lane.b32.xlu0 %v2100, 56
        %v2175 = vpop.permute.xlu0 %2174
        %2177 = vrot.lane.b32.xlu0 %v2097, 56
        %v2178 = vpop.permute.xlu0 %2177
        %2180 = vrot.lane.b32.xlu0 %v2098, 64
        %v2181 = vpop.permute.xlu0 %2180
        %2183 = vrot.lane.b32.xlu0 %v2099, 72
        %v2184 = vpop.permute.xlu0 %2183
        %2186 = vrot.lane.b32.xlu0 %v2100, 80
        %v2187 = vpop.permute.xlu0 %2186
        %2189 = vrot.lane.b32.xlu0 %v2097, 80
        %v2190 = vpop.permute.xlu0 %2189
        %2192 = vrot.lane.b32.xlu0 %v2098, 88
        %v2193 = vpop.permute.xlu0 %2192
        %2195 = vrot.lane.b32.xlu0 %v2099, 96
        %v2196 = vpop.permute.xlu0 %2195
        %2198 = vrot.lane.b32.xlu0 %v2100, 104
        %v2199 = vpop.permute.xlu0 %2198
        %2201 = vrot.lane.b32.xlu0 %v2097, 104
        %v2202 = vpop.permute.xlu0 %2201
        %2204 = vrot.lane.b32.xlu0 %v2098, 112
        %v2205 = vpop.permute.xlu0 %2204
        %2207 = vrot.lane.b32.xlu0 %v2099, 120
        %v2208 = vpop.permute.xlu0 %2207
        %v2210 = vsel %vm208, %v2166, %v2169
        %v2211 = vsel %vm210, %v2210, %v2172
        %v2212 = vsel %vm212, %v2211, %v2175
        %v2213 = vsel %vm214, %v2212, %v2178
        %v2214 = vsel %vm216, %v2213, %v2181
        %v2215 = vsel %vm218, %v2214, %v2184
        %v2216 = vsel %vm220, %v2215, %v2187
        %v2217 = vsel %vm222, %v2216, %v2190
        %v2218 = vsel %vm224, %v2217, %v2193
        %v2219 = vsel %vm226, %v2218, %v2196
        %v2220 = vsel %vm228, %v2219, %v2199
        %v2221 = vsel %vm230, %v2220, %v2202
        %v2222 = vsel %vm232, %v2221, %v2205
        %v2223 = vsel %vm234, %v2222, %v2208
        %v2224 = vsel %vm236, %v2223, %v2100
        %v2227 = vcombine.low %v2164, %v2224
        %v2229 = vunpack.c.l.s4 1966171168
        %v2230 = vunpack.c.0.s8 %v2229
        %v2231 = vlaneseq
        %v2232 = vshrl.u32 %v2231, 7
        %v2233 = vsub.s32 %v2230, %v2232
        %v2234 = vrot.slane %v2227, %v2233
        %v2236 = vunpack.c.l.s4 1966171168
        %v2237 = vunpack.c.0.s8 %v2236
        %v2238 = vlaneseq
        %v2239 = vshrl.u32 %v2238, 7
        %v2240 = vsub.s32 %v2237, %v2239
        %v2241 = vrot.slane %v2234, %v2240
        %s2243 = scalar_lea.vmem %s467, 3 [#allocation5]
        %2244 = vst.msk [vmem:[%s2243] ss:$4 sm:$0x3] %vm319, %v2241
        %v2245 = vld [vmem:[%s135 + $0x1c] ss:$0 sm:$0xff]
        %v2246 = vld [vmem:[%s135 + $0x1d] ss:$0 sm:$0xff]
        %v2247 = vld [vmem:[%s135 + $0x1e] ss:$0 sm:$0xff]
        %v2248 = vld [vmem:[%s135 + $0x1f] ss:$0 sm:$0xff]
        %2250 = vrot.lane.b32.xlu0 %v2246, 8
        %v2251 = vpop.permute.xlu0 %2250
        %2254 = vrot.lane.b32.xlu0 %v2247, 16
        %v2255 = vpop.permute.xlu0 %2254
        %2258 = vrot.lane.b32.xlu0 %v2248, 24
        %v2259 = vpop.permute.xlu0 %2258
        %2262 = vrot.lane.b32.xlu0 %v2245, 24
        %v2263 = vpop.permute.xlu0 %2262
        %2265 = vrot.lane.b32.xlu0 %v2246, 32
        %v2266 = vpop.permute.xlu0 %2265
        %2268 = vrot.lane.b32.xlu0 %v2247, 40
        %v2269 = vpop.permute.xlu0 %2268
        %2271 = vrot.lane.b32.xlu0 %v2248, 48
        %v2272 = vpop.permute.xlu0 %2271
        %2274 = vrot.lane.b32.xlu0 %v2245, 48
        %v2275 = vpop.permute.xlu0 %2274
        %2277 = vrot.lane.b32.xlu0 %v2246, 56
        %v2278 = vpop.permute.xlu0 %2277
        %2280 = vrot.lane.b32.xlu0 %v2247, 64
        %v2281 = vpop.permute.xlu0 %2280
        %2283 = vrot.lane.b32.xlu0 %v2248, 72
        %v2284 = vpop.permute.xlu0 %2283
        %2286 = vrot.lane.b32.xlu0 %v2245, 72
        %v2287 = vpop.permute.xlu0 %2286
        %2289 = vrot.lane.b32.xlu0 %v2246, 80
        %v2290 = vpop.permute.xlu0 %2289
        %2292 = vrot.lane.b32.xlu0 %v2247, 88
        %v2293 = vpop.permute.xlu0 %2292
        %2295 = vrot.lane.b32.xlu0 %v2248, 96
        %v2296 = vpop.permute.xlu0 %2295
        %v2298 = vsel %vm208, %v2245, %v2251
        %v2299 = vsel %vm210, %v2298, %v2255
        %v2300 = vsel %vm212, %v2299, %v2259
        %v2301 = vsel %vm214, %v2300, %v2263
        %v2302 = vsel %vm216, %v2301, %v2266
        %v2303 = vsel %vm218, %v2302, %v2269
        %v2304 = vsel %vm220, %v2303, %v2272
        %v2305 = vsel %vm222, %v2304, %v2275
        %v2306 = vsel %vm224, %v2305, %v2278
        %v2307 = vsel %vm226, %v2306, %v2281
        %v2308 = vsel %vm228, %v2307, %v2284
        %v2309 = vsel %vm230, %v2308, %v2287
        %v2310 = vsel %vm232, %v2309, %v2290
        %v2311 = vsel %vm234, %v2310, %v2293
        %v2312 = vsel %vm236, %v2311, %v2296
        %2313 = vrot.lane.b32.xlu0 %v2245, 96
        %v2314 = vpop.permute.xlu0 %2313
        %2316 = vrot.lane.b32.xlu0 %v2246, 104
        %v2317 = vpop.permute.xlu0 %2316
        %2319 = vrot.lane.b32.xlu0 %v2247, 112
        %v2320 = vpop.permute.xlu0 %2319
        %2322 = vrot.lane.b32.xlu0 %v2248, 120
        %v2323 = vpop.permute.xlu0 %2322
        %2325 = vrot.lane.b32.xlu0 %v2245, 120
        %v2326 = vpop.permute.xlu0 %2325
        %2328 = vrot.lane.b32.xlu0 %v2247, 8
        %v2329 = vpop.permute.xlu0 %2328
        %2331 = vrot.lane.b32.xlu0 %v2248, 16
        %v2332 = vpop.permute.xlu0 %2331
        %2334 = vrot.lane.b32.xlu0 %v2245, 16
        %v2335 = vpop.permute.xlu0 %2334
        %2337 = vrot.lane.b32.xlu0 %v2246, 24
        %v2338 = vpop.permute.xlu0 %2337
        %2340 = vrot.lane.b32.xlu0 %v2247, 32
        %v2341 = vpop.permute.xlu0 %2340
        %2343 = vrot.lane.b32.xlu0 %v2248, 40
        %v2344 = vpop.permute.xlu0 %2343
        %2346 = vrot.lane.b32.xlu0 %v2245, 40
        %v2347 = vpop.permute.xlu0 %2346
        %2349 = vrot.lane.b32.xlu0 %v2246, 48
        %v2350 = vpop.permute.xlu0 %2349
        %2352 = vrot.lane.b32.xlu0 %v2247, 56
        %v2353 = vpop.permute.xlu0 %2352
        %2355 = vrot.lane.b32.xlu0 %v2248, 64
        %v2356 = vpop.permute.xlu0 %2355
        %v2358 = vsel %vm208, %v2314, %v2317
        %v2359 = vsel %vm210, %v2358, %v2320
        %v2360 = vsel %vm212, %v2359, %v2323
        %v2361 = vsel %vm214, %v2360, %v2326
        %v2362 = vsel %vm216, %v2361, %v2246
        %v2363 = vsel %vm218, %v2362, %v2329
        %v2364 = vsel %vm220, %v2363, %v2332
        %v2365 = vsel %vm222, %v2364, %v2335
        %v2366 = vsel %vm224, %v2365, %v2338
        %v2367 = vsel %vm226, %v2366, %v2341
        %v2368 = vsel %vm228, %v2367, %v2344
        %v2369 = vsel %vm230, %v2368, %v2347
        %v2370 = vsel %vm232, %v2369, %v2350
        %v2371 = vsel %vm234, %v2370, %v2353
        %v2372 = vsel %vm236, %v2371, %v2356
        %v2375 = vcombine.low %v2312, %v2372
        %v2377 = vunpack.c.l.s4 1966171168
        %v2378 = vunpack.c.0.s8 %v2377
        %v2379 = vlaneseq
        %v2380 = vshrl.u32 %v2379, 7
        %v2381 = vsub.s32 %v2378, %v2380
        %v2382 = vrot.slane %v2375, %v2381
        %v2384 = vunpack.c.l.s4 1966171168
        %v2385 = vunpack.c.0.s8 %v2384
        %v2386 = vlaneseq
        %v2387 = vshrl.u32 %v2386, 7
        %v2388 = vsub.s32 %v2385, %v2387
        %v2389 = vrot.slane %v2382, %v2388
        %s2391 = scalar_lea.vmem %s615, 3 [#allocation5]
        %2392 = vst.msk [vmem:[%s2391] ss:$4 sm:$0x3] %vm319, %v2389
        %v2393 = vld [vmem:[%s135 + $0x1c] ss:$0 sm:$0xff]
        %v2394 = vld [vmem:[%s135 + $0x1d] ss:$0 sm:$0xff]
        %v2395 = vld [vmem:[%s135 + $0x1e] ss:$0 sm:$0xff]
        %v2396 = vld [vmem:[%s135 + $0x1f] ss:$0 sm:$0xff]
        %2398 = vrot.lane.b32.xlu0 %v2393, 64
        %v2399 = vpop.permute.xlu0 %2398
        %2402 = vrot.lane.b32.xlu0 %v2394, 72
        %v2403 = vpop.permute.xlu0 %2402
        %2406 = vrot.lane.b32.xlu0 %v2395, 80
        %v2407 = vpop.permute.xlu0 %2406
        %2410 = vrot.lane.b32.xlu0 %v2396, 88
        %v2411 = vpop.permute.xlu0 %2410
        %2413 = vrot.lane.b32.xlu0 %v2393, 88
        %v2414 = vpop.permute.xlu0 %2413
        %2416 = vrot.lane.b32.xlu0 %v2394, 96
        %v2417 = vpop.permute.xlu0 %2416
        %2419 = vrot.lane.b32.xlu0 %v2395, 104
        %v2420 = vpop.permute.xlu0 %2419
        %2422 = vrot.lane.b32.xlu0 %v2396, 112
        %v2423 = vpop.permute.xlu0 %2422
        %2425 = vrot.lane.b32.xlu0 %v2393, 112
        %v2426 = vpop.permute.xlu0 %2425
        %2428 = vrot.lane.b32.xlu0 %v2394, 120
        %v2429 = vpop.permute.xlu0 %2428
        %2431 = vrot.lane.b32.xlu0 %v2396, 8
        %v2432 = vpop.permute.xlu0 %2431
        %2434 = vrot.lane.b32.xlu0 %v2393, 8
        %v2435 = vpop.permute.xlu0 %2434
        %2437 = vrot.lane.b32.xlu0 %v2394, 16
        %v2438 = vpop.permute.xlu0 %2437
        %2440 = vrot.lane.b32.xlu0 %v2395, 24
        %v2441 = vpop.permute.xlu0 %2440
        %2443 = vrot.lane.b32.xlu0 %v2396, 32
        %v2444 = vpop.permute.xlu0 %2443
        %v2446 = vsel %vm208, %v2399, %v2403
        %v2447 = vsel %vm210, %v2446, %v2407
        %v2448 = vsel %vm212, %v2447, %v2411
        %v2449 = vsel %vm214, %v2448, %v2414
        %v2450 = vsel %vm216, %v2449, %v2417
        %v2451 = vsel %vm218, %v2450, %v2420
        %v2452 = vsel %vm220, %v2451, %v2423
        %v2453 = vsel %vm222, %v2452, %v2426
        %v2454 = vsel %vm224, %v2453, %v2429
        %v2455 = vsel %vm226, %v2454, %v2395
        %v2456 = vsel %vm228, %v2455, %v2432
        %v2457 = vsel %vm230, %v2456, %v2435
        %v2458 = vsel %vm232, %v2457, %v2438
        %v2459 = vsel %vm234, %v2458, %v2441
        %v2460 = vsel %vm236, %v2459, %v2444
        %2461 = vrot.lane.b32.xlu0 %v2393, 32
        %v2462 = vpop.permute.xlu0 %2461
        %2464 = vrot.lane.b32.xlu0 %v2394, 40
        %v2465 = vpop.permute.xlu0 %2464
        %2467 = vrot.lane.b32.xlu0 %v2395, 48
        %v2468 = vpop.permute.xlu0 %2467
        %2470 = vrot.lane.b32.xlu0 %v2396, 56
        %v2471 = vpop.permute.xlu0 %2470
        %2473 = vrot.lane.b32.xlu0 %v2393, 56
        %v2474 = vpop.permute.xlu0 %2473
        %2476 = vrot.lane.b32.xlu0 %v2394, 64
        %v2477 = vpop.permute.xlu0 %2476
        %2479 = vrot.lane.b32.xlu0 %v2395, 72
        %v2480 = vpop.permute.xlu0 %2479
        %2482 = vrot.lane.b32.xlu0 %v2396, 80
        %v2483 = vpop.permute.xlu0 %2482
        %2485 = vrot.lane.b32.xlu0 %v2393, 80
        %v2486 = vpop.permute.xlu0 %2485
        %2488 = vrot.lane.b32.xlu0 %v2394, 88
        %v2489 = vpop.permute.xlu0 %2488
        %2491 = vrot.lane.b32.xlu0 %v2395, 96
        %v2492 = vpop.permute.xlu0 %2491
        %2494 = vrot.lane.b32.xlu0 %v2396, 104
        %v2495 = vpop.permute.xlu0 %2494
        %2497 = vrot.lane.b32.xlu0 %v2393, 104
        %v2498 = vpop.permute.xlu0 %2497
        %2500 = vrot.lane.b32.xlu0 %v2394, 112
        %v2501 = vpop.permute.xlu0 %2500
        %2503 = vrot.lane.b32.xlu0 %v2395, 120
        %v2504 = vpop.permute.xlu0 %2503
        %v2506 = vsel %vm208, %v2462, %v2465
        %v2507 = vsel %vm210, %v2506, %v2468
        %v2508 = vsel %vm212, %v2507, %v2471
        %v2509 = vsel %vm214, %v2508, %v2474
        %v2510 = vsel %vm216, %v2509, %v2477
        %v2511 = vsel %vm218, %v2510, %v2480
        %v2512 = vsel %vm220, %v2511, %v2483
        %v2513 = vsel %vm222, %v2512, %v2486
        %v2514 = vsel %vm224, %v2513, %v2489
        %v2515 = vsel %vm226, %v2514, %v2492
        %v2516 = vsel %vm228, %v2515, %v2495
        %v2517 = vsel %vm230, %v2516, %v2498
        %v2518 = vsel %vm232, %v2517, %v2501
        %v2519 = vsel %vm234, %v2518, %v2504
        %v2520 = vsel %vm236, %v2519, %v2396
        %v2523 = vcombine.low %v2460, %v2520
        %v2525 = vunpack.c.l.s4 1966171168
        %v2526 = vunpack.c.0.s8 %v2525
        %v2527 = vlaneseq
        %v2528 = vshrl.u32 %v2527, 7
        %v2529 = vsub.s32 %v2526, %v2528
        %v2530 = vrot.slane %v2523, %v2529
        %v2532 = vunpack.c.l.s4 1966171168
        %v2533 = vunpack.c.0.s8 %v2532
        %v2534 = vlaneseq
        %v2535 = vshrl.u32 %v2534, 7
        %v2536 = vsub.s32 %v2533, %v2535
        %v2537 = vrot.slane %v2530, %v2536
        %s2539 = scalar_lea.vmem %s763, 3 [#allocation5]
        %2540 = vst.msk [vmem:[%s2539] ss:$4 sm:$0x3] %vm319, %v2537
        %s2541 = sand.u32 %s68, 1
        %s2542 = scalar_lea.sflag [#allocation4], %s2541
        %s2543 = sand.u32 %s68, 1
        %s2544 = smul.addr %s2543, 32
        %s2545 = scalar_lea.vmem [#allocation5], %s2544
        // Predicated region
        $region29: #{tpu_custom_call.1} parent=23 // pred_check
          %p2546 = pneg %p78
        $region30: #{tpu_custom_call.1} parent=23 // pred_check_branch
          %2548 = sbr.rel (%p2546) target = $region32
        $region31: #{tpu_custom_call.1} parent=23 // pred_region
          %s2550 = ssub.s32 512, 512
          %2551 = vsyncadd %s2542, %s2550
          %s2552 = smul.addr %s23, 2
          %s2553 = smul.addr %s22, 8
          %s2554 = sadd.s32 %s2552, %s2553
          %s2555 = smul.addr %s2554, 64
          %s2556 = scalar_lea.hbm %s1, %s2555
          %s2557 = sshll.u32 %s2545, 4
          %s2558 = int_to_ptr.vmem [resolvable:$true] %s2557
          %2563 = dma.vmem_to_hbm [thread:$0]  %s2558, 512, %s2556, %s2542, 128, 128, 8
        $region32: #{tpu_custom_call.1} parent=23 // pred_fallthru
          _
      $region24: #{tpu_custom_call.1} parent=5 // pred_fallthru
        _
      %p2564 = scmp.le.s32.totalorder 2, %s13
      // Predicated region
      $region33: #{tpu_custom_call.1} parent=5 // pred_check
        %p2565 = pneg %p2564
      $region34: #{tpu_custom_call.1} parent=5 // pred_check_branch
        %2567 = sbr.rel (%p2565) target = $region36
      $region35: #{tpu_custom_call.1} parent=5 // pred_region
        %s2568 = ssub.s32 %s13, 2
        // Predicated region
        $region37: #{tpu_custom_call.1} parent=35 // pred_check
          %p2569 = pneg %p84
        $region38: #{tpu_custom_call.1} parent=35 // pred_check_branch
          %2571 = sbr.rel (%p2569) target = $region40
        $region39: #{tpu_custom_call.1} parent=35 // pred_region
          %s2572 = sand.u32 %s69, 1
          %s2573 = scalar_lea.sflag [#allocation4], %s2572
          %s2574 = sand.u32 %s69, 1
          %s2575 = smul.addr %s2574, 32
          %s2576 = scalar_lea.vmem [#allocation5], %s2575
          %2577 = dma.done %s2573, 512
        $region40: #{tpu_custom_call.1} parent=35 // pred_fallthru
          _
      $region36: #{tpu_custom_call.1} parent=5 // pred_fallthru
        _
    $region6: #{tpu_custom_call.1} parent=1 // loop_footer
      %s17 = sadd.s32 1, %s13
    $region7: #{tpu_custom_call.1} parent=1 // loop_footer_branch
      %12 = sbr.rel target = $region3
    $region8: #{tpu_custom_call.1} parent=1 // loop_exit
      _
    %2578 = vsyncpa [#allocation3], 1
    %s2579 = scalar_lea.sflag [#allocation3], 1
    %2580 = vsyncpa %s2579, 1
    %2581 = vsyncpa [#allocation4], 1
    %s2582 = scalar_lea.sflag [#allocation4], 1
    %2583 = vsyncpa %s2582, 1

</llo_original>
